<compile_context>
chip_gen: v5e
topology: v5e:2x2
jax: 0.10.0
libtpu: 0.0.40
codegen_flags: <defaults>
</compile_context>

<pallas_src>
import numpy as np

import jax
import jax.numpy as jnp
from jax.experimental import pallas as pl
from jax.experimental.pallas import tpu as pltpu

BN_EPS = 1e-5
CPAD = 128          # lane-padded channel width for every intermediate activation
KTAPS = 9           # 3x3 kernel


def _out_dim(d):    # conv: kernel 3, stride 2, pad 1
    return (d + 2 * 1 - 3) // 2 + 1


# ---------------------------------------------------------------------------
# Kernel.  Everything (gather operators, weights, activations) fits in VMEM,
# so a single grid-less pallas_call runs the whole encoder.
#   x_ref           : [N*H0*W0, 1]        input pixels (C_in = 1), row = (n,h,w)
#   gL_ref          : [9*M_out_L, M_in_L] stacked 0/1 tap-gather operator
#   wL_ref          : [9, 128, 128]       per-tap weights, channel-padded with 0
#   gaL_ref/beL_ref : [1, 128]            BN gamma / beta, channel-padded with 0
#   o_ref           : [N*H3*W3, 64]       final activations, row = (n,h,w)
# Padded channels carry exact zeros through every layer (padded weight
# rows/columns and padded gamma/beta are zero), so they never perturb the real
# channels or the batch statistics.
# ---------------------------------------------------------------------------
def _encoder_kernel(x_ref,
                    g1_ref, g2_ref, g3_ref,
                    w1_ref, w2_ref, w3_ref,
                    ga1_ref, be1_ref, ga2_ref, be2_ref, ga3_ref, be3_ref,
                    o_ref):

    def conv_bn_relu(x, g_ref, w_ref, ga_ref, be_ref):
        m_out = g_ref.shape[0] // KTAPS
        # im2col: ONE MXU matmul gathers all nine shifted/strided taps at once.
        # taps[t*m_out + m, c] = x[input_row(t, m), c]  (0 where a tap hits padding)
        taps = jnp.dot(g_ref[...], x, preferred_element_type=jnp.float32)
        # Nine accumulating per-tap weight matmuls (static, 8-aligned row slices).
        acc = jnp.dot(taps[0:m_out, :], w_ref[0],
                      preferred_element_type=jnp.float32)
        for t in range(1, KTAPS):
            acc = acc + jnp.dot(taps[t * m_out:(t + 1) * m_out, :], w_ref[t],
                                preferred_element_type=jnp.float32)
        # BatchNorm (training-mode batch statistics, biased variance), single
        # pass: column sum + sum-of-squares, folded into one affine, then ReLU.
        inv_m = 1.0 / m_out
        s1 = jnp.sum(acc, axis=0, keepdims=True)           # [1, 128]
        s2 = jnp.sum(acc * acc, axis=0, keepdims=True)     # [1, 128]
        mean = s1 * inv_m
        var = s2 * inv_m - mean * mean
        scale = ga_ref[...] * jax.lax.rsqrt(var + BN_EPS)
        shift = be_ref[...] - scale * mean
        return jnp.maximum(acc * scale + shift, 0.0)       # affine + ReLU (2 VPU ops)

    # Layer-1 input: broadcast the single real channel across all 128 lanes;
    # the padded weight rows are zero, so duplicated lanes contribute nothing.
    x0 = jnp.broadcast_to(x_ref[...], (x_ref.shape[0], CPAD))
    y1 = conv_bn_relu(x0, g1_ref, w1_ref, ga1_ref, be1_ref)
    y2 = conv_bn_relu(y1, g2_ref, w2_ref, ga2_ref, be2_ref)
    y3 = conv_bn_relu(y2, g3_ref, w3_ref, ga3_ref, be3_ref)
    o_ref[...] = y3[:, :o_ref.shape[1]]


# ---------------------------------------------------------------------------
# Host-side constant preparation (done once, outside the jitted forward).
# ---------------------------------------------------------------------------
def _gather_stacked(n, h, w):
    """Stacked 0/1 operator G of shape [9*M_out, M_in] such that
    (G @ X)[t*M_out + row, c] = X[input_row(t, row), c] for the 3x3 / stride-2 /
    pad-1 tap t = kh*3 + kw (row of zeros where the tap hits padding)."""
    ho, wo = _out_dim(h), _out_dim(w)
    m_out, m_in = n * ho * wo, n * h * w
    g = np.zeros((KTAPS, m_out, m_in), np.float32)
    b, i, j = np.meshgrid(np.arange(n), np.arange(ho), np.arange(wo), indexing="ij")
    rows = ((b * ho + i) * wo + j).ravel()
    for kh in range(3):
        for kw in range(3):
            hi = (2 * i + kh - 1).ravel()
            wi = (2 * j + kw - 1).ravel()
            ok = (hi >= 0) & (hi < h) & (wi >= 0) & (wi < w)
            cols = (b.ravel() * h + hi) * w + wi
            g[kh * 3 + kw, rows[ok], cols[ok]] = 1.0
    # NOTE: G is block-diagonal over batch; for large batch/spatial sizes apply
    # it per-sample (or switch to an in-kernel shift-based im2col) instead of
    # materializing the O((N*H*W)^2)-scaled dense operator.
    return jnp.asarray(g.reshape(KTAPS * m_out, m_in))


def pack_params(params, batch, height, width):
    """Precompute kernel operands: stacked tap-gather operators, channel-padded
    per-tap weights, and padded BN gamma/beta rows.  The conv bias is dropped on
    purpose — BatchNorm's mean subtraction cancels it exactly."""
    g_mats, w_mats, gammas, betas = [], [], [], []
    h, w = height, width
    for (wt, _bias_cancelled_by_bn, gm, bt) in params:
        c_out, c_in = wt.shape[0], wt.shape[1]
        g_mats.append(_gather_stacked(batch, h, w))
        wk = jnp.transpose(wt, (2, 3, 1, 0)).reshape(KTAPS, c_in, c_out)  # (t,cin,cout)
        w_mats.append(jnp.pad(wk, ((0, 0), (0, CPAD - c_in), (0, CPAD - c_out))))
        gammas.append(jnp.pad(gm, (0, CPAD - c_out)).reshape(1, CPAD))
        betas.append(jnp.pad(bt, (0, CPAD - c_out)).reshape(1, CPAD))
        h, w = _out_dim(h), _out_dim(w)
    return tuple(g_mats), tuple(w_mats), tuple(gammas), tuple(betas)


@jax.jit
def encoder_forward(x_nchw, packed):
    g_mats, w_mats, gammas, betas = packed
    n, _c, h, w = x_nchw.shape
    h3 = _out_dim(_out_dim(_out_dim(h)))
    w3 = _out_dim(_out_dim(_out_dim(w)))
    c_out = 64
    # NCHW with C_in = 1 flattens to (n, h, w) rows for free (pure reshape).
    x_col = x_nchw.reshape(n * h * w, 1)
    vmem = pl.BlockSpec(memory_space=pltpu.MemorySpace.VMEM)
    out2d = pl.pallas_call(
        _encoder_kernel,
        out_shape=jax.ShapeDtypeStruct((n * h3 * w3, c_out), jnp.float32),
        in_specs=[vmem] * 13,
        out_specs=vmem,
    )(x_col,
      g_mats[0], g_mats[1], g_mats[2],
      w_mats[0], w_mats[1], w_mats[2],
      gammas[0], betas[0], gammas[1], betas[1], gammas[2], betas[2])
    # KB-scale relayout back to PyTorch's NCHW output convention.
    # TODO(synk): when scaling batch/spatial, add an M-grid (parallel for v7x's
    # 2 TCs) with a two-pass BN so batch statistics stay global.
    return jnp.transpose(out2d.reshape(n, h3, w3, c_out), (0, 3, 1, 2))


# ---------------------------------------------------------------------------
# Pure-JAX reference (matches PyTorch forward: conv+bias, BN batch stats, ReLU).
# ---------------------------------------------------------------------------
def _reference_forward(x_nchw, params):
    y = x_nchw
    for (w, b, g, bt) in params:
        y = jax.lax.conv_general_dilated(
            y, w, window_strides=(2, 2), padding=((1, 1), (1, 1)),
            dimension_numbers=("NCHW", "OIHW", "NCHW"),
            precision=jax.lax.Precision.HIGHEST)
        y = y + b[None, :, None, None]
        mean = jnp.mean(y, axis=(0, 2, 3), keepdims=True)
        var = jnp.mean((y - mean) ** 2, axis=(0, 2, 3), keepdims=True)
        y = (y - mean) * jax.lax.rsqrt(var + BN_EPS)
        y = jnp.maximum(g[None, :, None, None] * y + bt[None, :, None, None], 0.0)
    return y


# ---------------------------------------------------------------------------
# Deterministic synthetic parameters (shapes from Encoder.__init__).
# ---------------------------------------------------------------------------
def init_params(key):
    layer_dims = [(1, 16), (16, 32), (32, 64)]
    params = []
    for i, (cin, cout) in enumerate(layer_dims):
        kw_, kb_, kg_, kbt_ = jax.random.split(jax.random.fold_in(key, i), 4)
        fan_in = cin * 3 * 3
        w = jax.random.normal(kw_, (cout, cin, 3, 3), jnp.float32) / jnp.sqrt(fan_in)
        b = 0.1 * jax.random.normal(kb_, (cout,), jnp.float32)   # cancelled by BN
        g = 1.0 + 0.1 * jax.random.normal(kg_, (cout,), jnp.float32)
        bt = 0.1 * jax.random.normal(kbt_, (cout,), jnp.float32)
        params.append((w, b, g, bt))
    return params


# TODO(synk): BatchNorm running_mean/running_var updates (training-mode module
# state side effect) are not modeled; forward activations match.

if __name__ == "__main__":
    key = jax.random.PRNGKey(0)
    params = init_params(key)
    # small MNIST-like input: batch=2, 1 channel, 16x16 spatial (NCHW)
    x = jax.random.normal(jax.random.fold_in(key, 99), (2, 1, 16, 16), jnp.float32)

    packed = pack_params(params, batch=2, height=16, width=16)
    out = jax.block_until_ready(encoder_forward(x, packed))

    assert out.shape == (2, 64, 2, 2), out.shape
    assert bool(jnp.all(jnp.isfinite(out)))
    ref = _reference_forward(x, params)
    max_err = float(jnp.max(jnp.abs(out - ref)))
    # MXU f32 matmuls at default precision may carry a few bf16-pass ulps through
    # three conv+BN layers; 2e-2 remains far below the O(1) activation scale.
    assert max_err < 2e-2, f"mismatch vs JAX reference: {max_err}"
    print("KERNEL_OK")
</pallas_src>

<mosaic_0001>
module attributes {stable_mosaic.version = 11 : i64} {
  func.func @_encoder_kernel(%arg0: memref<512x1xf32, #tpu.memory_space<vmem>>, %arg1: memref<1152x512xf32, #tpu.memory_space<vmem>>, %arg2: memref<288x128xf32, #tpu.memory_space<vmem>>, %arg3: memref<72x32xf32, #tpu.memory_space<vmem>>, %arg4: memref<9x128x128xf32, #tpu.memory_space<vmem>>, %arg5: memref<9x128x128xf32, #tpu.memory_space<vmem>>, %arg6: memref<9x128x128xf32, #tpu.memory_space<vmem>>, %arg7: memref<1x128xf32, #tpu.memory_space<vmem>>, %arg8: memref<1x128xf32, #tpu.memory_space<vmem>>, %arg9: memref<1x128xf32, #tpu.memory_space<vmem>>, %arg10: memref<1x128xf32, #tpu.memory_space<vmem>>, %arg11: memref<1x128xf32, #tpu.memory_space<vmem>>, %arg12: memref<1x128xf32, #tpu.memory_space<vmem>>, %arg13: memref<8x64xf32, #tpu.memory_space<vmem>>) attributes {dimension_semantics = [], scalar_prefetch = 0 : i64, scratch_operands = 0 : i64, tpu.core_type = #tpu.core_type<tc>} {
    %c0 = arith.constant 0 : index
    %c0_0 = arith.constant 0 : index
    %0 = vector.load %arg0[%c0, %c0_0] : memref<512x1xf32, #tpu.memory_space<vmem>>, vector<512x1xf32>
    %1 = vector.shape_cast %0 : vector<512x1xf32> to vector<512x1xf32>
    %2 = vector.broadcast %1 : vector<512x1xf32> to vector<512x128xf32>
    %c0_1 = arith.constant 0 : index
    %c0_2 = arith.constant 0 : index
    %3 = vector.load %arg1[%c0_1, %c0_2] : memref<1152x512xf32, #tpu.memory_space<vmem>>, vector<1152x512xf32>
    %cst = arith.constant dense<0.000000e+00> : vector<1152x128xf32>
    %4 = tpu.matmul %3, %2, %cst {dimension_numbers = #tpu.dot_dimension_numbers<[1], [0], [0], [1], [0, 0, 1, 1], [], []>} : vector<1152x512xf32>, vector<512x128xf32>, vector<1152x128xf32> -> vector<1152x128xf32>
    %5 = vector.extract_strided_slice %4 {offsets = [0, 0], sizes = [128, 128], strides = [1, 1]} : vector<1152x128xf32> to vector<128x128xf32>
    %c0_3 = arith.constant 0 : index
    %c0_4 = arith.constant 0 : index
    %c0_5 = arith.constant 0 : index
    %6 = vector.load %arg4[%c0_3, %c0_4, %c0_5] : memref<9x128x128xf32, #tpu.memory_space<vmem>>, vector<1x128x128xf32>
    %7 = vector.shape_cast %6 : vector<1x128x128xf32> to vector<128x128xf32>
    %cst_6 = arith.constant dense<0.000000e+00> : vector<128x128xf32>
    %8 = tpu.matmul %5, %7, %cst_6 {dimension_numbers = #tpu.dot_dimension_numbers<[1], [0], [0], [1], [0, 0, 1, 1], [], []>} : vector<128x128xf32>, vector<128x128xf32>, vector<128x128xf32> -> vector<128x128xf32>
    %9 = vector.extract_strided_slice %4 {offsets = [128, 0], sizes = [128, 128], strides = [1, 1]} : vector<1152x128xf32> to vector<128x128xf32>
    %c1 = arith.constant 1 : index
    %c0_7 = arith.constant 0 : index
    %c0_8 = arith.constant 0 : index
    %10 = vector.load %arg4[%c1, %c0_7, %c0_8] : memref<9x128x128xf32, #tpu.memory_space<vmem>>, vector<1x128x128xf32>
    %11 = vector.shape_cast %10 : vector<1x128x128xf32> to vector<128x128xf32>
    %cst_9 = arith.constant dense<0.000000e+00> : vector<128x128xf32>
    %12 = tpu.matmul %9, %11, %cst_9 {dimension_numbers = #tpu.dot_dimension_numbers<[1], [0], [0], [1], [0, 0, 1, 1], [], []>} : vector<128x128xf32>, vector<128x128xf32>, vector<128x128xf32> -> vector<128x128xf32>
    %13 = arith.addf %8, %12 : vector<128x128xf32>
    %14 = vector.extract_strided_slice %4 {offsets = [256, 0], sizes = [128, 128], strides = [1, 1]} : vector<1152x128xf32> to vector<128x128xf32>
    %c2 = arith.constant 2 : index
    %c0_10 = arith.constant 0 : index
    %c0_11 = arith.constant 0 : index
    %15 = vector.load %arg4[%c2, %c0_10, %c0_11] : memref<9x128x128xf32, #tpu.memory_space<vmem>>, vector<1x128x128xf32>
    %16 = vector.shape_cast %15 : vector<1x128x128xf32> to vector<128x128xf32>
    %cst_12 = arith.constant dense<0.000000e+00> : vector<128x128xf32>
    %17 = tpu.matmul %14, %16, %cst_12 {dimension_numbers = #tpu.dot_dimension_numbers<[1], [0], [0], [1], [0, 0, 1, 1], [], []>} : vector<128x128xf32>, vector<128x128xf32>, vector<128x128xf32> -> vector<128x128xf32>
    %18 = arith.addf %13, %17 : vector<128x128xf32>
    %19 = vector.extract_strided_slice %4 {offsets = [384, 0], sizes = [128, 128], strides = [1, 1]} : vector<1152x128xf32> to vector<128x128xf32>
    %c3 = arith.constant 3 : index
    %c0_13 = arith.constant 0 : index
    %c0_14 = arith.constant 0 : index
    %20 = vector.load %arg4[%c3, %c0_13, %c0_14] : memref<9x128x128xf32, #tpu.memory_space<vmem>>, vector<1x128x128xf32>
    %21 = vector.shape_cast %20 : vector<1x128x128xf32> to vector<128x128xf32>
    %cst_15 = arith.constant dense<0.000000e+00> : vector<128x128xf32>
    %22 = tpu.matmul %19, %21, %cst_15 {dimension_numbers = #tpu.dot_dimension_numbers<[1], [0], [0], [1], [0, 0, 1, 1], [], []>} : vector<128x128xf32>, vector<128x128xf32>, vector<128x128xf32> -> vector<128x128xf32>
    %23 = arith.addf %18, %22 : vector<128x128xf32>
    %24 = vector.extract_strided_slice %4 {offsets = [512, 0], sizes = [128, 128], strides = [1, 1]} : vector<1152x128xf32> to vector<128x128xf32>
    %c4 = arith.constant 4 : index
    %c0_16 = arith.constant 0 : index
    %c0_17 = arith.constant 0 : index
    %25 = vector.load %arg4[%c4, %c0_16, %c0_17] : memref<9x128x128xf32, #tpu.memory_space<vmem>>, vector<1x128x128xf32>
    %26 = vector.shape_cast %25 : vector<1x128x128xf32> to vector<128x128xf32>
    %cst_18 = arith.constant dense<0.000000e+00> : vector<128x128xf32>
    %27 = tpu.matmul %24, %26, %cst_18 {dimension_numbers = #tpu.dot_dimension_numbers<[1], [0], [0], [1], [0, 0, 1, 1], [], []>} : vector<128x128xf32>, vector<128x128xf32>, vector<128x128xf32> -> vector<128x128xf32>
    %28 = arith.addf %23, %27 : vector<128x128xf32>
    %29 = vector.extract_strided_slice %4 {offsets = [640, 0], sizes = [128, 128], strides = [1, 1]} : vector<1152x128xf32> to vector<128x128xf32>
    %c5 = arith.constant 5 : index
    %c0_19 = arith.constant 0 : index
    %c0_20 = arith.constant 0 : index
    %30 = vector.load %arg4[%c5, %c0_19, %c0_20] : memref<9x128x128xf32, #tpu.memory_space<vmem>>, vector<1x128x128xf32>
    %31 = vector.shape_cast %30 : vector<1x128x128xf32> to vector<128x128xf32>
    %cst_21 = arith.constant dense<0.000000e+00> : vector<128x128xf32>
    %32 = tpu.matmul %29, %31, %cst_21 {dimension_numbers = #tpu.dot_dimension_numbers<[1], [0], [0], [1], [0, 0, 1, 1], [], []>} : vector<128x128xf32>, vector<128x128xf32>, vector<128x128xf32> -> vector<128x128xf32>
    %33 = arith.addf %28, %32 : vector<128x128xf32>
    %34 = vector.extract_strided_slice %4 {offsets = [768, 0], sizes = [128, 128], strides = [1, 1]} : vector<1152x128xf32> to vector<128x128xf32>
    %c6 = arith.constant 6 : index
    %c0_22 = arith.constant 0 : index
    %c0_23 = arith.constant 0 : index
    %35 = vector.load %arg4[%c6, %c0_22, %c0_23] : memref<9x128x128xf32, #tpu.memory_space<vmem>>, vector<1x128x128xf32>
    %36 = vector.shape_cast %35 : vector<1x128x128xf32> to vector<128x128xf32>
    %cst_24 = arith.constant dense<0.000000e+00> : vector<128x128xf32>
    %37 = tpu.matmul %34, %36, %cst_24 {dimension_numbers = #tpu.dot_dimension_numbers<[1], [0], [0], [1], [0, 0, 1, 1], [], []>} : vector<128x128xf32>, vector<128x128xf32>, vector<128x128xf32> -> vector<128x128xf32>
    %38 = arith.addf %33, %37 : vector<128x128xf32>
    %39 = vector.extract_strided_slice %4 {offsets = [896, 0], sizes = [128, 128], strides = [1, 1]} : vector<1152x128xf32> to vector<128x128xf32>
    %c7 = arith.constant 7 : index
    %c0_25 = arith.constant 0 : index
    %c0_26 = arith.constant 0 : index
    %40 = vector.load %arg4[%c7, %c0_25, %c0_26] : memref<9x128x128xf32, #tpu.memory_space<vmem>>, vector<1x128x128xf32>
    %41 = vector.shape_cast %40 : vector<1x128x128xf32> to vector<128x128xf32>
    %cst_27 = arith.constant dense<0.000000e+00> : vector<128x128xf32>
    %42 = tpu.matmul %39, %41, %cst_27 {dimension_numbers = #tpu.dot_dimension_numbers<[1], [0], [0], [1], [0, 0, 1, 1], [], []>} : vector<128x128xf32>, vector<128x128xf32>, vector<128x128xf32> -> vector<128x128xf32>
    %43 = arith.addf %38, %42 : vector<128x128xf32>
    %44 = vector.extract_strided_slice %4 {offsets = [1024, 0], sizes = [128, 128], strides = [1, 1]} : vector<1152x128xf32> to vector<128x128xf32>
    %c8 = arith.constant 8 : index
    %c0_28 = arith.constant 0 : index
    %c0_29 = arith.constant 0 : index
    %45 = vector.load %arg4[%c8, %c0_28, %c0_29] : memref<9x128x128xf32, #tpu.memory_space<vmem>>, vector<1x128x128xf32>
    %46 = vector.shape_cast %45 : vector<1x128x128xf32> to vector<128x128xf32>
    %cst_30 = arith.constant dense<0.000000e+00> : vector<128x128xf32>
    %47 = tpu.matmul %44, %46, %cst_30 {dimension_numbers = #tpu.dot_dimension_numbers<[1], [0], [0], [1], [0, 0, 1, 1], [], []>} : vector<128x128xf32>, vector<128x128xf32>, vector<128x128xf32> -> vector<128x128xf32>
    %48 = arith.addf %43, %47 : vector<128x128xf32>
    %cst_31 = arith.constant dense<0.000000e+00> : vector<128xf32>
    %49 = vector.multi_reduction <add>, %48, %cst_31 [0] : vector<128x128xf32> to vector<128xf32>
    %50 = vector.shape_cast %49 : vector<128xf32> to vector<1x128xf32>
    %51 = arith.mulf %48, %48 : vector<128x128xf32>
    %cst_32 = arith.constant dense<0.000000e+00> : vector<128xf32>
    %52 = vector.multi_reduction <add>, %51, %cst_32 [0] : vector<128x128xf32> to vector<128xf32>
    %53 = vector.shape_cast %52 : vector<128xf32> to vector<1x128xf32>
    %cst_33 = arith.constant 7.812500e-03 : f32
    %54 = vector.broadcast %cst_33 : f32 to vector<1x128xf32>
    %55 = arith.mulf %50, %54 : vector<1x128xf32>
    %cst_34 = arith.constant 7.812500e-03 : f32
    %56 = vector.broadcast %cst_34 : f32 to vector<1x128xf32>
    %57 = arith.mulf %53, %56 : vector<1x128xf32>
    %58 = arith.mulf %55, %55 : vector<1x128xf32>
    %59 = arith.subf %57, %58 : vector<1x128xf32>
    %c0_35 = arith.constant 0 : index
    %c0_36 = arith.constant 0 : index
    %60 = vector.load %arg7[%c0_35, %c0_36] : memref<1x128xf32, #tpu.memory_space<vmem>>, vector<1x128xf32>
    %cst_37 = arith.constant 9.99999974E-6 : f32
    %61 = vector.broadcast %cst_37 : f32 to vector<1x128xf32>
    %62 = arith.addf %59, %61 : vector<1x128xf32>
    %63 = math.rsqrt %62 : vector<1x128xf32>
    %64 = arith.mulf %60, %63 : vector<1x128xf32>
    %c0_38 = arith.constant 0 : index
    %c0_39 = arith.constant 0 : index
    %65 = vector.load %arg8[%c0_38, %c0_39] : memref<1x128xf32, #tpu.memory_space<vmem>>, vector<1x128xf32>
    %66 = arith.mulf %64, %55 : vector<1x128xf32>
    %67 = arith.subf %65, %66 : vector<1x128xf32>
    %68 = vector.broadcast %64 : vector<1x128xf32> to vector<128x128xf32>
    %69 = arith.mulf %48, %68 : vector<128x128xf32>
    %70 = vector.broadcast %67 : vector<1x128xf32> to vector<128x128xf32>
    %71 = arith.addf %69, %70 : vector<128x128xf32>
    %cst_40 = arith.constant 0.000000e+00 : f32
    %72 = vector.broadcast %cst_40 : f32 to vector<128x128xf32>
    %73 = arith.maximumf %71, %72 : vector<128x128xf32>
    %c0_41 = arith.constant 0 : index
    %c0_42 = arith.constant 0 : index
    %74 = vector.load %arg2[%c0_41, %c0_42] : memref<288x128xf32, #tpu.memory_space<vmem>>, vector<288x128xf32>
    %cst_43 = arith.constant dense<0.000000e+00> : vector<288x128xf32>
    %75 = tpu.matmul %74, %73, %cst_43 {dimension_numbers = #tpu.dot_dimension_numbers<[1], [0], [0], [1], [0, 0, 1, 1], [], []>} : vector<288x128xf32>, vector<128x128xf32>, vector<288x128xf32> -> vector<288x128xf32>
    %76 = vector.extract_strided_slice %75 {offsets = [0, 0], sizes = [32, 128], strides = [1, 1]} : vector<288x128xf32> to vector<32x128xf32>
    %c0_44 = arith.constant 0 : index
    %c0_45 = arith.constant 0 : index
    %c0_46 = arith.constant 0 : index
    %77 = vector.load %arg5[%c0_44, %c0_45, %c0_46] : memref<9x128x128xf32, #tpu.memory_space<vmem>>, vector<1x128x128xf32>
    %78 = vector.shape_cast %77 : vector<1x128x128xf32> to vector<128x128xf32>
    %cst_47 = arith.constant dense<0.000000e+00> : vector<32x128xf32>
    %79 = tpu.matmul %76, %78, %cst_47 {dimension_numbers = #tpu.dot_dimension_numbers<[1], [0], [0], [1], [0, 0, 1, 1], [], []>} : vector<32x128xf32>, vector<128x128xf32>, vector<32x128xf32> -> vector<32x128xf32>
    %80 = vector.extract_strided_slice %75 {offsets = [32, 0], sizes = [32, 128], strides = [1, 1]} : vector<288x128xf32> to vector<32x128xf32>
    %c1_48 = arith.constant 1 : index
    %c0_49 = arith.constant 0 : index
    %c0_50 = arith.constant 0 : index
    %81 = vector.load %arg5[%c1_48, %c0_49, %c0_50] : memref<9x128x128xf32, #tpu.memory_space<vmem>>, vector<1x128x128xf32>
    %82 = vector.shape_cast %81 : vector<1x128x128xf32> to vector<128x128xf32>
    %cst_51 = arith.constant dense<0.000000e+00> : vector<32x128xf32>
    %83 = tpu.matmul %80, %82, %cst_51 {dimension_numbers = #tpu.dot_dimension_numbers<[1], [0], [0], [1], [0, 0, 1, 1], [], []>} : vector<32x128xf32>, vector<128x128xf32>, vector<32x128xf32> -> vector<32x128xf32>
    %84 = arith.addf %79, %83 : vector<32x128xf32>
    %85 = vector.extract_strided_slice %75 {offsets = [64, 0], sizes = [32, 128], strides = [1, 1]} : vector<288x128xf32> to vector<32x128xf32>
    %c2_52 = arith.constant 2 : index
    %c0_53 = arith.constant 0 : index
    %c0_54 = arith.constant 0 : index
    %86 = vector.load %arg5[%c2_52, %c0_53, %c0_54] : memref<9x128x128xf32, #tpu.memory_space<vmem>>, vector<1x128x128xf32>
    %87 = vector.shape_cast %86 : vector<1x128x128xf32> to vector<128x128xf32>
    %cst_55 = arith.constant dense<0.000000e+00> : vector<32x128xf32>
    %88 = tpu.matmul %85, %87, %cst_55 {dimension_numbers = #tpu.dot_dimension_numbers<[1], [0], [0], [1], [0, 0, 1, 1], [], []>} : vector<32x128xf32>, vector<128x128xf32>, vector<32x128xf32> -> vector<32x128xf32>
    %89 = arith.addf %84, %88 : vector<32x128xf32>
    %90 = vector.extract_strided_slice %75 {offsets = [96, 0], sizes = [32, 128], strides = [1, 1]} : vector<288x128xf32> to vector<32x128xf32>
    %c3_56 = arith.constant 3 : index
    %c0_57 = arith.constant 0 : index
    %c0_58 = arith.constant 0 : index
    %91 = vector.load %arg5[%c3_56, %c0_57, %c0_58] : memref<9x128x128xf32, #tpu.memory_space<vmem>>, vector<1x128x128xf32>
    %92 = vector.shape_cast %91 : vector<1x128x128xf32> to vector<128x128xf32>
    %cst_59 = arith.constant dense<0.000000e+00> : vector<32x128xf32>
    %93 = tpu.matmul %90, %92, %cst_59 {dimension_numbers = #tpu.dot_dimension_numbers<[1], [0], [0], [1], [0, 0, 1, 1], [], []>} : vector<32x128xf32>, vector<128x128xf32>, vector<32x128xf32> -> vector<32x128xf32>
    %94 = arith.addf %89, %93 : vector<32x128xf32>
    %95 = vector.extract_strided_slice %75 {offsets = [128, 0], sizes = [32, 128], strides = [1, 1]} : vector<288x128xf32> to vector<32x128xf32>
    %c4_60 = arith.constant 4 : index
    %c0_61 = arith.constant 0 : index
    %c0_62 = arith.constant 0 : index
    %96 = vector.load %arg5[%c4_60, %c0_61, %c0_62] : memref<9x128x128xf32, #tpu.memory_space<vmem>>, vector<1x128x128xf32>
    %97 = vector.shape_cast %96 : vector<1x128x128xf32> to vector<128x128xf32>
    %cst_63 = arith.constant dense<0.000000e+00> : vector<32x128xf32>
    %98 = tpu.matmul %95, %97, %cst_63 {dimension_numbers = #tpu.dot_dimension_numbers<[1], [0], [0], [1], [0, 0, 1, 1], [], []>} : vector<32x128xf32>, vector<128x128xf32>, vector<32x128xf32> -> vector<32x128xf32>
    %99 = arith.addf %94, %98 : vector<32x128xf32>
    %100 = vector.extract_strided_slice %75 {offsets = [160, 0], sizes = [32, 128], strides = [1, 1]} : vector<288x128xf32> to vector<32x128xf32>
    %c5_64 = arith.constant 5 : index
    %c0_65 = arith.constant 0 : index
    %c0_66 = arith.constant 0 : index
    %101 = vector.load %arg5[%c5_64, %c0_65, %c0_66] : memref<9x128x128xf32, #tpu.memory_space<vmem>>, vector<1x128x128xf32>
    %102 = vector.shape_cast %101 : vector<1x128x128xf32> to vector<128x128xf32>
    %cst_67 = arith.constant dense<0.000000e+00> : vector<32x128xf32>
    %103 = tpu.matmul %100, %102, %cst_67 {dimension_numbers = #tpu.dot_dimension_numbers<[1], [0], [0], [1], [0, 0, 1, 1], [], []>} : vector<32x128xf32>, vector<128x128xf32>, vector<32x128xf32> -> vector<32x128xf32>
    %104 = arith.addf %99, %103 : vector<32x128xf32>
    %105 = vector.extract_strided_slice %75 {offsets = [192, 0], sizes = [32, 128], strides = [1, 1]} : vector<288x128xf32> to vector<32x128xf32>
    %c6_68 = arith.constant 6 : index
    %c0_69 = arith.constant 0 : index
    %c0_70 = arith.constant 0 : index
    %106 = vector.load %arg5[%c6_68, %c0_69, %c0_70] : memref<9x128x128xf32, #tpu.memory_space<vmem>>, vector<1x128x128xf32>
    %107 = vector.shape_cast %106 : vector<1x128x128xf32> to vector<128x128xf32>
    %cst_71 = arith.constant dense<0.000000e+00> : vector<32x128xf32>
    %108 = tpu.matmul %105, %107, %cst_71 {dimension_numbers = #tpu.dot_dimension_numbers<[1], [0], [0], [1], [0, 0, 1, 1], [], []>} : vector<32x128xf32>, vector<128x128xf32>, vector<32x128xf32> -> vector<32x128xf32>
    %109 = arith.addf %104, %108 : vector<32x128xf32>
    %110 = vector.extract_strided_slice %75 {offsets = [224, 0], sizes = [32, 128], strides = [1, 1]} : vector<288x128xf32> to vector<32x128xf32>
    %c7_72 = arith.constant 7 : index
    %c0_73 = arith.constant 0 : index
    %c0_74 = arith.constant 0 : index
    %111 = vector.load %arg5[%c7_72, %c0_73, %c0_74] : memref<9x128x128xf32, #tpu.memory_space<vmem>>, vector<1x128x128xf32>
    %112 = vector.shape_cast %111 : vector<1x128x128xf32> to vector<128x128xf32>
    %cst_75 = arith.constant dense<0.000000e+00> : vector<32x128xf32>
    %113 = tpu.matmul %110, %112, %cst_75 {dimension_numbers = #tpu.dot_dimension_numbers<[1], [0], [0], [1], [0, 0, 1, 1], [], []>} : vector<32x128xf32>, vector<128x128xf32>, vector<32x128xf32> -> vector<32x128xf32>
    %114 = arith.addf %109, %113 : vector<32x128xf32>
    %115 = vector.extract_strided_slice %75 {offsets = [256, 0], sizes = [32, 128], strides = [1, 1]} : vector<288x128xf32> to vector<32x128xf32>
    %c8_76 = arith.constant 8 : index
    %c0_77 = arith.constant 0 : index
    %c0_78 = arith.constant 0 : index
    %116 = vector.load %arg5[%c8_76, %c0_77, %c0_78] : memref<9x128x128xf32, #tpu.memory_space<vmem>>, vector<1x128x128xf32>
    %117 = vector.shape_cast %116 : vector<1x128x128xf32> to vector<128x128xf32>
    %cst_79 = arith.constant dense<0.000000e+00> : vector<32x128xf32>
    %118 = tpu.matmul %115, %117, %cst_79 {dimension_numbers = #tpu.dot_dimension_numbers<[1], [0], [0], [1], [0, 0, 1, 1], [], []>} : vector<32x128xf32>, vector<128x128xf32>, vector<32x128xf32> -> vector<32x128xf32>
    %119 = arith.addf %114, %118 : vector<32x128xf32>
    %cst_80 = arith.constant dense<0.000000e+00> : vector<128xf32>
    %120 = vector.multi_reduction <add>, %119, %cst_80 [0] : vector<32x128xf32> to vector<128xf32>
    %121 = vector.shape_cast %120 : vector<128xf32> to vector<1x128xf32>
    %122 = arith.mulf %119, %119 : vector<32x128xf32>
    %cst_81 = arith.constant dense<0.000000e+00> : vector<128xf32>
    %123 = vector.multi_reduction <add>, %122, %cst_81 [0] : vector<32x128xf32> to vector<128xf32>
    %124 = vector.shape_cast %123 : vector<128xf32> to vector<1x128xf32>
    %cst_82 = arith.constant 3.125000e-02 : f32
    %125 = vector.broadcast %cst_82 : f32 to vector<1x128xf32>
    %126 = arith.mulf %121, %125 : vector<1x128xf32>
    %cst_83 = arith.constant 3.125000e-02 : f32
    %127 = vector.broadcast %cst_83 : f32 to vector<1x128xf32>
    %128 = arith.mulf %124, %127 : vector<1x128xf32>
    %129 = arith.mulf %126, %126 : vector<1x128xf32>
    %130 = arith.subf %128, %129 : vector<1x128xf32>
    %c0_84 = arith.constant 0 : index
    %c0_85 = arith.constant 0 : index
    %131 = vector.load %arg9[%c0_84, %c0_85] : memref<1x128xf32, #tpu.memory_space<vmem>>, vector<1x128xf32>
    %cst_86 = arith.constant 9.99999974E-6 : f32
    %132 = vector.broadcast %cst_86 : f32 to vector<1x128xf32>
    %133 = arith.addf %130, %132 : vector<1x128xf32>
    %134 = math.rsqrt %133 : vector<1x128xf32>
    %135 = arith.mulf %131, %134 : vector<1x128xf32>
    %c0_87 = arith.constant 0 : index
    %c0_88 = arith.constant 0 : index
    %136 = vector.load %arg10[%c0_87, %c0_88] : memref<1x128xf32, #tpu.memory_space<vmem>>, vector<1x128xf32>
    %137 = arith.mulf %135, %126 : vector<1x128xf32>
    %138 = arith.subf %136, %137 : vector<1x128xf32>
    %139 = vector.broadcast %135 : vector<1x128xf32> to vector<32x128xf32>
    %140 = arith.mulf %119, %139 : vector<32x128xf32>
    %141 = vector.broadcast %138 : vector<1x128xf32> to vector<32x128xf32>
    %142 = arith.addf %140, %141 : vector<32x128xf32>
    %cst_89 = arith.constant 0.000000e+00 : f32
    %143 = vector.broadcast %cst_89 : f32 to vector<32x128xf32>
    %144 = arith.maximumf %142, %143 : vector<32x128xf32>
    %c0_90 = arith.constant 0 : index
    %c0_91 = arith.constant 0 : index
    %145 = vector.load %arg3[%c0_90, %c0_91] : memref<72x32xf32, #tpu.memory_space<vmem>>, vector<72x32xf32>
    %cst_92 = arith.constant dense<0.000000e+00> : vector<72x128xf32>
    %146 = tpu.matmul %145, %144, %cst_92 {dimension_numbers = #tpu.dot_dimension_numbers<[1], [0], [0], [1], [0, 0, 1, 1], [], []>} : vector<72x32xf32>, vector<32x128xf32>, vector<72x128xf32> -> vector<72x128xf32>
    %147 = vector.extract_strided_slice %146 {offsets = [0, 0], sizes = [8, 128], strides = [1, 1]} : vector<72x128xf32> to vector<8x128xf32>
    %c0_93 = arith.constant 0 : index
    %c0_94 = arith.constant 0 : index
    %c0_95 = arith.constant 0 : index
    %148 = vector.load %arg6[%c0_93, %c0_94, %c0_95] : memref<9x128x128xf32, #tpu.memory_space<vmem>>, vector<1x128x128xf32>
    %149 = vector.shape_cast %148 : vector<1x128x128xf32> to vector<128x128xf32>
    %cst_96 = arith.constant dense<0.000000e+00> : vector<8x128xf32>
    %150 = tpu.matmul %147, %149, %cst_96 {dimension_numbers = #tpu.dot_dimension_numbers<[1], [0], [0], [1], [0, 0, 1, 1], [], []>} : vector<8x128xf32>, vector<128x128xf32>, vector<8x128xf32> -> vector<8x128xf32>
    %151 = vector.extract_strided_slice %146 {offsets = [8, 0], sizes = [8, 128], strides = [1, 1]} : vector<72x128xf32> to vector<8x128xf32>
    %c1_97 = arith.constant 1 : index
    %c0_98 = arith.constant 0 : index
    %c0_99 = arith.constant 0 : index
    %152 = vector.load %arg6[%c1_97, %c0_98, %c0_99] : memref<9x128x128xf32, #tpu.memory_space<vmem>>, vector<1x128x128xf32>
    %153 = vector.shape_cast %152 : vector<1x128x128xf32> to vector<128x128xf32>
    %cst_100 = arith.constant dense<0.000000e+00> : vector<8x128xf32>
    %154 = tpu.matmul %151, %153, %cst_100 {dimension_numbers = #tpu.dot_dimension_numbers<[1], [0], [0], [1], [0, 0, 1, 1], [], []>} : vector<8x128xf32>, vector<128x128xf32>, vector<8x128xf32> -> vector<8x128xf32>
    %155 = arith.addf %150, %154 : vector<8x128xf32>
    %156 = vector.extract_strided_slice %146 {offsets = [16, 0], sizes = [8, 128], strides = [1, 1]} : vector<72x128xf32> to vector<8x128xf32>
    %c2_101 = arith.constant 2 : index
    %c0_102 = arith.constant 0 : index
    %c0_103 = arith.constant 0 : index
    %157 = vector.load %arg6[%c2_101, %c0_102, %c0_103] : memref<9x128x128xf32, #tpu.memory_space<vmem>>, vector<1x128x128xf32>
    %158 = vector.shape_cast %157 : vector<1x128x128xf32> to vector<128x128xf32>
    %cst_104 = arith.constant dense<0.000000e+00> : vector<8x128xf32>
    %159 = tpu.matmul %156, %158, %cst_104 {dimension_numbers = #tpu.dot_dimension_numbers<[1], [0], [0], [1], [0, 0, 1, 1], [], []>} : vector<8x128xf32>, vector<128x128xf32>, vector<8x128xf32> -> vector<8x128xf32>
    %160 = arith.addf %155, %159 : vector<8x128xf32>
    %161 = vector.extract_strided_slice %146 {offsets = [24, 0], sizes = [8, 128], strides = [1, 1]} : vector<72x128xf32> to vector<8x128xf32>
    %c3_105 = arith.constant 3 : index
    %c0_106 = arith.constant 0 : index
    %c0_107 = arith.constant 0 : index
    %162 = vector.load %arg6[%c3_105, %c0_106, %c0_107] : memref<9x128x128xf32, #tpu.memory_space<vmem>>, vector<1x128x128xf32>
    %163 = vector.shape_cast %162 : vector<1x128x128xf32> to vector<128x128xf32>
    %cst_108 = arith.constant dense<0.000000e+00> : vector<8x128xf32>
    %164 = tpu.matmul %161, %163, %cst_108 {dimension_numbers = #tpu.dot_dimension_numbers<[1], [0], [0], [1], [0, 0, 1, 1], [], []>} : vector<8x128xf32>, vector<128x128xf32>, vector<8x128xf32> -> vector<8x128xf32>
    %165 = arith.addf %160, %164 : vector<8x128xf32>
    %166 = vector.extract_strided_slice %146 {offsets = [32, 0], sizes = [8, 128], strides = [1, 1]} : vector<72x128xf32> to vector<8x128xf32>
    %c4_109 = arith.constant 4 : index
    %c0_110 = arith.constant 0 : index
    %c0_111 = arith.constant 0 : index
    %167 = vector.load %arg6[%c4_109, %c0_110, %c0_111] : memref<9x128x128xf32, #tpu.memory_space<vmem>>, vector<1x128x128xf32>
    %168 = vector.shape_cast %167 : vector<1x128x128xf32> to vector<128x128xf32>
    %cst_112 = arith.constant dense<0.000000e+00> : vector<8x128xf32>
    %169 = tpu.matmul %166, %168, %cst_112 {dimension_numbers = #tpu.dot_dimension_numbers<[1], [0], [0], [1], [0, 0, 1, 1], [], []>} : vector<8x128xf32>, vector<128x128xf32>, vector<8x128xf32> -> vector<8x128xf32>
    %170 = arith.addf %165, %169 : vector<8x128xf32>
    %171 = vector.extract_strided_slice %146 {offsets = [40, 0], sizes = [8, 128], strides = [1, 1]} : vector<72x128xf32> to vector<8x128xf32>
    %c5_113 = arith.constant 5 : index
    %c0_114 = arith.constant 0 : index
    %c0_115 = arith.constant 0 : index
    %172 = vector.load %arg6[%c5_113, %c0_114, %c0_115] : memref<9x128x128xf32, #tpu.memory_space<vmem>>, vector<1x128x128xf32>
    %173 = vector.shape_cast %172 : vector<1x128x128xf32> to vector<128x128xf32>
    %cst_116 = arith.constant dense<0.000000e+00> : vector<8x128xf32>
    %174 = tpu.matmul %171, %173, %cst_116 {dimension_numbers = #tpu.dot_dimension_numbers<[1], [0], [0], [1], [0, 0, 1, 1], [], []>} : vector<8x128xf32>, vector<128x128xf32>, vector<8x128xf32> -> vector<8x128xf32>
    %175 = arith.addf %170, %174 : vector<8x128xf32>
    %176 = vector.extract_strided_slice %146 {offsets = [48, 0], sizes = [8, 128], strides = [1, 1]} : vector<72x128xf32> to vector<8x128xf32>
    %c6_117 = arith.constant 6 : index
    %c0_118 = arith.constant 0 : index
    %c0_119 = arith.constant 0 : index
    %177 = vector.load %arg6[%c6_117, %c0_118, %c0_119] : memref<9x128x128xf32, #tpu.memory_space<vmem>>, vector<1x128x128xf32>
    %178 = vector.shape_cast %177 : vector<1x128x128xf32> to vector<128x128xf32>
    %cst_120 = arith.constant dense<0.000000e+00> : vector<8x128xf32>
    %179 = tpu.matmul %176, %178, %cst_120 {dimension_numbers = #tpu.dot_dimension_numbers<[1], [0], [0], [1], [0, 0, 1, 1], [], []>} : vector<8x128xf32>, vector<128x128xf32>, vector<8x128xf32> -> vector<8x128xf32>
    %180 = arith.addf %175, %179 : vector<8x128xf32>
    %181 = vector.extract_strided_slice %146 {offsets = [56, 0], sizes = [8, 128], strides = [1, 1]} : vector<72x128xf32> to vector<8x128xf32>
    %c7_121 = arith.constant 7 : index
    %c0_122 = arith.constant 0 : index
    %c0_123 = arith.constant 0 : index
    %182 = vector.load %arg6[%c7_121, %c0_122, %c0_123] : memref<9x128x128xf32, #tpu.memory_space<vmem>>, vector<1x128x128xf32>
    %183 = vector.shape_cast %182 : vector<1x128x128xf32> to vector<128x128xf32>
    %cst_124 = arith.constant dense<0.000000e+00> : vector<8x128xf32>
    %184 = tpu.matmul %181, %183, %cst_124 {dimension_numbers = #tpu.dot_dimension_numbers<[1], [0], [0], [1], [0, 0, 1, 1], [], []>} : vector<8x128xf32>, vector<128x128xf32>, vector<8x128xf32> -> vector<8x128xf32>
    %185 = arith.addf %180, %184 : vector<8x128xf32>
    %186 = vector.extract_strided_slice %146 {offsets = [64, 0], sizes = [8, 128], strides = [1, 1]} : vector<72x128xf32> to vector<8x128xf32>
    %c8_125 = arith.constant 8 : index
    %c0_126 = arith.constant 0 : index
    %c0_127 = arith.constant 0 : index
    %187 = vector.load %arg6[%c8_125, %c0_126, %c0_127] : memref<9x128x128xf32, #tpu.memory_space<vmem>>, vector<1x128x128xf32>
    %188 = vector.shape_cast %187 : vector<1x128x128xf32> to vector<128x128xf32>
    %cst_128 = arith.constant dense<0.000000e+00> : vector<8x128xf32>
    %189 = tpu.matmul %186, %188, %cst_128 {dimension_numbers = #tpu.dot_dimension_numbers<[1], [0], [0], [1], [0, 0, 1, 1], [], []>} : vector<8x128xf32>, vector<128x128xf32>, vector<8x128xf32> -> vector<8x128xf32>
    %190 = arith.addf %185, %189 : vector<8x128xf32>
    %cst_129 = arith.constant dense<0.000000e+00> : vector<128xf32>
    %191 = vector.multi_reduction <add>, %190, %cst_129 [0] : vector<8x128xf32> to vector<128xf32>
    %192 = vector.shape_cast %191 : vector<128xf32> to vector<1x128xf32>
    %193 = arith.mulf %190, %190 : vector<8x128xf32>
    %cst_130 = arith.constant dense<0.000000e+00> : vector<128xf32>
    %194 = vector.multi_reduction <add>, %193, %cst_130 [0] : vector<8x128xf32> to vector<128xf32>
    %195 = vector.shape_cast %194 : vector<128xf32> to vector<1x128xf32>
    %cst_131 = arith.constant 1.250000e-01 : f32
    %196 = vector.broadcast %cst_131 : f32 to vector<1x128xf32>
    %197 = arith.mulf %192, %196 : vector<1x128xf32>
    %cst_132 = arith.constant 1.250000e-01 : f32
    %198 = vector.broadcast %cst_132 : f32 to vector<1x128xf32>
    %199 = arith.mulf %195, %198 : vector<1x128xf32>
    %200 = arith.mulf %197, %197 : vector<1x128xf32>
    %201 = arith.subf %199, %200 : vector<1x128xf32>
    %c0_133 = arith.constant 0 : index
    %c0_134 = arith.constant 0 : index
    %202 = vector.load %arg11[%c0_133, %c0_134] : memref<1x128xf32, #tpu.memory_space<vmem>>, vector<1x128xf32>
    %cst_135 = arith.constant 9.99999974E-6 : f32
    %203 = vector.broadcast %cst_135 : f32 to vector<1x128xf32>
    %204 = arith.addf %201, %203 : vector<1x128xf32>
    %205 = math.rsqrt %204 : vector<1x128xf32>
    %206 = arith.mulf %202, %205 : vector<1x128xf32>
    %c0_136 = arith.constant 0 : index
    %c0_137 = arith.constant 0 : index
    %207 = vector.load %arg12[%c0_136, %c0_137] : memref<1x128xf32, #tpu.memory_space<vmem>>, vector<1x128xf32>
    %208 = arith.mulf %206, %197 : vector<1x128xf32>
    %209 = arith.subf %207, %208 : vector<1x128xf32>
    %210 = vector.broadcast %206 : vector<1x128xf32> to vector<8x128xf32>
    %211 = arith.mulf %190, %210 : vector<8x128xf32>
    %212 = vector.broadcast %209 : vector<1x128xf32> to vector<8x128xf32>
    %213 = arith.addf %211, %212 : vector<8x128xf32>
    %cst_138 = arith.constant 0.000000e+00 : f32
    %214 = vector.broadcast %cst_138 : f32 to vector<8x128xf32>
    %215 = arith.maximumf %213, %214 : vector<8x128xf32>
    %216 = vector.extract_strided_slice %215 {offsets = [0, 0], sizes = [8, 64], strides = [1, 1]} : vector<8x128xf32> to vector<8x64xf32>
    %c0_139 = arith.constant 0 : index
    %c0_140 = arith.constant 0 : index
    %217 = vector.load %arg13[%c0_139, %c0_140] : memref<8x64xf32, #tpu.memory_space<vmem>>, vector<8x64xf32>
    tpu.vector_store %arg13[%c0_139, %c0_140], %216 {strides = array<i32>} : memref<8x64xf32, #tpu.memory_space<vmem>>, vector<8x64xf32>,
    return
  }
}

</mosaic_0001>

<llo_original>
// kernel: encoder_forward.1
$region0: #{encoder_forward.1}
  #allocation0 [shape = 'u32[]', space=smem, size = 0x4, offset = 0x4, fixed_abs, tag = 'smem constant byte address 0x4 - core index']
  #allocation1 [shape = 'u32[72,128]{1,0:T(1,128)}', space=vmem, size = 0x9000, scoped, tag = 'internal scratch']
  %s0 = inlined_call_operand.vmem [shape: f32[512,1], index: 0, kind: input, shape index: {}]
  %s1 = inlined_call_operand.hbm [shape: f32[1152,512], index: 1, kind: input, shape index: {}]
  %s2 = inlined_call_operand.hbm [shape: f32[288,128], index: 2, kind: input, shape index: {}]
  %s3 = inlined_call_operand.vmem [shape: f32[72,32], index: 3, kind: input, shape index: {}]
  %s4 = inlined_call_operand.hbm [shape: f32[9,128,128], index: 4, kind: input, shape index: {}]
  %s5 = inlined_call_operand.hbm [shape: f32[9,128,128], index: 5, kind: input, shape index: {}]
  %s6 = inlined_call_operand.hbm [shape: f32[9,128,128], index: 6, kind: input, shape index: {}]
  %s7 = inlined_call_operand.hbm [shape: f32[1,128], index: 7, kind: input, shape index: {}]
  %s8 = inlined_call_operand.hbm [shape: f32[1,128], index: 8, kind: input, shape index: {}]
  %s9 = inlined_call_operand.hbm [shape: f32[1,128], index: 9, kind: input, shape index: {}]
  %s10 = inlined_call_operand.hbm [shape: f32[1,128], index: 10, kind: input, shape index: {}]
  %s11 = inlined_call_operand.hbm [shape: f32[1,128], index: 11, kind: input, shape index: {}]
  %s12 = inlined_call_operand.hbm [shape: f32[1,128], index: 12, kind: input, shape index: {}]
  %s13 = inlined_call_operand.hbm [shape: f32[8,64], index: 13, kind: output, shape index: {}]
  %s14 = sld [smem:[#allocation0]]
  $region106: #{encoder_forward.1} parent=0
    _
  %s16 = ssub.s32 1, %s14
  %s17 = scalar_select 0, %s16, %s14
  $region1: #{encoder_forward.1} parent=0
    #allocation2 [shape = 'u8[2359296]{0}', space=vmem, size = 0x240000, scoped, tag = 'input window, operand 1, single buffered']
    #allocation3 [shape = 's32[1]{0}', space=sflag, size = 0x4, scoped, tag = 'scoped memory for encoder_forward.1']
    #allocation4 [shape = 's32[1]{0}', space=sflag, size = 0x4, scoped, tag = 'scoped memory for encoder_forward.1']
    #allocation5 [shape = 'u8[147456]{0}', space=vmem, size = 0x24000, scoped, tag = 'input window, operand 2, single buffered']
    #allocation6 [shape = 's32[1]{0}', space=sflag, size = 0x4, scoped, tag = 'scoped memory for encoder_forward.1']
    #allocation7 [shape = 'u8[589824]{0}', space=vmem, size = 0x90000, scoped, tag = 'input window, operand 4, single buffered']
    #allocation8 [shape = 'u8[589824]{0}', space=vmem, size = 0x90000, scoped, tag = 'input window, operand 5, single buffered']
    #allocation9 [shape = 's32[1]{0}', space=sflag, size = 0x4, scoped, tag = 'scoped memory for encoder_forward.1']
    #allocation10 [shape = 'u8[589824]{0}', space=vmem, size = 0x90000, scoped, tag = 'input window, operand 6, single buffered']
    #allocation11 [shape = 'u8[512]{0}', space=vmem, size = 0x400, scoped, tag = 'input window, operand 7, single buffered']
    #allocation12 [shape = 's32[1]{0}', space=sflag, size = 0x4, scoped, tag = 'scoped memory for encoder_forward.1']
    #allocation13 [shape = 'u8[512]{0}', space=vmem, size = 0x400, scoped, tag = 'input window, operand 8, single buffered']
    #allocation14 [shape = 'u8[512]{0}', space=vmem, size = 0x400, scoped, tag = 'input window, operand 9, single buffered']
    #allocation15 [shape = 's32[1]{0}', space=sflag, size = 0x4, scoped, tag = 'scoped memory for encoder_forward.1']
    #allocation16 [shape = 'u8[512]{0}', space=vmem, size = 0x400, scoped, tag = 'input window, operand 10, single buffered']
    #allocation17 [shape = 'u8[512]{0}', space=vmem, size = 0x400, scoped, tag = 'input window, operand 11, single buffered']
    #allocation18 [shape = 's32[1]{0}', space=sflag, size = 0x4, scoped, tag = 'scoped memory for encoder_forward.1']
    #allocation19 [shape = 'u8[512]{0}', space=vmem, size = 0x400, scoped, tag = 'input window, operand 12, single buffered']
    #allocation20 [shape = 'u8[4096]{0}', space=vmem, size = 0x1000, scoped, tag = 'output window, operand 0, single buffered']
    %18 = vsyncpa [#allocation3], 0
    %19 = vsyncpa [#allocation6], 0
    %20 = vsyncpa [#allocation9], 0
    %21 = vsyncpa [#allocation12], 0
    %22 = vsyncpa [#allocation15], 0
    %23 = vsyncpa [#allocation18], 0
    %24 = vsyncpa [#allocation4], 0
    // Predicated region
    $region2: #{encoder_forward.1} parent=1 // pred_check
      _
    $region3: #{encoder_forward.1} parent=1 // pred_check_branch
      %26 = sbr.rel (0) target = $region5
    $region4: #{encoder_forward.1} parent=1 // pred_region
      _
    $region5: #{encoder_forward.1} parent=1 // pred_fallthru
      _
    // Predicated region
    $region6: #{encoder_forward.1} parent=1 // pred_check
      _
    $region7: #{encoder_forward.1} parent=1 // pred_check_branch
      %28 = sbr.rel (0) target = $region9
    $region8: #{encoder_forward.1} parent=1 // pred_region
      %30 = vsyncadd [#allocation3], 0
      %s31 = sshll.u32 %s1, 4
      %s32 = int_to_ptr.hbm [resolvable:$true] %s31
      %s33 = sshll.u32 [#allocation2], 4
      %s34 = int_to_ptr.vmem [resolvable:$true] %s33
      %39 = dma.hbm_to_vmem [thread:$0]  %s32, 73728, %s34, [#allocation3], 512, 512, 32
    $region9: #{encoder_forward.1} parent=1 // pred_fallthru
      _
    // Predicated region
    $region10: #{encoder_forward.1} parent=1 // pred_check
      _
    $region11: #{encoder_forward.1} parent=1 // pred_check_branch
      %41 = sbr.rel (0) target = $region13
    $region12: #{encoder_forward.1} parent=1 // pred_region
      %43 = vsyncadd [#allocation6], 0
      %s44 = sshll.u32 %s2, 4
      %s45 = int_to_ptr.hbm [resolvable:$true] %s44
      %s46 = sshll.u32 [#allocation5], 4
      %s47 = int_to_ptr.vmem [resolvable:$true] %s46
      %52 = dma.hbm_to_vmem [thread:$0]  %s45, 4608, %s47, [#allocation6], 128, 128, 8
    $region13: #{encoder_forward.1} parent=1 // pred_fallthru
      _
    // Predicated region
    $region14: #{encoder_forward.1} parent=1 // pred_check
      _
    $region15: #{encoder_forward.1} parent=1 // pred_check_branch
      %54 = sbr.rel (0) target = $region17
    $region16: #{encoder_forward.1} parent=1 // pred_region
      _
    $region17: #{encoder_forward.1} parent=1 // pred_fallthru
      _
    // Predicated region
    $region18: #{encoder_forward.1} parent=1 // pred_check
      _
    $region19: #{encoder_forward.1} parent=1 // pred_check_branch
      %56 = sbr.rel (0) target = $region21
    $region20: #{encoder_forward.1} parent=1 // pred_region
      %58 = vsyncadd [#allocation6], 0
      %s59 = sshll.u32 %s4, 4
      %s60 = int_to_ptr.hbm [resolvable:$true] %s59
      %s61 = sshll.u32 [#allocation7], 4
      %s62 = int_to_ptr.vmem [resolvable:$true] %s61
      %67 = dma.hbm_to_vmem [thread:$0]  %s60, 18432, %s62, [#allocation6], 128, 128, 8
    $region21: #{encoder_forward.1} parent=1 // pred_fallthru
      _
    // Predicated region
    $region22: #{encoder_forward.1} parent=1 // pred_check
      _
    $region23: #{encoder_forward.1} parent=1 // pred_check_branch
      %69 = sbr.rel (0) target = $region25
    $region24: #{encoder_forward.1} parent=1 // pred_region
      %71 = vsyncadd [#allocation9], 0
      %s72 = sshll.u32 %s5, 4
      %s73 = int_to_ptr.hbm [resolvable:$true] %s72
      %s74 = sshll.u32 [#allocation8], 4
      %s75 = int_to_ptr.vmem [resolvable:$true] %s74
      %80 = dma.hbm_to_vmem [thread:$0]  %s73, 18432, %s75, [#allocation9], 128, 128, 8
    $region25: #{encoder_forward.1} parent=1 // pred_fallthru
      _
    // Predicated region
    $region26: #{encoder_forward.1} parent=1 // pred_check
      _
    $region27: #{encoder_forward.1} parent=1 // pred_check_branch
      %82 = sbr.rel (0) target = $region29
    $region28: #{encoder_forward.1} parent=1 // pred_region
      %84 = vsyncadd [#allocation9], 0
      %s85 = sshll.u32 %s6, 4
      %s86 = int_to_ptr.hbm [resolvable:$true] %s85
      %s87 = sshll.u32 [#allocation10], 4
      %s88 = int_to_ptr.vmem [resolvable:$true] %s87
      %93 = dma.hbm_to_vmem [thread:$0]  %s86, 18432, %s88, [#allocation9], 128, 128, 8
    $region29: #{encoder_forward.1} parent=1 // pred_fallthru
      _
    // Predicated region
    $region30: #{encoder_forward.1} parent=1 // pred_check
      _
    $region31: #{encoder_forward.1} parent=1 // pred_check_branch
      %95 = sbr.rel (0) target = $region33
    $region32: #{encoder_forward.1} parent=1 // pred_region
      %97 = vsyncadd [#allocation12], 0
      %s99 = sshll.u32 %s7, 4
      %s100 = int_to_ptr.hbm [resolvable:$true] %s99
      %s101 = sshll.u32 [#allocation11], 4
      %s102 = int_to_ptr.vmem [resolvable:$true] %s101
      %104 = dma.hbm_to_vmem [thread:$0]  %s100, 16, %s102, [#allocation12]
    $region33: #{encoder_forward.1} parent=1 // pred_fallthru
      _
    // Predicated region
    $region34: #{encoder_forward.1} parent=1 // pred_check
      _
    $region35: #{encoder_forward.1} parent=1 // pred_check_branch
      %106 = sbr.rel (0) target = $region37
    $region36: #{encoder_forward.1} parent=1 // pred_region
      %108 = vsyncadd [#allocation12], 0
      %s110 = sshll.u32 %s8, 4
      %s111 = int_to_ptr.hbm [resolvable:$true] %s110
      %s112 = sshll.u32 [#allocation13], 4
      %s113 = int_to_ptr.vmem [resolvable:$true] %s112
      %115 = dma.hbm_to_vmem [thread:$0]  %s111, 16, %s113, [#allocation12]
    $region37: #{encoder_forward.1} parent=1 // pred_fallthru
      _
    // Predicated region
    $region38: #{encoder_forward.1} parent=1 // pred_check
      _
    $region39: #{encoder_forward.1} parent=1 // pred_check_branch
      %117 = sbr.rel (0) target = $region41
    $region40: #{encoder_forward.1} parent=1 // pred_region
      %119 = vsyncadd [#allocation15], 0
      %s121 = sshll.u32 %s9, 4
      %s122 = int_to_ptr.hbm [resolvable:$true] %s121
      %s123 = sshll.u32 [#allocation14], 4
      %s124 = int_to_ptr.vmem [resolvable:$true] %s123
      %126 = dma.hbm_to_vmem [thread:$0]  %s122, 16, %s124, [#allocation15]
    $region41: #{encoder_forward.1} parent=1 // pred_fallthru
      _
    // Predicated region
    $region42: #{encoder_forward.1} parent=1 // pred_check
      _
    $region43: #{encoder_forward.1} parent=1 // pred_check_branch
      %128 = sbr.rel (0) target = $region45
    $region44: #{encoder_forward.1} parent=1 // pred_region
      %130 = vsyncadd [#allocation15], 0
      %s132 = sshll.u32 %s10, 4
      %s133 = int_to_ptr.hbm [resolvable:$true] %s132
      %s134 = sshll.u32 [#allocation16], 4
      %s135 = int_to_ptr.vmem [resolvable:$true] %s134
      %137 = dma.hbm_to_vmem [thread:$0]  %s133, 16, %s135, [#allocation15]
    $region45: #{encoder_forward.1} parent=1 // pred_fallthru
      _
    // Predicated region
    $region46: #{encoder_forward.1} parent=1 // pred_check
      _
    $region47: #{encoder_forward.1} parent=1 // pred_check_branch
      %139 = sbr.rel (0) target = $region49
    $region48: #{encoder_forward.1} parent=1 // pred_region
      %141 = vsyncadd [#allocation18], 0
      %s143 = sshll.u32 %s11, 4
      %s144 = int_to_ptr.hbm [resolvable:$true] %s143
      %s145 = sshll.u32 [#allocation17], 4
      %s146 = int_to_ptr.vmem [resolvable:$true] %s145
      %148 = dma.hbm_to_vmem [thread:$0]  %s144, 16, %s146, [#allocation18]
    $region49: #{encoder_forward.1} parent=1 // pred_fallthru
      _
    // Predicated region
    $region50: #{encoder_forward.1} parent=1 // pred_check
      _
    $region51: #{encoder_forward.1} parent=1 // pred_check_branch
      %150 = sbr.rel (0) target = $region53
    $region52: #{encoder_forward.1} parent=1 // pred_region
      %152 = vsyncadd [#allocation18], 0
      %s154 = sshll.u32 %s12, 4
      %s155 = int_to_ptr.hbm [resolvable:$true] %s154
      %s156 = sshll.u32 [#allocation19], 4
      %s157 = int_to_ptr.vmem [resolvable:$true] %s156
      %159 = dma.hbm_to_vmem [thread:$0]  %s155, 16, %s157, [#allocation18]
    $region53: #{encoder_forward.1} parent=1 // pred_fallthru
      _
    // Predicated region
    $region54: #{encoder_forward.1} parent=1 // pred_check
      _
    $region55: #{encoder_forward.1} parent=1 // pred_check_branch
      %161 = sbr.rel (0) target = $region57
    $region56: #{encoder_forward.1} parent=1 // pred_region
      %163 = dma.done [#allocation3], 73728
    $region57: #{encoder_forward.1} parent=1 // pred_fallthru
      _
    // Predicated region
    $region58: #{encoder_forward.1} parent=1 // pred_check
      _
    $region59: #{encoder_forward.1} parent=1 // pred_check_branch
      %165 = sbr.rel (0) target = $region61
    $region60: #{encoder_forward.1} parent=1 // pred_region
      %167 = dma.done [#allocation6], 4608
    $region61: #{encoder_forward.1} parent=1 // pred_fallthru
      _
    // Predicated region
    $region62: #{encoder_forward.1} parent=1 // pred_check
      _
    $region63: #{encoder_forward.1} parent=1 // pred_check_branch
      %169 = sbr.rel (0) target = $region65
    $region64: #{encoder_forward.1} parent=1 // pred_region
      %171 = dma.done [#allocation6], 18432
    $region65: #{encoder_forward.1} parent=1 // pred_fallthru
      _
    // Predicated region
    $region66: #{encoder_forward.1} parent=1 // pred_check
      _
    $region67: #{encoder_forward.1} parent=1 // pred_check_branch
      %173 = sbr.rel (0) target = $region69
    $region68: #{encoder_forward.1} parent=1 // pred_region
      %175 = dma.done [#allocation9], 18432
    $region69: #{encoder_forward.1} parent=1 // pred_fallthru
      _
    // Predicated region
    $region70: #{encoder_forward.1} parent=1 // pred_check
      _
    $region71: #{encoder_forward.1} parent=1 // pred_check_branch
      %177 = sbr.rel (0) target = $region73
    $region72: #{encoder_forward.1} parent=1 // pred_region
      %179 = dma.done [#allocation9], 18432
    $region73: #{encoder_forward.1} parent=1 // pred_fallthru
      _
    // Predicated region
    $region74: #{encoder_forward.1} parent=1 // pred_check
      _
    $region75: #{encoder_forward.1} parent=1 // pred_check_branch
      %181 = sbr.rel (0) target = $region77
    $region76: #{encoder_forward.1} parent=1 // pred_region
      %183 = dma.done [#allocation12], 16
    $region77: #{encoder_forward.1} parent=1 // pred_fallthru
      _
    // Predicated region
    $region78: #{encoder_forward.1} parent=1 // pred_check
      _
    $region79: #{encoder_forward.1} parent=1 // pred_check_branch
      %185 = sbr.rel (0) target = $region81
    $region80: #{encoder_forward.1} parent=1 // pred_region
      %187 = dma.done [#allocation12], 16
    $region81: #{encoder_forward.1} parent=1 // pred_fallthru
      _
    // Predicated region
    $region82: #{encoder_forward.1} parent=1 // pred_check
      _
    $region83: #{encoder_forward.1} parent=1 // pred_check_branch
      %189 = sbr.rel (0) target = $region85
    $region84: #{encoder_forward.1} parent=1 // pred_region
      %191 = dma.done [#allocation15], 16
    $region85: #{encoder_forward.1} parent=1 // pred_fallthru
      _
    // Predicated region
    $region86: #{encoder_forward.1} parent=1 // pred_check
      _
    $region87: #{encoder_forward.1} parent=1 // pred_check_branch
      %193 = sbr.rel (0) target = $region89
    $region88: #{encoder_forward.1} parent=1 // pred_region
      %195 = dma.done [#allocation15], 16
    $region89: #{encoder_forward.1} parent=1 // pred_fallthru
      _
    // Predicated region
    $region90: #{encoder_forward.1} parent=1 // pred_check
      _
    $region91: #{encoder_forward.1} parent=1 // pred_check_branch
      %197 = sbr.rel (0) target = $region93
    $region92: #{encoder_forward.1} parent=1 // pred_region
      %199 = dma.done [#allocation18], 16
    $region93: #{encoder_forward.1} parent=1 // pred_fallthru
      _
    // Predicated region
    $region94: #{encoder_forward.1} parent=1 // pred_check
      _
    $region95: #{encoder_forward.1} parent=1 // pred_check_branch
      %201 = sbr.rel (0) target = $region97
    $region96: #{encoder_forward.1} parent=1 // pred_region
      %203 = dma.done [#allocation18], 16
    $region97: #{encoder_forward.1} parent=1 // pred_fallthru
      _
    %v204 = vld [vmem:[%s0] sm:$0xff]
    %v205 = vld [vmem:[%s0 + $0x8] sm:$0xff]
    %v206 = vld [vmem:[%s0 + $0x10] sm:$0xff]
    %v207 = vld [vmem:[%s0 + $0x18] sm:$0xff]
    %v208 = vld [vmem:[%s0 + $0x20] sm:$0xff]
    %v209 = vld [vmem:[%s0 + $0x28] sm:$0xff]
    %v210 = vld [vmem:[%s0 + $0x30] sm:$0xff]
    %v211 = vld [vmem:[%s0 + $0x38] sm:$0xff]
    %v212 = vld [vmem:[%s0 + $0x40] sm:$0xff]
    %v213 = vld [vmem:[%s0 + $0x48] sm:$0xff]
    %v214 = vld [vmem:[%s0 + $0x50] sm:$0xff]
    %v215 = vld [vmem:[%s0 + $0x58] sm:$0xff]
    %v216 = vld [vmem:[%s0 + $0x60] sm:$0xff]
    %v217 = vld [vmem:[%s0 + $0x68] sm:$0xff]
    %v218 = vld [vmem:[%s0 + $0x70] sm:$0xff]
    %v219 = vld [vmem:[%s0 + $0x78] sm:$0xff]
    %v220 = vld [vmem:[%s0 + $0x80] sm:$0xff]
    %v221 = vld [vmem:[%s0 + $0x88] sm:$0xff]
    %v222 = vld [vmem:[%s0 + $0x90] sm:$0xff]
    %v223 = vld [vmem:[%s0 + $0x98] sm:$0xff]
    %v224 = vld [vmem:[%s0 + $0xa0] sm:$0xff]
    %v225 = vld [vmem:[%s0 + $0xa8] sm:$0xff]
    %v226 = vld [vmem:[%s0 + $0xb0] sm:$0xff]
    %v227 = vld [vmem:[%s0 + $0xb8] sm:$0xff]
    %v228 = vld [vmem:[%s0 + $0xc0] sm:$0xff]
    %v229 = vld [vmem:[%s0 + $0xc8] sm:$0xff]
    %v230 = vld [vmem:[%s0 + $0xd0] sm:$0xff]
    %v231 = vld [vmem:[%s0 + $0xd8] sm:$0xff]
    %v232 = vld [vmem:[%s0 + $0xe0] sm:$0xff]
    %v233 = vld [vmem:[%s0 + $0xe8] sm:$0xff]
    %v234 = vld [vmem:[%s0 + $0xf0] sm:$0xff]
    %v235 = vld [vmem:[%s0 + $0xf8] sm:$0xff]
    %v236 = vld [vmem:[%s0 + $0x100] sm:$0xff]
    %v237 = vld [vmem:[%s0 + $0x108] sm:$0xff]
    %v238 = vld [vmem:[%s0 + $0x110] sm:$0xff]
    %v239 = vld [vmem:[%s0 + $0x118] sm:$0xff]
    %v240 = vld [vmem:[%s0 + $0x120] sm:$0xff]
    %v241 = vld [vmem:[%s0 + $0x128] sm:$0xff]
    %v242 = vld [vmem:[%s0 + $0x130] sm:$0xff]
    %v243 = vld [vmem:[%s0 + $0x138] sm:$0xff]
    %v244 = vld [vmem:[%s0 + $0x140] sm:$0xff]
    %v245 = vld [vmem:[%s0 + $0x148] sm:$0xff]
    %v246 = vld [vmem:[%s0 + $0x150] sm:$0xff]
    %v247 = vld [vmem:[%s0 + $0x158] sm:$0xff]
    %v248 = vld [vmem:[%s0 + $0x160] sm:$0xff]
    %v249 = vld [vmem:[%s0 + $0x168] sm:$0xff]
    %v250 = vld [vmem:[%s0 + $0x170] sm:$0xff]
    %v251 = vld [vmem:[%s0 + $0x178] sm:$0xff]
    %v252 = vld [vmem:[%s0 + $0x180] sm:$0xff]
    %v253 = vld [vmem:[%s0 + $0x188] sm:$0xff]
    %v254 = vld [vmem:[%s0 + $0x190] sm:$0xff]
    %v255 = vld [vmem:[%s0 + $0x198] sm:$0xff]
    %v256 = vld [vmem:[%s0 + $0x1a0] sm:$0xff]
    %v257 = vld [vmem:[%s0 + $0x1a8] sm:$0xff]
    %v258 = vld [vmem:[%s0 + $0x1b0] sm:$0xff]
    %v259 = vld [vmem:[%s0 + $0x1b8] sm:$0xff]
    %v260 = vld [vmem:[%s0 + $0x1c0] sm:$0xff]
    %v261 = vld [vmem:[%s0 + $0x1c8] sm:$0xff]
    %v262 = vld [vmem:[%s0 + $0x1d0] sm:$0xff]
    %v263 = vld [vmem:[%s0 + $0x1d8] sm:$0xff]
    %v264 = vld [vmem:[%s0 + $0x1e0] sm:$0xff]
    %v265 = vld [vmem:[%s0 + $0x1e8] sm:$0xff]
    %v266 = vld [vmem:[%s0 + $0x1f0] sm:$0xff]
    %v267 = vld [vmem:[%s0 + $0x1f8] sm:$0xff]
    %269 = vset.pattern.permute.xlu0 0
    %270 = vperm.xlu0 %269, %v204
    %v271 = vpop.permute.xlu0 %270
    %274 = vset.pattern.permute.xlu0 0
    %275 = vperm.xlu0 %274, %v205
    %v276 = vpop.permute.xlu0 %275
    %279 = vset.pattern.permute.xlu0 0
    %280 = vperm.xlu0 %279, %v206
    %v281 = vpop.permute.xlu0 %280
    %284 = vset.pattern.permute.xlu0 0
    %285 = vperm.xlu0 %284, %v207
    %v286 = vpop.permute.xlu0 %285
    %289 = vset.pattern.permute.xlu0 0
    %290 = vperm.xlu0 %289, %v208
    %v291 = vpop.permute.xlu0 %290
    %294 = vset.pattern.permute.xlu0 0
    %295 = vperm.xlu0 %294, %v209
    %v296 = vpop.permute.xlu0 %295
    %299 = vset.pattern.permute.xlu0 0
    %300 = vperm.xlu0 %299, %v210
    %v301 = vpop.permute.xlu0 %300
    %304 = vset.pattern.permute.xlu0 0
    %305 = vperm.xlu0 %304, %v211
    %v306 = vpop.permute.xlu0 %305
    %309 = vset.pattern.permute.xlu0 0
    %310 = vperm.xlu0 %309, %v212
    %v311 = vpop.permute.xlu0 %310
    %314 = vset.pattern.permute.xlu0 0
    %315 = vperm.xlu0 %314, %v213
    %v316 = vpop.permute.xlu0 %315
    %319 = vset.pattern.permute.xlu0 0
    %320 = vperm.xlu0 %319, %v214
    %v321 = vpop.permute.xlu0 %320
    %324 = vset.pattern.permute.xlu0 0
    %325 = vperm.xlu0 %324, %v215
    %v326 = vpop.permute.xlu0 %325
    %329 = vset.pattern.permute.xlu0 0
    %330 = vperm.xlu0 %329, %v216
    %v331 = vpop.permute.xlu0 %330
    %334 = vset.pattern.permute.xlu0 0
    %335 = vperm.xlu0 %334, %v217
    %v336 = vpop.permute.xlu0 %335
    %339 = vset.pattern.permute.xlu0 0
    %340 = vperm.xlu0 %339, %v218
    %v341 = vpop.permute.xlu0 %340
    %344 = vset.pattern.permute.xlu0 0
    %345 = vperm.xlu0 %344, %v219
    %v346 = vpop.permute.xlu0 %345
    %349 = vset.pattern.permute.xlu0 0
    %350 = vperm.xlu0 %349, %v220
    %v351 = vpop.permute.xlu0 %350
    %354 = vset.pattern.permute.xlu0 0
    %355 = vperm.xlu0 %354, %v221
    %v356 = vpop.permute.xlu0 %355
    %359 = vset.pattern.permute.xlu0 0
    %360 = vperm.xlu0 %359, %v222
    %v361 = vpop.permute.xlu0 %360
    %364 = vset.pattern.permute.xlu0 0
    %365 = vperm.xlu0 %364, %v223
    %v366 = vpop.permute.xlu0 %365
    %369 = vset.pattern.permute.xlu0 0
    %370 = vperm.xlu0 %369, %v224
    %v371 = vpop.permute.xlu0 %370
    %374 = vset.pattern.permute.xlu0 0
    %375 = vperm.xlu0 %374, %v225
    %v376 = vpop.permute.xlu0 %375
    %379 = vset.pattern.permute.xlu0 0
    %380 = vperm.xlu0 %379, %v226
    %v381 = vpop.permute.xlu0 %380
    %384 = vset.pattern.permute.xlu0 0
    %385 = vperm.xlu0 %384, %v227
    %v386 = vpop.permute.xlu0 %385
    %389 = vset.pattern.permute.xlu0 0
    %390 = vperm.xlu0 %389, %v228
    %v391 = vpop.permute.xlu0 %390
    %394 = vset.pattern.permute.xlu0 0
    %395 = vperm.xlu0 %394, %v229
    %v396 = vpop.permute.xlu0 %395
    %399 = vset.pattern.permute.xlu0 0
    %400 = vperm.xlu0 %399, %v230
    %v401 = vpop.permute.xlu0 %400
    %404 = vset.pattern.permute.xlu0 0
    %405 = vperm.xlu0 %404, %v231
    %v406 = vpop.permute.xlu0 %405
    %409 = vset.pattern.permute.xlu0 0
    %410 = vperm.xlu0 %409, %v232
    %v411 = vpop.permute.xlu0 %410
    %414 = vset.pattern.permute.xlu0 0
    %415 = vperm.xlu0 %414, %v233
    %v416 = vpop.permute.xlu0 %415
    %419 = vset.pattern.permute.xlu0 0
    %420 = vperm.xlu0 %419, %v234
    %v421 = vpop.permute.xlu0 %420
    %424 = vset.pattern.permute.xlu0 0
    %425 = vperm.xlu0 %424, %v235
    %v426 = vpop.permute.xlu0 %425
    %429 = vset.pattern.permute.xlu0 0
    %430 = vperm.xlu0 %429, %v236
    %v431 = vpop.permute.xlu0 %430
    %434 = vset.pattern.permute.xlu0 0
    %435 = vperm.xlu0 %434, %v237
    %v436 = vpop.permute.xlu0 %435
    %439 = vset.pattern.permute.xlu0 0
    %440 = vperm.xlu0 %439, %v238
    %v441 = vpop.permute.xlu0 %440
    %444 = vset.pattern.permute.xlu0 0
    %445 = vperm.xlu0 %444, %v239
    %v446 = vpop.permute.xlu0 %445
    %449 = vset.pattern.permute.xlu0 0
    %450 = vperm.xlu0 %449, %v240
    %v451 = vpop.permute.xlu0 %450
    %454 = vset.pattern.permute.xlu0 0
    %455 = vperm.xlu0 %454, %v241
    %v456 = vpop.permute.xlu0 %455
    %459 = vset.pattern.permute.xlu0 0
    %460 = vperm.xlu0 %459, %v242
    %v461 = vpop.permute.xlu0 %460
    %464 = vset.pattern.permute.xlu0 0
    %465 = vperm.xlu0 %464, %v243
    %v466 = vpop.permute.xlu0 %465
    %469 = vset.pattern.permute.xlu0 0
    %470 = vperm.xlu0 %469, %v244
    %v471 = vpop.permute.xlu0 %470
    %474 = vset.pattern.permute.xlu0 0
    %475 = vperm.xlu0 %474, %v245
    %v476 = vpop.permute.xlu0 %475
    %479 = vset.pattern.permute.xlu0 0
    %480 = vperm.xlu0 %479, %v246
    %v481 = vpop.permute.xlu0 %480
    %484 = vset.pattern.permute.xlu0 0
    %485 = vperm.xlu0 %484, %v247
    %v486 = vpop.permute.xlu0 %485
    %489 = vset.pattern.permute.xlu0 0
    %490 = vperm.xlu0 %489, %v248
    %v491 = vpop.permute.xlu0 %490
    %494 = vset.pattern.permute.xlu0 0
    %495 = vperm.xlu0 %494, %v249
    %v496 = vpop.permute.xlu0 %495
    %499 = vset.pattern.permute.xlu0 0
    %500 = vperm.xlu0 %499, %v250
    %v501 = vpop.permute.xlu0 %500
    %504 = vset.pattern.permute.xlu0 0
    %505 = vperm.xlu0 %504, %v251
    %v506 = vpop.permute.xlu0 %505
    %509 = vset.pattern.permute.xlu0 0
    %510 = vperm.xlu0 %509, %v252
    %v511 = vpop.permute.xlu0 %510
    %514 = vset.pattern.permute.xlu0 0
    %515 = vperm.xlu0 %514, %v253
    %v516 = vpop.permute.xlu0 %515
    %519 = vset.pattern.permute.xlu0 0
    %520 = vperm.xlu0 %519, %v254
    %v521 = vpop.permute.xlu0 %520
    %524 = vset.pattern.permute.xlu0 0
    %525 = vperm.xlu0 %524, %v255
    %v526 = vpop.permute.xlu0 %525
    %529 = vset.pattern.permute.xlu0 0
    %530 = vperm.xlu0 %529, %v256
    %v531 = vpop.permute.xlu0 %530
    %534 = vset.pattern.permute.xlu0 0
    %535 = vperm.xlu0 %534, %v257
    %v536 = vpop.permute.xlu0 %535
    %539 = vset.pattern.permute.xlu0 0
    %540 = vperm.xlu0 %539, %v258
    %v541 = vpop.permute.xlu0 %540
    %544 = vset.pattern.permute.xlu0 0
    %545 = vperm.xlu0 %544, %v259
    %v546 = vpop.permute.xlu0 %545
    %549 = vset.pattern.permute.xlu0 0
    %550 = vperm.xlu0 %549, %v260
    %v551 = vpop.permute.xlu0 %550
    %554 = vset.pattern.permute.xlu0 0
    %555 = vperm.xlu0 %554, %v261
    %v556 = vpop.permute.xlu0 %555
    %559 = vset.pattern.permute.xlu0 0
    %560 = vperm.xlu0 %559, %v262
    %v561 = vpop.permute.xlu0 %560
    %564 = vset.pattern.permute.xlu0 0
    %565 = vperm.xlu0 %564, %v263
    %v566 = vpop.permute.xlu0 %565
    %569 = vset.pattern.permute.xlu0 0
    %570 = vperm.xlu0 %569, %v264
    %v571 = vpop.permute.xlu0 %570
    %574 = vset.pattern.permute.xlu0 0
    %575 = vperm.xlu0 %574, %v265
    %v576 = vpop.permute.xlu0 %575
    %579 = vset.pattern.permute.xlu0 0
    %580 = vperm.xlu0 %579, %v266
    %v581 = vpop.permute.xlu0 %580
    %584 = vset.pattern.permute.xlu0 0
    %585 = vperm.xlu0 %584, %v267
    %v586 = vpop.permute.xlu0 %585
    %v588 = vld [vmem:[#allocation2] sm:$0xff]
    %v589 = vld [vmem:[#allocation2 + $0x8] sm:$0xff]
    %v590 = vld [vmem:[#allocation2 + $0x10] sm:$0xff]
    %v591 = vld [vmem:[#allocation2 + $0x18] sm:$0xff]
    %v592 = vld [vmem:[#allocation2 + $0x20] sm:$0xff]
    %v593 = vld [vmem:[#allocation2 + $0x28] sm:$0xff]
    %v594 = vld [vmem:[#allocation2 + $0x30] sm:$0xff]
    %v595 = vld [vmem:[#allocation2 + $0x38] sm:$0xff]
    %v596 = vld [vmem:[#allocation2 + $0x40] sm:$0xff]
    %v597 = vld [vmem:[#allocation2 + $0x48] sm:$0xff]
    %v598 = vld [vmem:[#allocation2 + $0x50] sm:$0xff]
    %v599 = vld [vmem:[#allocation2 + $0x58] sm:$0xff]
    %v600 = vld [vmem:[#allocation2 + $0x60] sm:$0xff]
    %v601 = vld [vmem:[#allocation2 + $0x68] sm:$0xff]
    %v602 = vld [vmem:[#allocation2 + $0x70] sm:$0xff]
    %v603 = vld [vmem:[#allocation2 + $0x78] sm:$0xff]
    %v604 = vld [vmem:[#allocation2 + $0x80] sm:$0xff]
    %v605 = vld [vmem:[#allocation2 + $0x88] sm:$0xff]
    %v606 = vld [vmem:[#allocation2 + $0x90] sm:$0xff]
    %v607 = vld [vmem:[#allocation2 + $0x98] sm:$0xff]
    %v608 = vld [vmem:[#allocation2 + $0xa0] sm:$0xff]
    %v609 = vld [vmem:[#allocation2 + $0xa8] sm:$0xff]
    %v610 = vld [vmem:[#allocation2 + $0xb0] sm:$0xff]
    %v611 = vld [vmem:[#allocation2 + $0xb8] sm:$0xff]
    %v612 = vld [vmem:[#allocation2 + $0xc0] sm:$0xff]
    %v613 = vld [vmem:[#allocation2 + $0xc8] sm:$0xff]
    %v614 = vld [vmem:[#allocation2 + $0xd0] sm:$0xff]
    %v615 = vld [vmem:[#allocation2 + $0xd8] sm:$0xff]
    %v616 = vld [vmem:[#allocation2 + $0xe0] sm:$0xff]
    %v617 = vld [vmem:[#allocation2 + $0xe8] sm:$0xff]
    %v618 = vld [vmem:[#allocation2 + $0xf0] sm:$0xff]
    %v619 = vld [vmem:[#allocation2 + $0xf8] sm:$0xff]
    %v620 = vld [vmem:[#allocation2 + $0x100] sm:$0xff]
    %v621 = vld [vmem:[#allocation2 + $0x108] sm:$0xff]
    %v622 = vld [vmem:[#allocation2 + $0x110] sm:$0xff]
    %v623 = vld [vmem:[#allocation2 + $0x118] sm:$0xff]
    %v624 = vld [vmem:[#allocation2 + $0x120] sm:$0xff]
    %v625 = vld [vmem:[#allocation2 + $0x128] sm:$0xff]
    %v626 = vld [vmem:[#allocation2 + $0x130] sm:$0xff]
    %v627 = vld [vmem:[#allocation2 + $0x138] sm:$0xff]
    %v628 = vld [vmem:[#allocation2 + $0x140] sm:$0xff]
    %v629 = vld [vmem:[#allocation2 + $0x148] sm:$0xff]
    %v630 = vld [vmem:[#allocation2 + $0x150] sm:$0xff]
    %v631 = vld [vmem:[#allocation2 + $0x158] sm:$0xff]
    %v632 = vld [vmem:[#allocation2 + $0x160] sm:$0xff]
    %v633 = vld [vmem:[#allocation2 + $0x168] sm:$0xff]
    %v634 = vld [vmem:[#allocation2 + $0x170] sm:$0xff]
    %v635 = vld [vmem:[#allocation2 + $0x178] sm:$0xff]
    %v636 = vld [vmem:[#allocation2 + $0x180] sm:$0xff]
    %v637 = vld [vmem:[#allocation2 + $0x188] sm:$0xff]
    %v638 = vld [vmem:[#allocation2 + $0x190] sm:$0xff]
    %v639 = vld [vmem:[#allocation2 + $0x198] sm:$0xff]
    %v640 = vld [vmem:[#allocation2 + $0x1a0] sm:$0xff]
    %v641 = vld [vmem:[#allocation2 + $0x1a8] sm:$0xff]
    %v642 = vld [vmem:[#allocation2 + $0x1b0] sm:$0xff]
    %v643 = vld [vmem:[#allocation2 + $0x1b8] sm:$0xff]
    %v644 = vld [vmem:[#allocation2 + $0x1c0] sm:$0xff]
    %v645 = vld [vmem:[#allocation2 + $0x1c8] sm:$0xff]
    %v646 = vld [vmem:[#allocation2 + $0x1d0] sm:$0xff]
    %v647 = vld [vmem:[#allocation2 + $0x1d8] sm:$0xff]
    %v648 = vld [vmem:[#allocation2 + $0x1e0] sm:$0xff]
    %v649 = vld [vmem:[#allocation2 + $0x1e8] sm:$0xff]
    %v650 = vld [vmem:[#allocation2 + $0x1f0] sm:$0xff]
    %v651 = vld [vmem:[#allocation2 + $0x1f8] sm:$0xff]
    %v652 = vld [vmem:[#allocation2 + $0x200] sm:$0xff]
    %v653 = vld [vmem:[#allocation2 + $0x208] sm:$0xff]
    %v654 = vld [vmem:[#allocation2 + $0x210] sm:$0xff]
    %v655 = vld [vmem:[#allocation2 + $0x218] sm:$0xff]
    %v656 = vld [vmem:[#allocation2 + $0x220] sm:$0xff]
    %v657 = vld [vmem:[#allocation2 + $0x228] sm:$0xff]
    %v658 = vld [vmem:[#allocation2 + $0x230] sm:$0xff]
    %v659 = vld [vmem:[#allocation2 + $0x238] sm:$0xff]
    %v660 = vld [vmem:[#allocation2 + $0x240] sm:$0xff]
    %v661 = vld [vmem:[#allocation2 + $0x248] sm:$0xff]
    %v662 = vld [vmem:[#allocation2 + $0x250] sm:$0xff]
    %v663 = vld [vmem:[#allocation2 + $0x258] sm:$0xff]
    %v664 = vld [vmem:[#allocation2 + $0x260] sm:$0xff]
    %v665 = vld [vmem:[#allocation2 + $0x268] sm:$0xff]
    %v666 = vld [vmem:[#allocation2 + $0x270] sm:$0xff]
    %v667 = vld [vmem:[#allocation2 + $0x278] sm:$0xff]
    %v668 = vld [vmem:[#allocation2 + $0x280] sm:$0xff]
    %v669 = vld [vmem:[#allocation2 + $0x288] sm:$0xff]
    %v670 = vld [vmem:[#allocation2 + $0x290] sm:$0xff]
    %v671 = vld [vmem:[#allocation2 + $0x298] sm:$0xff]
    %v672 = vld [vmem:[#allocation2 + $0x2a0] sm:$0xff]
    %v673 = vld [vmem:[#allocation2 + $0x2a8] sm:$0xff]
    %v674 = vld [vmem:[#allocation2 + $0x2b0] sm:$0xff]
    %v675 = vld [vmem:[#allocation2 + $0x2b8] sm:$0xff]
    %v676 = vld [vmem:[#allocation2 + $0x2c0] sm:$0xff]
    %v677 = vld [vmem:[#allocation2 + $0x2c8] sm:$0xff]
    %v678 = vld [vmem:[#allocation2 + $0x2d0] sm:$0xff]
    %v679 = vld [vmem:[#allocation2 + $0x2d8] sm:$0xff]
    %v680 = vld [vmem:[#allocation2 + $0x2e0] sm:$0xff]
    %v681 = vld [vmem:[#allocation2 + $0x2e8] sm:$0xff]
    %v682 = vld [vmem:[#allocation2 + $0x2f0] sm:$0xff]
    %v683 = vld [vmem:[#allocation2 + $0x2f8] sm:$0xff]
    %v684 = vld [vmem:[#allocation2 + $0x300] sm:$0xff]
    %v685 = vld [vmem:[#allocation2 + $0x308] sm:$0xff]
    %v686 = vld [vmem:[#allocation2 + $0x310] sm:$0xff]
    %v687 = vld [vmem:[#allocation2 + $0x318] sm:$0xff]
    %v688 = vld [vmem:[#allocation2 + $0x320] sm:$0xff]
    %v689 = vld [vmem:[#allocation2 + $0x328] sm:$0xff]
    %v690 = vld [vmem:[#allocation2 + $0x330] sm:$0xff]
    %v691 = vld [vmem:[#allocation2 + $0x338] sm:$0xff]
    %v692 = vld [vmem:[#allocation2 + $0x340] sm:$0xff]
    %v693 = vld [vmem:[#allocation2 + $0x348] sm:$0xff]
    %v694 = vld [vmem:[#allocation2 + $0x350] sm:$0xff]
    %v695 = vld [vmem:[#allocation2 + $0x358] sm:$0xff]
    %v696 = vld [vmem:[#allocation2 + $0x360] sm:$0xff]
    %v697 = vld [vmem:[#allocation2 + $0x368] sm:$0xff]
    %v698 = vld [vmem:[#allocation2 + $0x370] sm:$0xff]
    %v699 = vld [vmem:[#allocation2 + $0x378] sm:$0xff]
    %v700 = vld [vmem:[#allocation2 + $0x380] sm:$0xff]
    %v701 = vld [vmem:[#allocation2 + $0x388] sm:$0xff]
    %v702 = vld [vmem:[#allocation2 + $0x390] sm:$0xff]
    %v703 = vld [vmem:[#allocation2 + $0x398] sm:$0xff]
    %v704 = vld [vmem:[#allocation2 + $0x3a0] sm:$0xff]
    %v705 = vld [vmem:[#allocation2 + $0x3a8] sm:$0xff]
    %v706 = vld [vmem:[#allocation2 + $0x3b0] sm:$0xff]
    %v707 = vld [vmem:[#allocation2 + $0x3b8] sm:$0xff]
    %v708 = vld [vmem:[#allocation2 + $0x3c0] sm:$0xff]
    %v709 = vld [vmem:[#allocation2 + $0x3c8] sm:$0xff]
    %v710 = vld [vmem:[#allocation2 + $0x3d0] sm:$0xff]
    %v711 = vld [vmem:[#allocation2 + $0x3d8] sm:$0xff]
    %v712 = vld [vmem:[#allocation2 + $0x3e0] sm:$0xff]
    %v713 = vld [vmem:[#allocation2 + $0x3e8] sm:$0xff]
    %v714 = vld [vmem:[#allocation2 + $0x3f0] sm:$0xff]
    %v715 = vld [vmem:[#allocation2 + $0x3f8] sm:$0xff]
    %v716 = vld [vmem:[#allocation2 + $0x400] sm:$0xff]
    %v717 = vld [vmem:[#allocation2 + $0x408] sm:$0xff]
    %v718 = vld [vmem:[#allocation2 + $0x410] sm:$0xff]
    %v719 = vld [vmem:[#allocation2 + $0x418] sm:$0xff]
    %v720 = vld [vmem:[#allocation2 + $0x420] sm:$0xff]
    %v721 = vld [vmem:[#allocation2 + $0x428] sm:$0xff]
    %v722 = vld [vmem:[#allocation2 + $0x430] sm:$0xff]
    %v723 = vld [vmem:[#allocation2 + $0x438] sm:$0xff]
    %v724 = vld [vmem:[#allocation2 + $0x440] sm:$0xff]
    %v725 = vld [vmem:[#allocation2 + $0x448] sm:$0xff]
    %v726 = vld [vmem:[#allocation2 + $0x450] sm:$0xff]
    %v727 = vld [vmem:[#allocation2 + $0x458] sm:$0xff]
    %v728 = vld [vmem:[#allocation2 + $0x460] sm:$0xff]
    %v729 = vld [vmem:[#allocation2 + $0x468] sm:$0xff]
    %v730 = vld [vmem:[#allocation2 + $0x470] sm:$0xff]
    %v731 = vld [vmem:[#allocation2 + $0x478] sm:$0xff]
    %v732 = vld [vmem:[#allocation2 + $0x480] sm:$0xff]
    %v733 = vld [vmem:[#allocation2 + $0x488] sm:$0xff]
    %v734 = vld [vmem:[#allocation2 + $0x490] sm:$0xff]
    %v735 = vld [vmem:[#allocation2 + $0x498] sm:$0xff]
    %v736 = vld [vmem:[#allocation2 + $0x4a0] sm:$0xff]
    %v737 = vld [vmem:[#allocation2 + $0x4a8] sm:$0xff]
    %v738 = vld [vmem:[#allocation2 + $0x4b0] sm:$0xff]
    %v739 = vld [vmem:[#allocation2 + $0x4b8] sm:$0xff]
    %v740 = vld [vmem:[#allocation2 + $0x4c0] sm:$0xff]
    %v741 = vld [vmem:[#allocation2 + $0x4c8] sm:$0xff]
    %v742 = vld [vmem:[#allocation2 + $0x4d0] sm:$0xff]
    %v743 = vld [vmem:[#allocation2 + $0x4d8] sm:$0xff]
    %v744 = vld [vmem:[#allocation2 + $0x4e0] sm:$0xff]
    %v745 = vld [vmem:[#allocation2 + $0x4e8] sm:$0xff]
    %v746 = vld [vmem:[#allocation2 + $0x4f0] sm:$0xff]
    %v747 = vld [vmem:[#allocation2 + $0x4f8] sm:$0xff]
    %v748 = vld [vmem:[#allocation2 + $0x500] sm:$0xff]
    %v749 = vld [vmem:[#allocation2 + $0x508] sm:$0xff]
    %v750 = vld [vmem:[#allocation2 + $0x510] sm:$0xff]
    %v751 = vld [vmem:[#allocation2 + $0x518] sm:$0xff]
    %v752 = vld [vmem:[#allocation2 + $0x520] sm:$0xff]
    %v753 = vld [vmem:[#allocation2 + $0x528] sm:$0xff]
    %v754 = vld [vmem:[#allocation2 + $0x530] sm:$0xff]
    %v755 = vld [vmem:[#allocation2 + $0x538] sm:$0xff]
    %v756 = vld [vmem:[#allocation2 + $0x540] sm:$0xff]
    %v757 = vld [vmem:[#allocation2 + $0x548] sm:$0xff]
    %v758 = vld [vmem:[#allocation2 + $0x550] sm:$0xff]
    %v759 = vld [vmem:[#allocation2 + $0x558] sm:$0xff]
    %v760 = vld [vmem:[#allocation2 + $0x560] sm:$0xff]
    %v761 = vld [vmem:[#allocation2 + $0x568] sm:$0xff]
    %v762 = vld [vmem:[#allocation2 + $0x570] sm:$0xff]
    %v763 = vld [vmem:[#allocation2 + $0x578] sm:$0xff]
    %v764 = vld [vmem:[#allocation2 + $0x580] sm:$0xff]
    %v765 = vld [vmem:[#allocation2 + $0x588] sm:$0xff]
    %v766 = vld [vmem:[#allocation2 + $0x590] sm:$0xff]
    %v767 = vld [vmem:[#allocation2 + $0x598] sm:$0xff]
    %v768 = vld [vmem:[#allocation2 + $0x5a0] sm:$0xff]
    %v769 = vld [vmem:[#allocation2 + $0x5a8] sm:$0xff]
    %v770 = vld [vmem:[#allocation2 + $0x5b0] sm:$0xff]
    %v771 = vld [vmem:[#allocation2 + $0x5b8] sm:$0xff]
    %v772 = vld [vmem:[#allocation2 + $0x5c0] sm:$0xff]
    %v773 = vld [vmem:[#allocation2 + $0x5c8] sm:$0xff]
    %v774 = vld [vmem:[#allocation2 + $0x5d0] sm:$0xff]
    %v775 = vld [vmem:[#allocation2 + $0x5d8] sm:$0xff]
    %v776 = vld [vmem:[#allocation2 + $0x5e0] sm:$0xff]
    %v777 = vld [vmem:[#allocation2 + $0x5e8] sm:$0xff]
    %v778 = vld [vmem:[#allocation2 + $0x5f0] sm:$0xff]
    %v779 = vld [vmem:[#allocation2 + $0x5f8] sm:$0xff]
    %v780 = vld [vmem:[#allocation2 + $0x600] sm:$0xff]
    %v781 = vld [vmem:[#allocation2 + $0x608] sm:$0xff]
    %v782 = vld [vmem:[#allocation2 + $0x610] sm:$0xff]
    %v783 = vld [vmem:[#allocation2 + $0x618] sm:$0xff]
    %v784 = vld [vmem:[#allocation2 + $0x620] sm:$0xff]
    %v785 = vld [vmem:[#allocation2 + $0x628] sm:$0xff]
    %v786 = vld [vmem:[#allocation2 + $0x630] sm:$0xff]
    %v787 = vld [vmem:[#allocation2 + $0x638] sm:$0xff]
    %v788 = vld [vmem:[#allocation2 + $0x640] sm:$0xff]
    %v789 = vld [vmem:[#allocation2 + $0x648] sm:$0xff]
    %v790 = vld [vmem:[#allocation2 + $0x650] sm:$0xff]
    %v791 = vld [vmem:[#allocation2 + $0x658] sm:$0xff]
    %v792 = vld [vmem:[#allocation2 + $0x660] sm:$0xff]
    %v793 = vld [vmem:[#allocation2 + $0x668] sm:$0xff]
    %v794 = vld [vmem:[#allocation2 + $0x670] sm:$0xff]
    %v795 = vld [vmem:[#allocation2 + $0x678] sm:$0xff]
    %v796 = vld [vmem:[#allocation2 + $0x680] sm:$0xff]
    %v797 = vld [vmem:[#allocation2 + $0x688] sm:$0xff]
    %v798 = vld [vmem:[#allocation2 + $0x690] sm:$0xff]
    %v799 = vld [vmem:[#allocation2 + $0x698] sm:$0xff]
    %v800 = vld [vmem:[#allocation2 + $0x6a0] sm:$0xff]
    %v801 = vld [vmem:[#allocation2 + $0x6a8] sm:$0xff]
    %v802 = vld [vmem:[#allocation2 + $0x6b0] sm:$0xff]
    %v803 = vld [vmem:[#allocation2 + $0x6b8] sm:$0xff]
    %v804 = vld [vmem:[#allocation2 + $0x6c0] sm:$0xff]
    %v805 = vld [vmem:[#allocation2 + $0x6c8] sm:$0xff]
    %v806 = vld [vmem:[#allocation2 + $0x6d0] sm:$0xff]
    %v807 = vld [vmem:[#allocation2 + $0x6d8] sm:$0xff]
    %v808 = vld [vmem:[#allocation2 + $0x6e0] sm:$0xff]
    %v809 = vld [vmem:[#allocation2 + $0x6e8] sm:$0xff]
    %v810 = vld [vmem:[#allocation2 + $0x6f0] sm:$0xff]
    %v811 = vld [vmem:[#allocation2 + $0x6f8] sm:$0xff]
    %v812 = vld [vmem:[#allocation2 + $0x700] sm:$0xff]
    %v813 = vld [vmem:[#allocation2 + $0x708] sm:$0xff]
    %v814 = vld [vmem:[#allocation2 + $0x710] sm:$0xff]
    %v815 = vld [vmem:[#allocation2 + $0x718] sm:$0xff]
    %v816 = vld [vmem:[#allocation2 + $0x720] sm:$0xff]
    %v817 = vld [vmem:[#allocation2 + $0x728] sm:$0xff]
    %v818 = vld [vmem:[#allocation2 + $0x730] sm:$0xff]
    %v819 = vld [vmem:[#allocation2 + $0x738] sm:$0xff]
    %v820 = vld [vmem:[#allocation2 + $0x740] sm:$0xff]
    %v821 = vld [vmem:[#allocation2 + $0x748] sm:$0xff]
    %v822 = vld [vmem:[#allocation2 + $0x750] sm:$0xff]
    %v823 = vld [vmem:[#allocation2 + $0x758] sm:$0xff]
    %v824 = vld [vmem:[#allocation2 + $0x760] sm:$0xff]
    %v825 = vld [vmem:[#allocation2 + $0x768] sm:$0xff]
    %v826 = vld [vmem:[#allocation2 + $0x770] sm:$0xff]
    %v827 = vld [vmem:[#allocation2 + $0x778] sm:$0xff]
    %v828 = vld [vmem:[#allocation2 + $0x780] sm:$0xff]
    %v829 = vld [vmem:[#allocation2 + $0x788] sm:$0xff]
    %v830 = vld [vmem:[#allocation2 + $0x790] sm:$0xff]
    %v831 = vld [vmem:[#allocation2 + $0x798] sm:$0xff]
    %v832 = vld [vmem:[#allocation2 + $0x7a0] sm:$0xff]
    %v833 = vld [vmem:[#allocation2 + $0x7a8] sm:$0xff]
    %v834 = vld [vmem:[#allocation2 + $0x7b0] sm:$0xff]
    %v835 = vld [vmem:[#allocation2 + $0x7b8] sm:$0xff]
    %v836 = vld [vmem:[#allocation2 + $0x7c0] sm:$0xff]
    %v837 = vld [vmem:[#allocation2 + $0x7c8] sm:$0xff]
    %v838 = vld [vmem:[#allocation2 + $0x7d0] sm:$0xff]
    %v839 = vld [vmem:[#allocation2 + $0x7d8] sm:$0xff]
    %v840 = vld [vmem:[#allocation2 + $0x7e0] sm:$0xff]
    %v841 = vld [vmem:[#allocation2 + $0x7e8] sm:$0xff]
    %v842 = vld [vmem:[#allocation2 + $0x7f0] sm:$0xff]
    %v843 = vld [vmem:[#allocation2 + $0x7f8] sm:$0xff]
    %v844 = vld [vmem:[#allocation2 + $0x800] sm:$0xff]
    %v845 = vld [vmem:[#allocation2 + $0x808] sm:$0xff]
    %v846 = vld [vmem:[#allocation2 + $0x810] sm:$0xff]
    %v847 = vld [vmem:[#allocation2 + $0x818] sm:$0xff]
    %v848 = vld [vmem:[#allocation2 + $0x820] sm:$0xff]
    %v849 = vld [vmem:[#allocation2 + $0x828] sm:$0xff]
    %v850 = vld [vmem:[#allocation2 + $0x830] sm:$0xff]
    %v851 = vld [vmem:[#allocation2 + $0x838] sm:$0xff]
    %v852 = vld [vmem:[#allocation2 + $0x840] sm:$0xff]
    %v853 = vld [vmem:[#allocation2 + $0x848] sm:$0xff]
    %v854 = vld [vmem:[#allocation2 + $0x850] sm:$0xff]
    %v855 = vld [vmem:[#allocation2 + $0x858] sm:$0xff]
    %v856 = vld [vmem:[#allocation2 + $0x860] sm:$0xff]
    %v857 = vld [vmem:[#allocation2 + $0x868] sm:$0xff]
    %v858 = vld [vmem:[#allocation2 + $0x870] sm:$0xff]
    %v859 = vld [vmem:[#allocation2 + $0x878] sm:$0xff]
    %v860 = vld [vmem:[#allocation2 + $0x880] sm:$0xff]
    %v861 = vld [vmem:[#allocation2 + $0x888] sm:$0xff]
    %v862 = vld [vmem:[#allocation2 + $0x890] sm:$0xff]
    %v863 = vld [vmem:[#allocation2 + $0x898] sm:$0xff]
    %v864 = vld [vmem:[#allocation2 + $0x8a0] sm:$0xff]
    %v865 = vld [vmem:[#allocation2 + $0x8a8] sm:$0xff]
    %v866 = vld [vmem:[#allocation2 + $0x8b0] sm:$0xff]
    %v867 = vld [vmem:[#allocation2 + $0x8b8] sm:$0xff]
    %v868 = vld [vmem:[#allocation2 + $0x8c0] sm:$0xff]
    %v869 = vld [vmem:[#allocation2 + $0x8c8] sm:$0xff]
    %v870 = vld [vmem:[#allocation2 + $0x8d0] sm:$0xff]
    %v871 = vld [vmem:[#allocation2 + $0x8d8] sm:$0xff]
    %v872 = vld [vmem:[#allocation2 + $0x8e0] sm:$0xff]
    %v873 = vld [vmem:[#allocation2 + $0x8e8] sm:$0xff]
    %v874 = vld [vmem:[#allocation2 + $0x8f0] sm:$0xff]
    %v875 = vld [vmem:[#allocation2 + $0x8f8] sm:$0xff]
    %v876 = vld [vmem:[#allocation2 + $0x900] sm:$0xff]
    %v877 = vld [vmem:[#allocation2 + $0x908] sm:$0xff]
    %v878 = vld [vmem:[#allocation2 + $0x910] sm:$0xff]
    %v879 = vld [vmem:[#allocation2 + $0x918] sm:$0xff]
    %v880 = vld [vmem:[#allocation2 + $0x920] sm:$0xff]
    %v881 = vld [vmem:[#allocation2 + $0x928] sm:$0xff]
    %v882 = vld [vmem:[#allocation2 + $0x930] sm:$0xff]
    %v883 = vld [vmem:[#allocation2 + $0x938] sm:$0xff]
    %v884 = vld [vmem:[#allocation2 + $0x940] sm:$0xff]
    %v885 = vld [vmem:[#allocation2 + $0x948] sm:$0xff]
    %v886 = vld [vmem:[#allocation2 + $0x950] sm:$0xff]
    %v887 = vld [vmem:[#allocation2 + $0x958] sm:$0xff]
    %v888 = vld [vmem:[#allocation2 + $0x960] sm:$0xff]
    %v889 = vld [vmem:[#allocation2 + $0x968] sm:$0xff]
    %v890 = vld [vmem:[#allocation2 + $0x970] sm:$0xff]
    %v891 = vld [vmem:[#allocation2 + $0x978] sm:$0xff]
    %v892 = vld [vmem:[#allocation2 + $0x980] sm:$0xff]
    %v893 = vld [vmem:[#allocation2 + $0x988] sm:$0xff]
    %v894 = vld [vmem:[#allocation2 + $0x990] sm:$0xff]
    %v895 = vld [vmem:[#allocation2 + $0x998] sm:$0xff]
    %v896 = vld [vmem:[#allocation2 + $0x9a0] sm:$0xff]
    %v897 = vld [vmem:[#allocation2 + $0x9a8] sm:$0xff]
    %v898 = vld [vmem:[#allocation2 + $0x9b0] sm:$0xff]
    %v899 = vld [vmem:[#allocation2 + $0x9b8] sm:$0xff]
    %v900 = vld [vmem:[#allocation2 + $0x9c0] sm:$0xff]
    %v901 = vld [vmem:[#allocation2 + $0x9c8] sm:$0xff]
    %v902 = vld [vmem:[#allocation2 + $0x9d0] sm:$0xff]
    %v903 = vld [vmem:[#allocation2 + $0x9d8] sm:$0xff]
    %v904 = vld [vmem:[#allocation2 + $0x9e0] sm:$0xff]
    %v905 = vld [vmem:[#allocation2 + $0x9e8] sm:$0xff]
    %v906 = vld [vmem:[#allocation2 + $0x9f0] sm:$0xff]
    %v907 = vld [vmem:[#allocation2 + $0x9f8] sm:$0xff]
    %v908 = vld [vmem:[#allocation2 + $0xa00] sm:$0xff]
    %v909 = vld [vmem:[#allocation2 + $0xa08] sm:$0xff]
    %v910 = vld [vmem:[#allocation2 + $0xa10] sm:$0xff]
    %v911 = vld [vmem:[#allocation2 + $0xa18] sm:$0xff]
    %v912 = vld [vmem:[#allocation2 + $0xa20] sm:$0xff]
    %v913 = vld [vmem:[#allocation2 + $0xa28] sm:$0xff]
    %v914 = vld [vmem:[#allocation2 + $0xa30] sm:$0xff]
    %v915 = vld [vmem:[#allocation2 + $0xa38] sm:$0xff]
    %v916 = vld [vmem:[#allocation2 + $0xa40] sm:$0xff]
    %v917 = vld [vmem:[#allocation2 + $0xa48] sm:$0xff]
    %v918 = vld [vmem:[#allocation2 + $0xa50] sm:$0xff]
    %v919 = vld [vmem:[#allocation2 + $0xa58] sm:$0xff]
    %v920 = vld [vmem:[#allocation2 + $0xa60] sm:$0xff]
    %v921 = vld [vmem:[#allocation2 + $0xa68] sm:$0xff]
    %v922 = vld [vmem:[#allocation2 + $0xa70] sm:$0xff]
    %v923 = vld [vmem:[#allocation2 + $0xa78] sm:$0xff]
    %v924 = vld [vmem:[#allocation2 + $0xa80] sm:$0xff]
    %v925 = vld [vmem:[#allocation2 + $0xa88] sm:$0xff]
    %v926 = vld [vmem:[#allocation2 + $0xa90] sm:$0xff]
    %v927 = vld [vmem:[#allocation2 + $0xa98] sm:$0xff]
    %v928 = vld [vmem:[#allocation2 + $0xaa0] sm:$0xff]
    %v929 = vld [vmem:[#allocation2 + $0xaa8] sm:$0xff]
    %v930 = vld [vmem:[#allocation2 + $0xab0] sm:$0xff]
    %v931 = vld [vmem:[#allocation2 + $0xab8] sm:$0xff]
    %v932 = vld [vmem:[#allocation2 + $0xac0] sm:$0xff]
    %v933 = vld [vmem:[#allocation2 + $0xac8] sm:$0xff]
    %v934 = vld [vmem:[#allocation2 + $0xad0] sm:$0xff]
    %v935 = vld [vmem:[#allocation2 + $0xad8] sm:$0xff]
    %v936 = vld [vmem:[#allocation2 + $0xae0] sm:$0xff]
    %v937 = vld [vmem:[#allocation2 + $0xae8] sm:$0xff]
    %v938 = vld [vmem:[#allocation2 + $0xaf0] sm:$0xff]
    %v939 = vld [vmem:[#allocation2 + $0xaf8] sm:$0xff]
    %v940 = vld [vmem:[#allocation2 + $0xb00] sm:$0xff]
    %v941 = vld [vmem:[#allocation2 + $0xb08] sm:$0xff]
    %v942 = vld [vmem:[#allocation2 + $0xb10] sm:$0xff]
    %v943 = vld [vmem:[#allocation2 + $0xb18] sm:$0xff]
    %v944 = vld [vmem:[#allocation2 + $0xb20] sm:$0xff]
    %v945 = vld [vmem:[#allocation2 + $0xb28] sm:$0xff]
    %v946 = vld [vmem:[#allocation2 + $0xb30] sm:$0xff]
    %v947 = vld [vmem:[#allocation2 + $0xb38] sm:$0xff]
    %v948 = vld [vmem:[#allocation2 + $0xb40] sm:$0xff]
    %v949 = vld [vmem:[#allocation2 + $0xb48] sm:$0xff]
    %v950 = vld [vmem:[#allocation2 + $0xb50] sm:$0xff]
    %v951 = vld [vmem:[#allocation2 + $0xb58] sm:$0xff]
    %v952 = vld [vmem:[#allocation2 + $0xb60] sm:$0xff]
    %v953 = vld [vmem:[#allocation2 + $0xb68] sm:$0xff]
    %v954 = vld [vmem:[#allocation2 + $0xb70] sm:$0xff]
    %v955 = vld [vmem:[#allocation2 + $0xb78] sm:$0xff]
    %v956 = vld [vmem:[#allocation2 + $0xb80] sm:$0xff]
    %v957 = vld [vmem:[#allocation2 + $0xb88] sm:$0xff]
    %v958 = vld [vmem:[#allocation2 + $0xb90] sm:$0xff]
    %v959 = vld [vmem:[#allocation2 + $0xb98] sm:$0xff]
    %v960 = vld [vmem:[#allocation2 + $0xba0] sm:$0xff]
    %v961 = vld [vmem:[#allocation2 + $0xba8] sm:$0xff]
    %v962 = vld [vmem:[#allocation2 + $0xbb0] sm:$0xff]
    %v963 = vld [vmem:[#allocation2 + $0xbb8] sm:$0xff]
    %v964 = vld [vmem:[#allocation2 + $0xbc0] sm:$0xff]
    %v965 = vld [vmem:[#allocation2 + $0xbc8] sm:$0xff]
    %v966 = vld [vmem:[#allocation2 + $0xbd0] sm:$0xff]
    %v967 = vld [vmem:[#allocation2 + $0xbd8] sm:$0xff]
    %v968 = vld [vmem:[#allocation2 + $0xbe0] sm:$0xff]
    %v969 = vld [vmem:[#allocation2 + $0xbe8] sm:$0xff]
    %v970 = vld [vmem:[#allocation2 + $0xbf0] sm:$0xff]
    %v971 = vld [vmem:[#allocation2 + $0xbf8] sm:$0xff]
    %v972 = vld [vmem:[#allocation2 + $0xc00] sm:$0xff]
    %v973 = vld [vmem:[#allocation2 + $0xc08] sm:$0xff]
    %v974 = vld [vmem:[#allocation2 + $0xc10] sm:$0xff]
    %v975 = vld [vmem:[#allocation2 + $0xc18] sm:$0xff]
    %v976 = vld [vmem:[#allocation2 + $0xc20] sm:$0xff]
    %v977 = vld [vmem:[#allocation2 + $0xc28] sm:$0xff]
    %v978 = vld [vmem:[#allocation2 + $0xc30] sm:$0xff]
    %v979 = vld [vmem:[#allocation2 + $0xc38] sm:$0xff]
    %v980 = vld [vmem:[#allocation2 + $0xc40] sm:$0xff]
    %v981 = vld [vmem:[#allocation2 + $0xc48] sm:$0xff]
    %v982 = vld [vmem:[#allocation2 + $0xc50] sm:$0xff]
    %v983 = vld [vmem:[#allocation2 + $0xc58] sm:$0xff]
    %v984 = vld [vmem:[#allocation2 + $0xc60] sm:$0xff]
    %v985 = vld [vmem:[#allocation2 + $0xc68] sm:$0xff]
    %v986 = vld [vmem:[#allocation2 + $0xc70] sm:$0xff]
    %v987 = vld [vmem:[#allocation2 + $0xc78] sm:$0xff]
    %v988 = vld [vmem:[#allocation2 + $0xc80] sm:$0xff]
    %v989 = vld [vmem:[#allocation2 + $0xc88] sm:$0xff]
    %v990 = vld [vmem:[#allocation2 + $0xc90] sm:$0xff]
    %v991 = vld [vmem:[#allocation2 + $0xc98] sm:$0xff]
    %v992 = vld [vmem:[#allocation2 + $0xca0] sm:$0xff]
    %v993 = vld [vmem:[#allocation2 + $0xca8] sm:$0xff]
    %v994 = vld [vmem:[#allocation2 + $0xcb0] sm:$0xff]
    %v995 = vld [vmem:[#allocation2 + $0xcb8] sm:$0xff]
    %v996 = vld [vmem:[#allocation2 + $0xcc0] sm:$0xff]
    %v997 = vld [vmem:[#allocation2 + $0xcc8] sm:$0xff]
    %v998 = vld [vmem:[#allocation2 + $0xcd0] sm:$0xff]
    %v999 = vld [vmem:[#allocation2 + $0xcd8] sm:$0xff]
    %v1000 = vld [vmem:[#allocation2 + $0xce0] sm:$0xff]
    %v1001 = vld [vmem:[#allocation2 + $0xce8] sm:$0xff]
    %v1002 = vld [vmem:[#allocation2 + $0xcf0] sm:$0xff]
    %v1003 = vld [vmem:[#allocation2 + $0xcf8] sm:$0xff]
    %v1004 = vld [vmem:[#allocation2 + $0xd00] sm:$0xff]
    %v1005 = vld [vmem:[#allocation2 + $0xd08] sm:$0xff]
    %v1006 = vld [vmem:[#allocation2 + $0xd10] sm:$0xff]
    %v1007 = vld [vmem:[#allocation2 + $0xd18] sm:$0xff]
    %v1008 = vld [vmem:[#allocation2 + $0xd20] sm:$0xff]
    %v1009 = vld [vmem:[#allocation2 + $0xd28] sm:$0xff]
    %v1010 = vld [vmem:[#allocation2 + $0xd30] sm:$0xff]
    %v1011 = vld [vmem:[#allocation2 + $0xd38] sm:$0xff]
    %v1012 = vld [vmem:[#allocation2 + $0xd40] sm:$0xff]
    %v1013 = vld [vmem:[#allocation2 + $0xd48] sm:$0xff]
    %v1014 = vld [vmem:[#allocation2 + $0xd50] sm:$0xff]
    %v1015 = vld [vmem:[#allocation2 + $0xd58] sm:$0xff]
    %v1016 = vld [vmem:[#allocation2 + $0xd60] sm:$0xff]
    %v1017 = vld [vmem:[#allocation2 + $0xd68] sm:$0xff]
    %v1018 = vld [vmem:[#allocation2 + $0xd70] sm:$0xff]
    %v1019 = vld [vmem:[#allocation2 + $0xd78] sm:$0xff]
    %v1020 = vld [vmem:[#allocation2 + $0xd80] sm:$0xff]
    %v1021 = vld [vmem:[#allocation2 + $0xd88] sm:$0xff]
    %v1022 = vld [vmem:[#allocation2 + $0xd90] sm:$0xff]
    %v1023 = vld [vmem:[#allocation2 + $0xd98] sm:$0xff]
    %v1024 = vld [vmem:[#allocation2 + $0xda0] sm:$0xff]
    %v1025 = vld [vmem:[#allocation2 + $0xda8] sm:$0xff]
    %v1026 = vld [vmem:[#allocation2 + $0xdb0] sm:$0xff]
    %v1027 = vld [vmem:[#allocation2 + $0xdb8] sm:$0xff]
    %v1028 = vld [vmem:[#allocation2 + $0xdc0] sm:$0xff]
    %v1029 = vld [vmem:[#allocation2 + $0xdc8] sm:$0xff]
    %v1030 = vld [vmem:[#allocation2 + $0xdd0] sm:$0xff]
    %v1031 = vld [vmem:[#allocation2 + $0xdd8] sm:$0xff]
    %v1032 = vld [vmem:[#allocation2 + $0xde0] sm:$0xff]
    %v1033 = vld [vmem:[#allocation2 + $0xde8] sm:$0xff]
    %v1034 = vld [vmem:[#allocation2 + $0xdf0] sm:$0xff]
    %v1035 = vld [vmem:[#allocation2 + $0xdf8] sm:$0xff]
    %v1036 = vld [vmem:[#allocation2 + $0xe00] sm:$0xff]
    %v1037 = vld [vmem:[#allocation2 + $0xe08] sm:$0xff]
    %v1038 = vld [vmem:[#allocation2 + $0xe10] sm:$0xff]
    %v1039 = vld [vmem:[#allocation2 + $0xe18] sm:$0xff]
    %v1040 = vld [vmem:[#allocation2 + $0xe20] sm:$0xff]
    %v1041 = vld [vmem:[#allocation2 + $0xe28] sm:$0xff]
    %v1042 = vld [vmem:[#allocation2 + $0xe30] sm:$0xff]
    %v1043 = vld [vmem:[#allocation2 + $0xe38] sm:$0xff]
    %v1044 = vld [vmem:[#allocation2 + $0xe40] sm:$0xff]
    %v1045 = vld [vmem:[#allocation2 + $0xe48] sm:$0xff]
    %v1046 = vld [vmem:[#allocation2 + $0xe50] sm:$0xff]
    %v1047 = vld [vmem:[#allocation2 + $0xe58] sm:$0xff]
    %v1048 = vld [vmem:[#allocation2 + $0xe60] sm:$0xff]
    %v1049 = vld [vmem:[#allocation2 + $0xe68] sm:$0xff]
    %v1050 = vld [vmem:[#allocation2 + $0xe70] sm:$0xff]
    %v1051 = vld [vmem:[#allocation2 + $0xe78] sm:$0xff]
    %v1052 = vld [vmem:[#allocation2 + $0xe80] sm:$0xff]
    %v1053 = vld [vmem:[#allocation2 + $0xe88] sm:$0xff]
    %v1054 = vld [vmem:[#allocation2 + $0xe90] sm:$0xff]
    %v1055 = vld [vmem:[#allocation2 + $0xe98] sm:$0xff]
    %v1056 = vld [vmem:[#allocation2 + $0xea0] sm:$0xff]
    %v1057 = vld [vmem:[#allocation2 + $0xea8] sm:$0xff]
    %v1058 = vld [vmem:[#allocation2 + $0xeb0] sm:$0xff]
    %v1059 = vld [vmem:[#allocation2 + $0xeb8] sm:$0xff]
    %v1060 = vld [vmem:[#allocation2 + $0xec0] sm:$0xff]
    %v1061 = vld [vmem:[#allocation2 + $0xec8] sm:$0xff]
    %v1062 = vld [vmem:[#allocation2 + $0xed0] sm:$0xff]
    %v1063 = vld [vmem:[#allocation2 + $0xed8] sm:$0xff]
    %v1064 = vld [vmem:[#allocation2 + $0xee0] sm:$0xff]
    %v1065 = vld [vmem:[#allocation2 + $0xee8] sm:$0xff]
    %v1066 = vld [vmem:[#allocation2 + $0xef0] sm:$0xff]
    %v1067 = vld [vmem:[#allocation2 + $0xef8] sm:$0xff]
    %v1068 = vld [vmem:[#allocation2 + $0xf00] sm:$0xff]
    %v1069 = vld [vmem:[#allocation2 + $0xf08] sm:$0xff]
    %v1070 = vld [vmem:[#allocation2 + $0xf10] sm:$0xff]
    %v1071 = vld [vmem:[#allocation2 + $0xf18] sm:$0xff]
    %v1072 = vld [vmem:[#allocation2 + $0xf20] sm:$0xff]
    %v1073 = vld [vmem:[#allocation2 + $0xf28] sm:$0xff]
    %v1074 = vld [vmem:[#allocation2 + $0xf30] sm:$0xff]
    %v1075 = vld [vmem:[#allocation2 + $0xf38] sm:$0xff]
    %v1076 = vld [vmem:[#allocation2 + $0xf40] sm:$0xff]
    %v1077 = vld [vmem:[#allocation2 + $0xf48] sm:$0xff]
    %v1078 = vld [vmem:[#allocation2 + $0xf50] sm:$0xff]
    %v1079 = vld [vmem:[#allocation2 + $0xf58] sm:$0xff]
    %v1080 = vld [vmem:[#allocation2 + $0xf60] sm:$0xff]
    %v1081 = vld [vmem:[#allocation2 + $0xf68] sm:$0xff]
    %v1082 = vld [vmem:[#allocation2 + $0xf70] sm:$0xff]
    %v1083 = vld [vmem:[#allocation2 + $0xf78] sm:$0xff]
    %v1084 = vld [vmem:[#allocation2 + $0xf80] sm:$0xff]
    %v1085 = vld [vmem:[#allocation2 + $0xf88] sm:$0xff]
    %v1086 = vld [vmem:[#allocation2 + $0xf90] sm:$0xff]
    %v1087 = vld [vmem:[#allocation2 + $0xf98] sm:$0xff]
    %v1088 = vld [vmem:[#allocation2 + $0xfa0] sm:$0xff]
    %v1089 = vld [vmem:[#allocation2 + $0xfa8] sm:$0xff]
    %v1090 = vld [vmem:[#allocation2 + $0xfb0] sm:$0xff]
    %v1091 = vld [vmem:[#allocation2 + $0xfb8] sm:$0xff]
    %v1092 = vld [vmem:[#allocation2 + $0xfc0] sm:$0xff]
    %v1093 = vld [vmem:[#allocation2 + $0xfc8] sm:$0xff]
    %v1094 = vld [vmem:[#allocation2 + $0xfd0] sm:$0xff]
    %v1095 = vld [vmem:[#allocation2 + $0xfd8] sm:$0xff]
    %v1096 = vld [vmem:[#allocation2 + $0xfe0] sm:$0xff]
    %v1097 = vld [vmem:[#allocation2 + $0xfe8] sm:$0xff]
    %v1098 = vld [vmem:[#allocation2 + $0xff0] sm:$0xff]
    %v1099 = vld [vmem:[#allocation2 + $0xff8] sm:$0xff]
    %v1100 = vld [vmem:[#allocation2 + $0x1000] sm:$0xff]
    %v1101 = vld [vmem:[#allocation2 + $0x1008] sm:$0xff]
    %v1102 = vld [vmem:[#allocation2 + $0x1010] sm:$0xff]
    %v1103 = vld [vmem:[#allocation2 + $0x1018] sm:$0xff]
    %v1104 = vld [vmem:[#allocation2 + $0x1020] sm:$0xff]
    %v1105 = vld [vmem:[#allocation2 + $0x1028] sm:$0xff]
    %v1106 = vld [vmem:[#allocation2 + $0x1030] sm:$0xff]
    %v1107 = vld [vmem:[#allocation2 + $0x1038] sm:$0xff]
    %v1108 = vld [vmem:[#allocation2 + $0x1040] sm:$0xff]
    %v1109 = vld [vmem:[#allocation2 + $0x1048] sm:$0xff]
    %v1110 = vld [vmem:[#allocation2 + $0x1050] sm:$0xff]
    %v1111 = vld [vmem:[#allocation2 + $0x1058] sm:$0xff]
    %v1112 = vld [vmem:[#allocation2 + $0x1060] sm:$0xff]
    %v1113 = vld [vmem:[#allocation2 + $0x1068] sm:$0xff]
    %v1114 = vld [vmem:[#allocation2 + $0x1070] sm:$0xff]
    %v1115 = vld [vmem:[#allocation2 + $0x1078] sm:$0xff]
    %v1116 = vld [vmem:[#allocation2 + $0x1080] sm:$0xff]
    %v1117 = vld [vmem:[#allocation2 + $0x1088] sm:$0xff]
    %v1118 = vld [vmem:[#allocation2 + $0x1090] sm:$0xff]
    %v1119 = vld [vmem:[#allocation2 + $0x1098] sm:$0xff]
    %v1120 = vld [vmem:[#allocation2 + $0x10a0] sm:$0xff]
    %v1121 = vld [vmem:[#allocation2 + $0x10a8] sm:$0xff]
    %v1122 = vld [vmem:[#allocation2 + $0x10b0] sm:$0xff]
    %v1123 = vld [vmem:[#allocation2 + $0x10b8] sm:$0xff]
    %v1124 = vld [vmem:[#allocation2 + $0x10c0] sm:$0xff]
    %v1125 = vld [vmem:[#allocation2 + $0x10c8] sm:$0xff]
    %v1126 = vld [vmem:[#allocation2 + $0x10d0] sm:$0xff]
    %v1127 = vld [vmem:[#allocation2 + $0x10d8] sm:$0xff]
    %v1128 = vld [vmem:[#allocation2 + $0x10e0] sm:$0xff]
    %v1129 = vld [vmem:[#allocation2 + $0x10e8] sm:$0xff]
    %v1130 = vld [vmem:[#allocation2 + $0x10f0] sm:$0xff]
    %v1131 = vld [vmem:[#allocation2 + $0x10f8] sm:$0xff]
    %v1132 = vld [vmem:[#allocation2 + $0x1100] sm:$0xff]
    %v1133 = vld [vmem:[#allocation2 + $0x1108] sm:$0xff]
    %v1134 = vld [vmem:[#allocation2 + $0x1110] sm:$0xff]
    %v1135 = vld [vmem:[#allocation2 + $0x1118] sm:$0xff]
    %v1136 = vld [vmem:[#allocation2 + $0x1120] sm:$0xff]
    %v1137 = vld [vmem:[#allocation2 + $0x1128] sm:$0xff]
    %v1138 = vld [vmem:[#allocation2 + $0x1130] sm:$0xff]
    %v1139 = vld [vmem:[#allocation2 + $0x1138] sm:$0xff]
    %v1140 = vld [vmem:[#allocation2 + $0x1140] sm:$0xff]
    %v1141 = vld [vmem:[#allocation2 + $0x1148] sm:$0xff]
    %v1142 = vld [vmem:[#allocation2 + $0x1150] sm:$0xff]
    %v1143 = vld [vmem:[#allocation2 + $0x1158] sm:$0xff]
    %v1144 = vld [vmem:[#allocation2 + $0x1160] sm:$0xff]
    %v1145 = vld [vmem:[#allocation2 + $0x1168] sm:$0xff]
    %v1146 = vld [vmem:[#allocation2 + $0x1170] sm:$0xff]
    %v1147 = vld [vmem:[#allocation2 + $0x1178] sm:$0xff]
    %v1148 = vld [vmem:[#allocation2 + $0x1180] sm:$0xff]
    %v1149 = vld [vmem:[#allocation2 + $0x1188] sm:$0xff]
    %v1150 = vld [vmem:[#allocation2 + $0x1190] sm:$0xff]
    %v1151 = vld [vmem:[#allocation2 + $0x1198] sm:$0xff]
    %v1152 = vld [vmem:[#allocation2 + $0x11a0] sm:$0xff]
    %v1153 = vld [vmem:[#allocation2 + $0x11a8] sm:$0xff]
    %v1154 = vld [vmem:[#allocation2 + $0x11b0] sm:$0xff]
    %v1155 = vld [vmem:[#allocation2 + $0x11b8] sm:$0xff]
    %v1156 = vld [vmem:[#allocation2 + $0x11c0] sm:$0xff]
    %v1157 = vld [vmem:[#allocation2 + $0x11c8] sm:$0xff]
    %v1158 = vld [vmem:[#allocation2 + $0x11d0] sm:$0xff]
    %v1159 = vld [vmem:[#allocation2 + $0x11d8] sm:$0xff]
    %v1160 = vld [vmem:[#allocation2 + $0x11e0] sm:$0xff]
    %v1161 = vld [vmem:[#allocation2 + $0x11e8] sm:$0xff]
    %v1162 = vld [vmem:[#allocation2 + $0x11f0] sm:$0xff]
    %v1163 = vld [vmem:[#allocation2 + $0x11f8] sm:$0xff]
    %1164 = vmatpush.msra.mxu0 %v346
    %1165 = vmatpush.msra.mxu0 %v341
    %1166 = vmatpush.msra.mxu0 %v336
    %1167 = vmatpush.msra.mxu0 %v331
    %1168 = vmatpush.msra.mxu0 %v326
    %1169 = vmatpush.msra.mxu0 %v321
    %1170 = vmatpush.msra.mxu0 %v316
    %1171 = vmatpush.msra.mxu0 %v311
    %1172 = vmatpush.msra.mxu0 %v306
    %1173 = vmatpush.msra.mxu0 %v301
    %1174 = vmatpush.msra.mxu0 %v296
    %1175 = vmatpush.msra.mxu0 %v291
    %1176 = vmatpush.msra.mxu0 %v286
    %1177 = vmatpush.msra.mxu0 %v281
    %1178 = vmatpush.msra.mxu0 %v276
    %1179 = vmatpush.msra.mxu0 %v271
    %1180 = vmatmul.f32.gmra.mxu0 %v588
    %v1181 = vpop.f32.mrf.mxu0
    %v1182 = vadd.f32 0.0, %v1181
    %1183 = vmatmul.f32.gmra.mxu0 %v592
    %v1184 = vpop.f32.mrf.mxu0
    %v1185 = vadd.f32 0.0, %v1184
    %1186 = vmatmul.f32.gmra.mxu0 %v596
    %v1187 = vpop.f32.mrf.mxu0
    %v1188 = vadd.f32 0.0, %v1187
    %1189 = vmatmul.f32.gmra.mxu0 %v600
    %v1190 = vpop.f32.mrf.mxu0
    %v1191 = vadd.f32 0.0, %v1190
    %1192 = vmatmul.f32.gmra.mxu0 %v604
    %v1193 = vpop.f32.mrf.mxu0
    %v1194 = vadd.f32 0.0, %v1193
    %1195 = vmatmul.f32.gmra.mxu0 %v608
    %v1196 = vpop.f32.mrf.mxu0
    %v1197 = vadd.f32 0.0, %v1196
    %1198 = vmatmul.f32.gmra.mxu0 %v612
    %v1199 = vpop.f32.mrf.mxu0
    %v1200 = vadd.f32 0.0, %v1199
    %1201 = vmatmul.f32.gmra.mxu0 %v616
    %v1202 = vpop.f32.mrf.mxu0
    %v1203 = vadd.f32 0.0, %v1202
    %1204 = vmatmul.f32.gmra.mxu0 %v620
    %v1205 = vpop.f32.mrf.mxu0
    %v1206 = vadd.f32 0.0, %v1205
    %1207 = vmatmul.f32.gmra.mxu0 %v624
    %v1208 = vpop.f32.mrf.mxu0
    %v1209 = vadd.f32 0.0, %v1208
    %1210 = vmatmul.f32.gmra.mxu0 %v628
    %v1211 = vpop.f32.mrf.mxu0
    %v1212 = vadd.f32 0.0, %v1211
    %1213 = vmatmul.f32.gmra.mxu0 %v632
    %v1214 = vpop.f32.mrf.mxu0
    %v1215 = vadd.f32 0.0, %v1214
    %1216 = vmatmul.f32.gmra.mxu0 %v636
    %v1217 = vpop.f32.mrf.mxu0
    %v1218 = vadd.f32 0.0, %v1217
    %1219 = vmatmul.f32.gmra.mxu0 %v640
    %v1220 = vpop.f32.mrf.mxu0
    %v1221 = vadd.f32 0.0, %v1220
    %1222 = vmatmul.f32.gmra.mxu0 %v644
    %v1223 = vpop.f32.mrf.mxu0
    %v1224 = vadd.f32 0.0, %v1223
    %1225 = vmatmul.f32.gmra.mxu0 %v648
    %v1226 = vpop.f32.mrf.mxu0
    %v1227 = vadd.f32 0.0, %v1226
    %1228 = vmatmul.f32.gmra.mxu0 %v652
    %v1229 = vpop.f32.mrf.mxu0
    %v1230 = vadd.f32 0.0, %v1229
    %1231 = vmatmul.f32.gmra.mxu0 %v656
    %v1232 = vpop.f32.mrf.mxu0
    %v1233 = vadd.f32 0.0, %v1232
    %1234 = vmatmul.f32.gmra.mxu0 %v660
    %v1235 = vpop.f32.mrf.mxu0
    %v1236 = vadd.f32 0.0, %v1235
    %1237 = vmatmul.f32.gmra.mxu0 %v664
    %v1238 = vpop.f32.mrf.mxu0
    %v1239 = vadd.f32 0.0, %v1238
    %1240 = vmatmul.f32.gmra.mxu0 %v668
    %v1241 = vpop.f32.mrf.mxu0
    %v1242 = vadd.f32 0.0, %v1241
    %1243 = vmatmul.f32.gmra.mxu0 %v672
    %v1244 = vpop.f32.mrf.mxu0
    %v1245 = vadd.f32 0.0, %v1244
    %1246 = vmatmul.f32.gmra.mxu0 %v676
    %v1247 = vpop.f32.mrf.mxu0
    %v1248 = vadd.f32 0.0, %v1247
    %1249 = vmatmul.f32.gmra.mxu0 %v680
    %v1250 = vpop.f32.mrf.mxu0
    %v1251 = vadd.f32 0.0, %v1250
    %1252 = vmatmul.f32.gmra.mxu0 %v684
    %v1253 = vpop.f32.mrf.mxu0
    %v1254 = vadd.f32 0.0, %v1253
    %1255 = vmatmul.f32.gmra.mxu0 %v688
    %v1256 = vpop.f32.mrf.mxu0
    %v1257 = vadd.f32 0.0, %v1256
    %1258 = vmatmul.f32.gmra.mxu0 %v692
    %v1259 = vpop.f32.mrf.mxu0
    %v1260 = vadd.f32 0.0, %v1259
    %1261 = vmatmul.f32.gmra.mxu0 %v696
    %v1262 = vpop.f32.mrf.mxu0
    %v1263 = vadd.f32 0.0, %v1262
    %1264 = vmatmul.f32.gmra.mxu0 %v700
    %v1265 = vpop.f32.mrf.mxu0
    %v1266 = vadd.f32 0.0, %v1265
    %1267 = vmatmul.f32.gmra.mxu0 %v704
    %v1268 = vpop.f32.mrf.mxu0
    %v1269 = vadd.f32 0.0, %v1268
    %1270 = vmatmul.f32.gmra.mxu0 %v708
    %v1271 = vpop.f32.mrf.mxu0
    %v1272 = vadd.f32 0.0, %v1271
    %1273 = vmatmul.f32.gmra.mxu0 %v712
    %v1274 = vpop.f32.mrf.mxu0
    %v1275 = vadd.f32 0.0, %v1274
    %1276 = vmatmul.f32.gmra.mxu0 %v716
    %v1277 = vpop.f32.mrf.mxu0
    %v1278 = vadd.f32 0.0, %v1277
    %1279 = vmatmul.f32.gmra.mxu0 %v720
    %v1280 = vpop.f32.mrf.mxu0
    %v1281 = vadd.f32 0.0, %v1280
    %1282 = vmatmul.f32.gmra.mxu0 %v724
    %v1283 = vpop.f32.mrf.mxu0
    %v1284 = vadd.f32 0.0, %v1283
    %1285 = vmatmul.f32.gmra.mxu0 %v728
    %v1286 = vpop.f32.mrf.mxu0
    %v1287 = vadd.f32 0.0, %v1286
    %1288 = vmatmul.f32.gmra.mxu0 %v732
    %v1289 = vpop.f32.mrf.mxu0
    %v1290 = vadd.f32 0.0, %v1289
    %1291 = vmatmul.f32.gmra.mxu0 %v736
    %v1292 = vpop.f32.mrf.mxu0
    %v1293 = vadd.f32 0.0, %v1292
    %1294 = vmatmul.f32.gmra.mxu0 %v740
    %v1295 = vpop.f32.mrf.mxu0
    %v1296 = vadd.f32 0.0, %v1295
    %1297 = vmatmul.f32.gmra.mxu0 %v744
    %v1298 = vpop.f32.mrf.mxu0
    %v1299 = vadd.f32 0.0, %v1298
    %1300 = vmatmul.f32.gmra.mxu0 %v748
    %v1301 = vpop.f32.mrf.mxu0
    %v1302 = vadd.f32 0.0, %v1301
    %1303 = vmatmul.f32.gmra.mxu0 %v752
    %v1304 = vpop.f32.mrf.mxu0
    %v1305 = vadd.f32 0.0, %v1304
    %1306 = vmatmul.f32.gmra.mxu0 %v756
    %v1307 = vpop.f32.mrf.mxu0
    %v1308 = vadd.f32 0.0, %v1307
    %1309 = vmatmul.f32.gmra.mxu0 %v760
    %v1310 = vpop.f32.mrf.mxu0
    %v1311 = vadd.f32 0.0, %v1310
    %1312 = vmatmul.f32.gmra.mxu0 %v764
    %v1313 = vpop.f32.mrf.mxu0
    %v1314 = vadd.f32 0.0, %v1313
    %1315 = vmatmul.f32.gmra.mxu0 %v768
    %v1316 = vpop.f32.mrf.mxu0
    %v1317 = vadd.f32 0.0, %v1316
    %1318 = vmatmul.f32.gmra.mxu0 %v772
    %v1319 = vpop.f32.mrf.mxu0
    %v1320 = vadd.f32 0.0, %v1319
    %1321 = vmatmul.f32.gmra.mxu0 %v776
    %v1322 = vpop.f32.mrf.mxu0
    %v1323 = vadd.f32 0.0, %v1322
    %1324 = vmatmul.f32.gmra.mxu0 %v780
    %v1325 = vpop.f32.mrf.mxu0
    %v1326 = vadd.f32 0.0, %v1325
    %1327 = vmatmul.f32.gmra.mxu0 %v784
    %v1328 = vpop.f32.mrf.mxu0
    %v1329 = vadd.f32 0.0, %v1328
    %1330 = vmatmul.f32.gmra.mxu0 %v788
    %v1331 = vpop.f32.mrf.mxu0
    %v1332 = vadd.f32 0.0, %v1331
    %1333 = vmatmul.f32.gmra.mxu0 %v792
    %v1334 = vpop.f32.mrf.mxu0
    %v1335 = vadd.f32 0.0, %v1334
    %1336 = vmatmul.f32.gmra.mxu0 %v796
    %v1337 = vpop.f32.mrf.mxu0
    %v1338 = vadd.f32 0.0, %v1337
    %1339 = vmatmul.f32.gmra.mxu0 %v800
    %v1340 = vpop.f32.mrf.mxu0
    %v1341 = vadd.f32 0.0, %v1340
    %1342 = vmatmul.f32.gmra.mxu0 %v804
    %v1343 = vpop.f32.mrf.mxu0
    %v1344 = vadd.f32 0.0, %v1343
    %1345 = vmatmul.f32.gmra.mxu0 %v808
    %v1346 = vpop.f32.mrf.mxu0
    %v1347 = vadd.f32 0.0, %v1346
    %1348 = vmatmul.f32.gmra.mxu0 %v812
    %v1349 = vpop.f32.mrf.mxu0
    %v1350 = vadd.f32 0.0, %v1349
    %1351 = vmatmul.f32.gmra.mxu0 %v816
    %v1352 = vpop.f32.mrf.mxu0
    %v1353 = vadd.f32 0.0, %v1352
    %1354 = vmatmul.f32.gmra.mxu0 %v820
    %v1355 = vpop.f32.mrf.mxu0
    %v1356 = vadd.f32 0.0, %v1355
    %1357 = vmatmul.f32.gmra.mxu0 %v824
    %v1358 = vpop.f32.mrf.mxu0
    %v1359 = vadd.f32 0.0, %v1358
    %1360 = vmatmul.f32.gmra.mxu0 %v828
    %v1361 = vpop.f32.mrf.mxu0
    %v1362 = vadd.f32 0.0, %v1361
    %1363 = vmatmul.f32.gmra.mxu0 %v832
    %v1364 = vpop.f32.mrf.mxu0
    %v1365 = vadd.f32 0.0, %v1364
    %1366 = vmatmul.f32.gmra.mxu0 %v836
    %v1367 = vpop.f32.mrf.mxu0
    %v1368 = vadd.f32 0.0, %v1367
    %1369 = vmatmul.f32.gmra.mxu0 %v840
    %v1370 = vpop.f32.mrf.mxu0
    %v1371 = vadd.f32 0.0, %v1370
    %1372 = vmatmul.f32.gmra.mxu0 %v844
    %v1373 = vpop.f32.mrf.mxu0
    %v1374 = vadd.f32 0.0, %v1373
    %1375 = vmatmul.f32.gmra.mxu0 %v848
    %v1376 = vpop.f32.mrf.mxu0
    %v1377 = vadd.f32 0.0, %v1376
    %1378 = vmatmul.f32.gmra.mxu0 %v852
    %v1379 = vpop.f32.mrf.mxu0
    %v1380 = vadd.f32 0.0, %v1379
    %1381 = vmatmul.f32.gmra.mxu0 %v856
    %v1382 = vpop.f32.mrf.mxu0
    %v1383 = vadd.f32 0.0, %v1382
    %1384 = vmatmul.f32.gmra.mxu0 %v860
    %v1385 = vpop.f32.mrf.mxu0
    %v1386 = vadd.f32 0.0, %v1385
    %1387 = vmatmul.f32.gmra.mxu0 %v864
    %v1388 = vpop.f32.mrf.mxu0
    %v1389 = vadd.f32 0.0, %v1388
    %1390 = vmatmul.f32.gmra.mxu0 %v868
    %v1391 = vpop.f32.mrf.mxu0
    %v1392 = vadd.f32 0.0, %v1391
    %1393 = vmatmul.f32.gmra.mxu0 %v872
    %v1394 = vpop.f32.mrf.mxu0
    %v1395 = vadd.f32 0.0, %v1394
    %1396 = vmatmul.f32.gmra.mxu0 %v876
    %v1397 = vpop.f32.mrf.mxu0
    %v1398 = vadd.f32 0.0, %v1397
    %1399 = vmatmul.f32.gmra.mxu0 %v880
    %v1400 = vpop.f32.mrf.mxu0
    %v1401 = vadd.f32 0.0, %v1400
    %1402 = vmatmul.f32.gmra.mxu0 %v884
    %v1403 = vpop.f32.mrf.mxu0
    %v1404 = vadd.f32 0.0, %v1403
    %1405 = vmatmul.f32.gmra.mxu0 %v888
    %v1406 = vpop.f32.mrf.mxu0
    %v1407 = vadd.f32 0.0, %v1406
    %1408 = vmatmul.f32.gmra.mxu0 %v892
    %v1409 = vpop.f32.mrf.mxu0
    %v1410 = vadd.f32 0.0, %v1409
    %1411 = vmatmul.f32.gmra.mxu0 %v896
    %v1412 = vpop.f32.mrf.mxu0
    %v1413 = vadd.f32 0.0, %v1412
    %1414 = vmatmul.f32.gmra.mxu0 %v900
    %v1415 = vpop.f32.mrf.mxu0
    %v1416 = vadd.f32 0.0, %v1415
    %1417 = vmatmul.f32.gmra.mxu0 %v904
    %v1418 = vpop.f32.mrf.mxu0
    %v1419 = vadd.f32 0.0, %v1418
    %1420 = vmatmul.f32.gmra.mxu0 %v908
    %v1421 = vpop.f32.mrf.mxu0
    %v1422 = vadd.f32 0.0, %v1421
    %1423 = vmatmul.f32.gmra.mxu0 %v912
    %v1424 = vpop.f32.mrf.mxu0
    %v1425 = vadd.f32 0.0, %v1424
    %1426 = vmatmul.f32.gmra.mxu0 %v916
    %v1427 = vpop.f32.mrf.mxu0
    %v1428 = vadd.f32 0.0, %v1427
    %1429 = vmatmul.f32.gmra.mxu0 %v920
    %v1430 = vpop.f32.mrf.mxu0
    %v1431 = vadd.f32 0.0, %v1430
    %1432 = vmatmul.f32.gmra.mxu0 %v924
    %v1433 = vpop.f32.mrf.mxu0
    %v1434 = vadd.f32 0.0, %v1433
    %1435 = vmatmul.f32.gmra.mxu0 %v928
    %v1436 = vpop.f32.mrf.mxu0
    %v1437 = vadd.f32 0.0, %v1436
    %1438 = vmatmul.f32.gmra.mxu0 %v932
    %v1439 = vpop.f32.mrf.mxu0
    %v1440 = vadd.f32 0.0, %v1439
    %1441 = vmatmul.f32.gmra.mxu0 %v936
    %v1442 = vpop.f32.mrf.mxu0
    %v1443 = vadd.f32 0.0, %v1442
    %1444 = vmatmul.f32.gmra.mxu0 %v940
    %v1445 = vpop.f32.mrf.mxu0
    %v1446 = vadd.f32 0.0, %v1445
    %1447 = vmatmul.f32.gmra.mxu0 %v944
    %v1448 = vpop.f32.mrf.mxu0
    %v1449 = vadd.f32 0.0, %v1448
    %1450 = vmatmul.f32.gmra.mxu0 %v948
    %v1451 = vpop.f32.mrf.mxu0
    %v1452 = vadd.f32 0.0, %v1451
    %1453 = vmatmul.f32.gmra.mxu0 %v952
    %v1454 = vpop.f32.mrf.mxu0
    %v1455 = vadd.f32 0.0, %v1454
    %1456 = vmatmul.f32.gmra.mxu0 %v956
    %v1457 = vpop.f32.mrf.mxu0
    %v1458 = vadd.f32 0.0, %v1457
    %1459 = vmatmul.f32.gmra.mxu0 %v960
    %v1460 = vpop.f32.mrf.mxu0
    %v1461 = vadd.f32 0.0, %v1460
    %1462 = vmatmul.f32.gmra.mxu0 %v964
    %v1463 = vpop.f32.mrf.mxu0
    %v1464 = vadd.f32 0.0, %v1463
    %1465 = vmatmul.f32.gmra.mxu0 %v968
    %v1466 = vpop.f32.mrf.mxu0
    %v1467 = vadd.f32 0.0, %v1466
    %1468 = vmatmul.f32.gmra.mxu0 %v972
    %v1469 = vpop.f32.mrf.mxu0
    %v1470 = vadd.f32 0.0, %v1469
    %1471 = vmatmul.f32.gmra.mxu0 %v976
    %v1472 = vpop.f32.mrf.mxu0
    %v1473 = vadd.f32 0.0, %v1472
    %1474 = vmatmul.f32.gmra.mxu0 %v980
    %v1475 = vpop.f32.mrf.mxu0
    %v1476 = vadd.f32 0.0, %v1475
    %1477 = vmatmul.f32.gmra.mxu0 %v984
    %v1478 = vpop.f32.mrf.mxu0
    %v1479 = vadd.f32 0.0, %v1478
    %1480 = vmatmul.f32.gmra.mxu0 %v988
    %v1481 = vpop.f32.mrf.mxu0
    %v1482 = vadd.f32 0.0, %v1481
    %1483 = vmatmul.f32.gmra.mxu0 %v992
    %v1484 = vpop.f32.mrf.mxu0
    %v1485 = vadd.f32 0.0, %v1484
    %1486 = vmatmul.f32.gmra.mxu0 %v996
    %v1487 = vpop.f32.mrf.mxu0
    %v1488 = vadd.f32 0.0, %v1487
    %1489 = vmatmul.f32.gmra.mxu0 %v1000
    %v1490 = vpop.f32.mrf.mxu0
    %v1491 = vadd.f32 0.0, %v1490
    %1492 = vmatmul.f32.gmra.mxu0 %v1004
    %v1493 = vpop.f32.mrf.mxu0
    %v1494 = vadd.f32 0.0, %v1493
    %1495 = vmatmul.f32.gmra.mxu0 %v1008
    %v1496 = vpop.f32.mrf.mxu0
    %v1497 = vadd.f32 0.0, %v1496
    %1498 = vmatmul.f32.gmra.mxu0 %v1012
    %v1499 = vpop.f32.mrf.mxu0
    %v1500 = vadd.f32 0.0, %v1499
    %1501 = vmatmul.f32.gmra.mxu0 %v1016
    %v1502 = vpop.f32.mrf.mxu0
    %v1503 = vadd.f32 0.0, %v1502
    %1504 = vmatmul.f32.gmra.mxu0 %v1020
    %v1505 = vpop.f32.mrf.mxu0
    %v1506 = vadd.f32 0.0, %v1505
    %1507 = vmatmul.f32.gmra.mxu0 %v1024
    %v1508 = vpop.f32.mrf.mxu0
    %v1509 = vadd.f32 0.0, %v1508
    %1510 = vmatmul.f32.gmra.mxu0 %v1028
    %v1511 = vpop.f32.mrf.mxu0
    %v1512 = vadd.f32 0.0, %v1511
    %1513 = vmatmul.f32.gmra.mxu0 %v1032
    %v1514 = vpop.f32.mrf.mxu0
    %v1515 = vadd.f32 0.0, %v1514
    %1516 = vmatmul.f32.gmra.mxu0 %v1036
    %v1517 = vpop.f32.mrf.mxu0
    %v1518 = vadd.f32 0.0, %v1517
    %1519 = vmatmul.f32.gmra.mxu0 %v1040
    %v1520 = vpop.f32.mrf.mxu0
    %v1521 = vadd.f32 0.0, %v1520
    %1522 = vmatmul.f32.gmra.mxu0 %v1044
    %v1523 = vpop.f32.mrf.mxu0
    %v1524 = vadd.f32 0.0, %v1523
    %1525 = vmatmul.f32.gmra.mxu0 %v1048
    %v1526 = vpop.f32.mrf.mxu0
    %v1527 = vadd.f32 0.0, %v1526
    %1528 = vmatmul.f32.gmra.mxu0 %v1052
    %v1529 = vpop.f32.mrf.mxu0
    %v1530 = vadd.f32 0.0, %v1529
    %1531 = vmatmul.f32.gmra.mxu0 %v1056
    %v1532 = vpop.f32.mrf.mxu0
    %v1533 = vadd.f32 0.0, %v1532
    %1534 = vmatmul.f32.gmra.mxu0 %v1060
    %v1535 = vpop.f32.mrf.mxu0
    %v1536 = vadd.f32 0.0, %v1535
    %1537 = vmatmul.f32.gmra.mxu0 %v1064
    %v1538 = vpop.f32.mrf.mxu0
    %v1539 = vadd.f32 0.0, %v1538
    %1540 = vmatmul.f32.gmra.mxu0 %v1068
    %v1541 = vpop.f32.mrf.mxu0
    %v1542 = vadd.f32 0.0, %v1541
    %1543 = vmatmul.f32.gmra.mxu0 %v1072
    %v1544 = vpop.f32.mrf.mxu0
    %v1545 = vadd.f32 0.0, %v1544
    %1546 = vmatmul.f32.gmra.mxu0 %v1076
    %v1547 = vpop.f32.mrf.mxu0
    %v1548 = vadd.f32 0.0, %v1547
    %1549 = vmatmul.f32.gmra.mxu0 %v1080
    %v1550 = vpop.f32.mrf.mxu0
    %v1551 = vadd.f32 0.0, %v1550
    %1552 = vmatmul.f32.gmra.mxu0 %v1084
    %v1553 = vpop.f32.mrf.mxu0
    %v1554 = vadd.f32 0.0, %v1553
    %1555 = vmatmul.f32.gmra.mxu0 %v1088
    %v1556 = vpop.f32.mrf.mxu0
    %v1557 = vadd.f32 0.0, %v1556
    %1558 = vmatmul.f32.gmra.mxu0 %v1092
    %v1559 = vpop.f32.mrf.mxu0
    %v1560 = vadd.f32 0.0, %v1559
    %1561 = vmatmul.f32.gmra.mxu0 %v1096
    %v1562 = vpop.f32.mrf.mxu0
    %v1563 = vadd.f32 0.0, %v1562
    %1564 = vmatmul.f32.gmra.mxu0 %v1100
    %v1565 = vpop.f32.mrf.mxu0
    %v1566 = vadd.f32 0.0, %v1565
    %1567 = vmatmul.f32.gmra.mxu0 %v1104
    %v1568 = vpop.f32.mrf.mxu0
    %v1569 = vadd.f32 0.0, %v1568
    %1570 = vmatmul.f32.gmra.mxu0 %v1108
    %v1571 = vpop.f32.mrf.mxu0
    %v1572 = vadd.f32 0.0, %v1571
    %1573 = vmatmul.f32.gmra.mxu0 %v1112
    %v1574 = vpop.f32.mrf.mxu0
    %v1575 = vadd.f32 0.0, %v1574
    %1576 = vmatmul.f32.gmra.mxu0 %v1116
    %v1577 = vpop.f32.mrf.mxu0
    %v1578 = vadd.f32 0.0, %v1577
    %1579 = vmatmul.f32.gmra.mxu0 %v1120
    %v1580 = vpop.f32.mrf.mxu0
    %v1581 = vadd.f32 0.0, %v1580
    %1582 = vmatmul.f32.gmra.mxu0 %v1124
    %v1583 = vpop.f32.mrf.mxu0
    %v1584 = vadd.f32 0.0, %v1583
    %1585 = vmatmul.f32.gmra.mxu0 %v1128
    %v1586 = vpop.f32.mrf.mxu0
    %v1587 = vadd.f32 0.0, %v1586
    %1588 = vmatmul.f32.gmra.mxu0 %v1132
    %v1589 = vpop.f32.mrf.mxu0
    %v1590 = vadd.f32 0.0, %v1589
    %1591 = vmatmul.f32.gmra.mxu0 %v1136
    %v1592 = vpop.f32.mrf.mxu0
    %v1593 = vadd.f32 0.0, %v1592
    %1594 = vmatmul.f32.gmra.mxu0 %v1140
    %v1595 = vpop.f32.mrf.mxu0
    %v1596 = vadd.f32 0.0, %v1595
    %1597 = vmatmul.f32.gmra.mxu0 %v1144
    %v1598 = vpop.f32.mrf.mxu0
    %v1599 = vadd.f32 0.0, %v1598
    %1600 = vmatmul.f32.gmra.mxu0 %v1148
    %v1601 = vpop.f32.mrf.mxu0
    %v1602 = vadd.f32 0.0, %v1601
    %1603 = vmatmul.f32.gmra.mxu0 %v1152
    %v1604 = vpop.f32.mrf.mxu0
    %v1605 = vadd.f32 0.0, %v1604
    %1606 = vmatmul.f32.gmra.mxu0 %v1156
    %v1607 = vpop.f32.mrf.mxu0
    %v1608 = vadd.f32 0.0, %v1607
    %1609 = vmatmul.f32.gmra.mxu0 %v1160
    %v1610 = vpop.f32.mrf.mxu0
    %v1611 = vadd.f32 0.0, %v1610
    %1612 = vdwg.mxu0
    %1613 = vmatpush.msra.mxu0 %v426
    %1614 = vmatpush.msra.mxu0 %v421
    %1615 = vmatpush.msra.mxu0 %v416
    %1616 = vmatpush.msra.mxu0 %v411
    %1617 = vmatpush.msra.mxu0 %v406
    %1618 = vmatpush.msra.mxu0 %v401
    %1619 = vmatpush.msra.mxu0 %v396
    %1620 = vmatpush.msra.mxu0 %v391
    %1621 = vmatpush.msra.mxu0 %v386
    %1622 = vmatpush.msra.mxu0 %v381
    %1623 = vmatpush.msra.mxu0 %v376
    %1624 = vmatpush.msra.mxu0 %v371
    %1625 = vmatpush.msra.mxu0 %v366
    %1626 = vmatpush.msra.mxu0 %v361
    %1627 = vmatpush.msra.mxu0 %v356
    %1628 = vmatpush.msra.mxu0 %v351
    %1629 = vmatmul.f32.gmra.mxu0 %v589
    %v1630 = vpop.f32.mrf.mxu0
    %v1631 = vadd.f32 %v1182, %v1630
    %1632 = vmatmul.f32.gmra.mxu0 %v593
    %v1633 = vpop.f32.mrf.mxu0
    %v1634 = vadd.f32 %v1185, %v1633
    %1635 = vmatmul.f32.gmra.mxu0 %v597
    %v1636 = vpop.f32.mrf.mxu0
    %v1637 = vadd.f32 %v1188, %v1636
    %1638 = vmatmul.f32.gmra.mxu0 %v601
    %v1639 = vpop.f32.mrf.mxu0
    %v1640 = vadd.f32 %v1191, %v1639
    %1641 = vmatmul.f32.gmra.mxu0 %v605
    %v1642 = vpop.f32.mrf.mxu0
    %v1643 = vadd.f32 %v1194, %v1642
    %1644 = vmatmul.f32.gmra.mxu0 %v609
    %v1645 = vpop.f32.mrf.mxu0
    %v1646 = vadd.f32 %v1197, %v1645
    %1647 = vmatmul.f32.gmra.mxu0 %v613
    %v1648 = vpop.f32.mrf.mxu0
    %v1649 = vadd.f32 %v1200, %v1648
    %1650 = vmatmul.f32.gmra.mxu0 %v617
    %v1651 = vpop.f32.mrf.mxu0
    %v1652 = vadd.f32 %v1203, %v1651
    %1653 = vmatmul.f32.gmra.mxu0 %v621
    %v1654 = vpop.f32.mrf.mxu0
    %v1655 = vadd.f32 %v1206, %v1654
    %1656 = vmatmul.f32.gmra.mxu0 %v625
    %v1657 = vpop.f32.mrf.mxu0
    %v1658 = vadd.f32 %v1209, %v1657
    %1659 = vmatmul.f32.gmra.mxu0 %v629
    %v1660 = vpop.f32.mrf.mxu0
    %v1661 = vadd.f32 %v1212, %v1660
    %1662 = vmatmul.f32.gmra.mxu0 %v633
    %v1663 = vpop.f32.mrf.mxu0
    %v1664 = vadd.f32 %v1215, %v1663
    %1665 = vmatmul.f32.gmra.mxu0 %v637
    %v1666 = vpop.f32.mrf.mxu0
    %v1667 = vadd.f32 %v1218, %v1666
    %1668 = vmatmul.f32.gmra.mxu0 %v641
    %v1669 = vpop.f32.mrf.mxu0
    %v1670 = vadd.f32 %v1221, %v1669
    %1671 = vmatmul.f32.gmra.mxu0 %v645
    %v1672 = vpop.f32.mrf.mxu0
    %v1673 = vadd.f32 %v1224, %v1672
    %1674 = vmatmul.f32.gmra.mxu0 %v649
    %v1675 = vpop.f32.mrf.mxu0
    %v1676 = vadd.f32 %v1227, %v1675
    %1677 = vmatmul.f32.gmra.mxu0 %v653
    %v1678 = vpop.f32.mrf.mxu0
    %v1679 = vadd.f32 %v1230, %v1678
    %1680 = vmatmul.f32.gmra.mxu0 %v657
    %v1681 = vpop.f32.mrf.mxu0
    %v1682 = vadd.f32 %v1233, %v1681
    %1683 = vmatmul.f32.gmra.mxu0 %v661
    %v1684 = vpop.f32.mrf.mxu0
    %v1685 = vadd.f32 %v1236, %v1684
    %1686 = vmatmul.f32.gmra.mxu0 %v665
    %v1687 = vpop.f32.mrf.mxu0
    %v1688 = vadd.f32 %v1239, %v1687
    %1689 = vmatmul.f32.gmra.mxu0 %v669
    %v1690 = vpop.f32.mrf.mxu0
    %v1691 = vadd.f32 %v1242, %v1690
    %1692 = vmatmul.f32.gmra.mxu0 %v673
    %v1693 = vpop.f32.mrf.mxu0
    %v1694 = vadd.f32 %v1245, %v1693
    %1695 = vmatmul.f32.gmra.mxu0 %v677
    %v1696 = vpop.f32.mrf.mxu0
    %v1697 = vadd.f32 %v1248, %v1696
    %1698 = vmatmul.f32.gmra.mxu0 %v681
    %v1699 = vpop.f32.mrf.mxu0
    %v1700 = vadd.f32 %v1251, %v1699
    %1701 = vmatmul.f32.gmra.mxu0 %v685
    %v1702 = vpop.f32.mrf.mxu0
    %v1703 = vadd.f32 %v1254, %v1702
    %1704 = vmatmul.f32.gmra.mxu0 %v689
    %v1705 = vpop.f32.mrf.mxu0
    %v1706 = vadd.f32 %v1257, %v1705
    %1707 = vmatmul.f32.gmra.mxu0 %v693
    %v1708 = vpop.f32.mrf.mxu0
    %v1709 = vadd.f32 %v1260, %v1708
    %1710 = vmatmul.f32.gmra.mxu0 %v697
    %v1711 = vpop.f32.mrf.mxu0
    %v1712 = vadd.f32 %v1263, %v1711
    %1713 = vmatmul.f32.gmra.mxu0 %v701
    %v1714 = vpop.f32.mrf.mxu0
    %v1715 = vadd.f32 %v1266, %v1714
    %1716 = vmatmul.f32.gmra.mxu0 %v705
    %v1717 = vpop.f32.mrf.mxu0
    %v1718 = vadd.f32 %v1269, %v1717
    %1719 = vmatmul.f32.gmra.mxu0 %v709
    %v1720 = vpop.f32.mrf.mxu0
    %v1721 = vadd.f32 %v1272, %v1720
    %1722 = vmatmul.f32.gmra.mxu0 %v713
    %v1723 = vpop.f32.mrf.mxu0
    %v1724 = vadd.f32 %v1275, %v1723
    %1725 = vmatmul.f32.gmra.mxu0 %v717
    %v1726 = vpop.f32.mrf.mxu0
    %v1727 = vadd.f32 %v1278, %v1726
    %1728 = vmatmul.f32.gmra.mxu0 %v721
    %v1729 = vpop.f32.mrf.mxu0
    %v1730 = vadd.f32 %v1281, %v1729
    %1731 = vmatmul.f32.gmra.mxu0 %v725
    %v1732 = vpop.f32.mrf.mxu0
    %v1733 = vadd.f32 %v1284, %v1732
    %1734 = vmatmul.f32.gmra.mxu0 %v729
    %v1735 = vpop.f32.mrf.mxu0
    %v1736 = vadd.f32 %v1287, %v1735
    %1737 = vmatmul.f32.gmra.mxu0 %v733
    %v1738 = vpop.f32.mrf.mxu0
    %v1739 = vadd.f32 %v1290, %v1738
    %1740 = vmatmul.f32.gmra.mxu0 %v737
    %v1741 = vpop.f32.mrf.mxu0
    %v1742 = vadd.f32 %v1293, %v1741
    %1743 = vmatmul.f32.gmra.mxu0 %v741
    %v1744 = vpop.f32.mrf.mxu0
    %v1745 = vadd.f32 %v1296, %v1744
    %1746 = vmatmul.f32.gmra.mxu0 %v745
    %v1747 = vpop.f32.mrf.mxu0
    %v1748 = vadd.f32 %v1299, %v1747
    %1749 = vmatmul.f32.gmra.mxu0 %v749
    %v1750 = vpop.f32.mrf.mxu0
    %v1751 = vadd.f32 %v1302, %v1750
    %1752 = vmatmul.f32.gmra.mxu0 %v753
    %v1753 = vpop.f32.mrf.mxu0
    %v1754 = vadd.f32 %v1305, %v1753
    %1755 = vmatmul.f32.gmra.mxu0 %v757
    %v1756 = vpop.f32.mrf.mxu0
    %v1757 = vadd.f32 %v1308, %v1756
    %1758 = vmatmul.f32.gmra.mxu0 %v761
    %v1759 = vpop.f32.mrf.mxu0
    %v1760 = vadd.f32 %v1311, %v1759
    %1761 = vmatmul.f32.gmra.mxu0 %v765
    %v1762 = vpop.f32.mrf.mxu0
    %v1763 = vadd.f32 %v1314, %v1762
    %1764 = vmatmul.f32.gmra.mxu0 %v769
    %v1765 = vpop.f32.mrf.mxu0
    %v1766 = vadd.f32 %v1317, %v1765
    %1767 = vmatmul.f32.gmra.mxu0 %v773
    %v1768 = vpop.f32.mrf.mxu0
    %v1769 = vadd.f32 %v1320, %v1768
    %1770 = vmatmul.f32.gmra.mxu0 %v777
    %v1771 = vpop.f32.mrf.mxu0
    %v1772 = vadd.f32 %v1323, %v1771
    %1773 = vmatmul.f32.gmra.mxu0 %v781
    %v1774 = vpop.f32.mrf.mxu0
    %v1775 = vadd.f32 %v1326, %v1774
    %1776 = vmatmul.f32.gmra.mxu0 %v785
    %v1777 = vpop.f32.mrf.mxu0
    %v1778 = vadd.f32 %v1329, %v1777
    %1779 = vmatmul.f32.gmra.mxu0 %v789
    %v1780 = vpop.f32.mrf.mxu0
    %v1781 = vadd.f32 %v1332, %v1780
    %1782 = vmatmul.f32.gmra.mxu0 %v793
    %v1783 = vpop.f32.mrf.mxu0
    %v1784 = vadd.f32 %v1335, %v1783
    %1785 = vmatmul.f32.gmra.mxu0 %v797
    %v1786 = vpop.f32.mrf.mxu0
    %v1787 = vadd.f32 %v1338, %v1786
    %1788 = vmatmul.f32.gmra.mxu0 %v801
    %v1789 = vpop.f32.mrf.mxu0
    %v1790 = vadd.f32 %v1341, %v1789
    %1791 = vmatmul.f32.gmra.mxu0 %v805
    %v1792 = vpop.f32.mrf.mxu0
    %v1793 = vadd.f32 %v1344, %v1792
    %1794 = vmatmul.f32.gmra.mxu0 %v809
    %v1795 = vpop.f32.mrf.mxu0
    %v1796 = vadd.f32 %v1347, %v1795
    %1797 = vmatmul.f32.gmra.mxu0 %v813
    %v1798 = vpop.f32.mrf.mxu0
    %v1799 = vadd.f32 %v1350, %v1798
    %1800 = vmatmul.f32.gmra.mxu0 %v817
    %v1801 = vpop.f32.mrf.mxu0
    %v1802 = vadd.f32 %v1353, %v1801
    %1803 = vmatmul.f32.gmra.mxu0 %v821
    %v1804 = vpop.f32.mrf.mxu0
    %v1805 = vadd.f32 %v1356, %v1804
    %1806 = vmatmul.f32.gmra.mxu0 %v825
    %v1807 = vpop.f32.mrf.mxu0
    %v1808 = vadd.f32 %v1359, %v1807
    %1809 = vmatmul.f32.gmra.mxu0 %v829
    %v1810 = vpop.f32.mrf.mxu0
    %v1811 = vadd.f32 %v1362, %v1810
    %1812 = vmatmul.f32.gmra.mxu0 %v833
    %v1813 = vpop.f32.mrf.mxu0
    %v1814 = vadd.f32 %v1365, %v1813
    %1815 = vmatmul.f32.gmra.mxu0 %v837
    %v1816 = vpop.f32.mrf.mxu0
    %v1817 = vadd.f32 %v1368, %v1816
    %1818 = vmatmul.f32.gmra.mxu0 %v841
    %v1819 = vpop.f32.mrf.mxu0
    %v1820 = vadd.f32 %v1371, %v1819
    %1821 = vmatmul.f32.gmra.mxu0 %v845
    %v1822 = vpop.f32.mrf.mxu0
    %v1823 = vadd.f32 %v1374, %v1822
    %1824 = vmatmul.f32.gmra.mxu0 %v849
    %v1825 = vpop.f32.mrf.mxu0
    %v1826 = vadd.f32 %v1377, %v1825
    %1827 = vmatmul.f32.gmra.mxu0 %v853
    %v1828 = vpop.f32.mrf.mxu0
    %v1829 = vadd.f32 %v1380, %v1828
    %1830 = vmatmul.f32.gmra.mxu0 %v857
    %v1831 = vpop.f32.mrf.mxu0
    %v1832 = vadd.f32 %v1383, %v1831
    %1833 = vmatmul.f32.gmra.mxu0 %v861
    %v1834 = vpop.f32.mrf.mxu0
    %v1835 = vadd.f32 %v1386, %v1834
    %1836 = vmatmul.f32.gmra.mxu0 %v865
    %v1837 = vpop.f32.mrf.mxu0
    %v1838 = vadd.f32 %v1389, %v1837
    %1839 = vmatmul.f32.gmra.mxu0 %v869
    %v1840 = vpop.f32.mrf.mxu0
    %v1841 = vadd.f32 %v1392, %v1840
    %1842 = vmatmul.f32.gmra.mxu0 %v873
    %v1843 = vpop.f32.mrf.mxu0
    %v1844 = vadd.f32 %v1395, %v1843
    %1845 = vmatmul.f32.gmra.mxu0 %v877
    %v1846 = vpop.f32.mrf.mxu0
    %v1847 = vadd.f32 %v1398, %v1846
    %1848 = vmatmul.f32.gmra.mxu0 %v881
    %v1849 = vpop.f32.mrf.mxu0
    %v1850 = vadd.f32 %v1401, %v1849
    %1851 = vmatmul.f32.gmra.mxu0 %v885
    %v1852 = vpop.f32.mrf.mxu0
    %v1853 = vadd.f32 %v1404, %v1852
    %1854 = vmatmul.f32.gmra.mxu0 %v889
    %v1855 = vpop.f32.mrf.mxu0
    %v1856 = vadd.f32 %v1407, %v1855
    %1857 = vmatmul.f32.gmra.mxu0 %v893
    %v1858 = vpop.f32.mrf.mxu0
    %v1859 = vadd.f32 %v1410, %v1858
    %1860 = vmatmul.f32.gmra.mxu0 %v897
    %v1861 = vpop.f32.mrf.mxu0
    %v1862 = vadd.f32 %v1413, %v1861
    %1863 = vmatmul.f32.gmra.mxu0 %v901
    %v1864 = vpop.f32.mrf.mxu0
    %v1865 = vadd.f32 %v1416, %v1864
    %1866 = vmatmul.f32.gmra.mxu0 %v905
    %v1867 = vpop.f32.mrf.mxu0
    %v1868 = vadd.f32 %v1419, %v1867
    %1869 = vmatmul.f32.gmra.mxu0 %v909
    %v1870 = vpop.f32.mrf.mxu0
    %v1871 = vadd.f32 %v1422, %v1870
    %1872 = vmatmul.f32.gmra.mxu0 %v913
    %v1873 = vpop.f32.mrf.mxu0
    %v1874 = vadd.f32 %v1425, %v1873
    %1875 = vmatmul.f32.gmra.mxu0 %v917
    %v1876 = vpop.f32.mrf.mxu0
    %v1877 = vadd.f32 %v1428, %v1876
    %1878 = vmatmul.f32.gmra.mxu0 %v921
    %v1879 = vpop.f32.mrf.mxu0
    %v1880 = vadd.f32 %v1431, %v1879
    %1881 = vmatmul.f32.gmra.mxu0 %v925
    %v1882 = vpop.f32.mrf.mxu0
    %v1883 = vadd.f32 %v1434, %v1882
    %1884 = vmatmul.f32.gmra.mxu0 %v929
    %v1885 = vpop.f32.mrf.mxu0
    %v1886 = vadd.f32 %v1437, %v1885
    %1887 = vmatmul.f32.gmra.mxu0 %v933
    %v1888 = vpop.f32.mrf.mxu0
    %v1889 = vadd.f32 %v1440, %v1888
    %1890 = vmatmul.f32.gmra.mxu0 %v937
    %v1891 = vpop.f32.mrf.mxu0
    %v1892 = vadd.f32 %v1443, %v1891
    %1893 = vmatmul.f32.gmra.mxu0 %v941
    %v1894 = vpop.f32.mrf.mxu0
    %v1895 = vadd.f32 %v1446, %v1894
    %1896 = vmatmul.f32.gmra.mxu0 %v945
    %v1897 = vpop.f32.mrf.mxu0
    %v1898 = vadd.f32 %v1449, %v1897
    %1899 = vmatmul.f32.gmra.mxu0 %v949
    %v1900 = vpop.f32.mrf.mxu0
    %v1901 = vadd.f32 %v1452, %v1900
    %1902 = vmatmul.f32.gmra.mxu0 %v953
    %v1903 = vpop.f32.mrf.mxu0
    %v1904 = vadd.f32 %v1455, %v1903
    %1905 = vmatmul.f32.gmra.mxu0 %v957
    %v1906 = vpop.f32.mrf.mxu0
    %v1907 = vadd.f32 %v1458, %v1906
    %1908 = vmatmul.f32.gmra.mxu0 %v961
    %v1909 = vpop.f32.mrf.mxu0
    %v1910 = vadd.f32 %v1461, %v1909
    %1911 = vmatmul.f32.gmra.mxu0 %v965
    %v1912 = vpop.f32.mrf.mxu0
    %v1913 = vadd.f32 %v1464, %v1912
    %1914 = vmatmul.f32.gmra.mxu0 %v969
    %v1915 = vpop.f32.mrf.mxu0
    %v1916 = vadd.f32 %v1467, %v1915
    %1917 = vmatmul.f32.gmra.mxu0 %v973
    %v1918 = vpop.f32.mrf.mxu0
    %v1919 = vadd.f32 %v1470, %v1918
    %1920 = vmatmul.f32.gmra.mxu0 %v977
    %v1921 = vpop.f32.mrf.mxu0
    %v1922 = vadd.f32 %v1473, %v1921
    %1923 = vmatmul.f32.gmra.mxu0 %v981
    %v1924 = vpop.f32.mrf.mxu0
    %v1925 = vadd.f32 %v1476, %v1924
    %1926 = vmatmul.f32.gmra.mxu0 %v985
    %v1927 = vpop.f32.mrf.mxu0
    %v1928 = vadd.f32 %v1479, %v1927
    %1929 = vmatmul.f32.gmra.mxu0 %v989
    %v1930 = vpop.f32.mrf.mxu0
    %v1931 = vadd.f32 %v1482, %v1930
    %1932 = vmatmul.f32.gmra.mxu0 %v993
    %v1933 = vpop.f32.mrf.mxu0
    %v1934 = vadd.f32 %v1485, %v1933
    %1935 = vmatmul.f32.gmra.mxu0 %v997
    %v1936 = vpop.f32.mrf.mxu0
    %v1937 = vadd.f32 %v1488, %v1936
    %1938 = vmatmul.f32.gmra.mxu0 %v1001
    %v1939 = vpop.f32.mrf.mxu0
    %v1940 = vadd.f32 %v1491, %v1939
    %1941 = vmatmul.f32.gmra.mxu0 %v1005
    %v1942 = vpop.f32.mrf.mxu0
    %v1943 = vadd.f32 %v1494, %v1942
    %1944 = vmatmul.f32.gmra.mxu0 %v1009
    %v1945 = vpop.f32.mrf.mxu0
    %v1946 = vadd.f32 %v1497, %v1945
    %1947 = vmatmul.f32.gmra.mxu0 %v1013
    %v1948 = vpop.f32.mrf.mxu0
    %v1949 = vadd.f32 %v1500, %v1948
    %1950 = vmatmul.f32.gmra.mxu0 %v1017
    %v1951 = vpop.f32.mrf.mxu0
    %v1952 = vadd.f32 %v1503, %v1951
    %1953 = vmatmul.f32.gmra.mxu0 %v1021
    %v1954 = vpop.f32.mrf.mxu0
    %v1955 = vadd.f32 %v1506, %v1954
    %1956 = vmatmul.f32.gmra.mxu0 %v1025
    %v1957 = vpop.f32.mrf.mxu0
    %v1958 = vadd.f32 %v1509, %v1957
    %1959 = vmatmul.f32.gmra.mxu0 %v1029
    %v1960 = vpop.f32.mrf.mxu0
    %v1961 = vadd.f32 %v1512, %v1960
    %1962 = vmatmul.f32.gmra.mxu0 %v1033
    %v1963 = vpop.f32.mrf.mxu0
    %v1964 = vadd.f32 %v1515, %v1963
    %1965 = vmatmul.f32.gmra.mxu0 %v1037
    %v1966 = vpop.f32.mrf.mxu0
    %v1967 = vadd.f32 %v1518, %v1966
    %1968 = vmatmul.f32.gmra.mxu0 %v1041
    %v1969 = vpop.f32.mrf.mxu0
    %v1970 = vadd.f32 %v1521, %v1969
    %1971 = vmatmul.f32.gmra.mxu0 %v1045
    %v1972 = vpop.f32.mrf.mxu0
    %v1973 = vadd.f32 %v1524, %v1972
    %1974 = vmatmul.f32.gmra.mxu0 %v1049
    %v1975 = vpop.f32.mrf.mxu0
    %v1976 = vadd.f32 %v1527, %v1975
    %1977 = vmatmul.f32.gmra.mxu0 %v1053
    %v1978 = vpop.f32.mrf.mxu0
    %v1979 = vadd.f32 %v1530, %v1978
    %1980 = vmatmul.f32.gmra.mxu0 %v1057
    %v1981 = vpop.f32.mrf.mxu0
    %v1982 = vadd.f32 %v1533, %v1981
    %1983 = vmatmul.f32.gmra.mxu0 %v1061
    %v1984 = vpop.f32.mrf.mxu0
    %v1985 = vadd.f32 %v1536, %v1984
    %1986 = vmatmul.f32.gmra.mxu0 %v1065
    %v1987 = vpop.f32.mrf.mxu0
    %v1988 = vadd.f32 %v1539, %v1987
    %1989 = vmatmul.f32.gmra.mxu0 %v1069
    %v1990 = vpop.f32.mrf.mxu0
    %v1991 = vadd.f32 %v1542, %v1990
    %1992 = vmatmul.f32.gmra.mxu0 %v1073
    %v1993 = vpop.f32.mrf.mxu0
    %v1994 = vadd.f32 %v1545, %v1993
    %1995 = vmatmul.f32.gmra.mxu0 %v1077
    %v1996 = vpop.f32.mrf.mxu0
    %v1997 = vadd.f32 %v1548, %v1996
    %1998 = vmatmul.f32.gmra.mxu0 %v1081
    %v1999 = vpop.f32.mrf.mxu0
    %v2000 = vadd.f32 %v1551, %v1999
    %2001 = vmatmul.f32.gmra.mxu0 %v1085
    %v2002 = vpop.f32.mrf.mxu0
    %v2003 = vadd.f32 %v1554, %v2002
    %2004 = vmatmul.f32.gmra.mxu0 %v1089
    %v2005 = vpop.f32.mrf.mxu0
    %v2006 = vadd.f32 %v1557, %v2005
    %2007 = vmatmul.f32.gmra.mxu0 %v1093
    %v2008 = vpop.f32.mrf.mxu0
    %v2009 = vadd.f32 %v1560, %v2008
    %2010 = vmatmul.f32.gmra.mxu0 %v1097
    %v2011 = vpop.f32.mrf.mxu0
    %v2012 = vadd.f32 %v1563, %v2011
    %2013 = vmatmul.f32.gmra.mxu0 %v1101
    %v2014 = vpop.f32.mrf.mxu0
    %v2015 = vadd.f32 %v1566, %v2014
    %2016 = vmatmul.f32.gmra.mxu0 %v1105
    %v2017 = vpop.f32.mrf.mxu0
    %v2018 = vadd.f32 %v1569, %v2017
    %2019 = vmatmul.f32.gmra.mxu0 %v1109
    %v2020 = vpop.f32.mrf.mxu0
    %v2021 = vadd.f32 %v1572, %v2020
    %2022 = vmatmul.f32.gmra.mxu0 %v1113
    %v2023 = vpop.f32.mrf.mxu0
    %v2024 = vadd.f32 %v1575, %v2023
    %2025 = vmatmul.f32.gmra.mxu0 %v1117
    %v2026 = vpop.f32.mrf.mxu0
    %v2027 = vadd.f32 %v1578, %v2026
    %2028 = vmatmul.f32.gmra.mxu0 %v1121
    %v2029 = vpop.f32.mrf.mxu0
    %v2030 = vadd.f32 %v1581, %v2029
    %2031 = vmatmul.f32.gmra.mxu0 %v1125
    %v2032 = vpop.f32.mrf.mxu0
    %v2033 = vadd.f32 %v1584, %v2032
    %2034 = vmatmul.f32.gmra.mxu0 %v1129
    %v2035 = vpop.f32.mrf.mxu0
    %v2036 = vadd.f32 %v1587, %v2035
    %2037 = vmatmul.f32.gmra.mxu0 %v1133
    %v2038 = vpop.f32.mrf.mxu0
    %v2039 = vadd.f32 %v1590, %v2038
    %2040 = vmatmul.f32.gmra.mxu0 %v1137
    %v2041 = vpop.f32.mrf.mxu0
    %v2042 = vadd.f32 %v1593, %v2041
    %2043 = vmatmul.f32.gmra.mxu0 %v1141
    %v2044 = vpop.f32.mrf.mxu0
    %v2045 = vadd.f32 %v1596, %v2044
    %2046 = vmatmul.f32.gmra.mxu0 %v1145
    %v2047 = vpop.f32.mrf.mxu0
    %v2048 = vadd.f32 %v1599, %v2047
    %2049 = vmatmul.f32.gmra.mxu0 %v1149
    %v2050 = vpop.f32.mrf.mxu0
    %v2051 = vadd.f32 %v1602, %v2050
    %2052 = vmatmul.f32.gmra.mxu0 %v1153
    %v2053 = vpop.f32.mrf.mxu0
    %v2054 = vadd.f32 %v1605, %v2053
    %2055 = vmatmul.f32.gmra.mxu0 %v1157
    %v2056 = vpop.f32.mrf.mxu0
    %v2057 = vadd.f32 %v1608, %v2056
    %2058 = vmatmul.f32.gmra.mxu0 %v1161
    %v2059 = vpop.f32.mrf.mxu0
    %v2060 = vadd.f32 %v1611, %v2059
    %2061 = vdwg.mxu0
    %2062 = vmatpush.msra.mxu0 %v506
    %2063 = vmatpush.msra.mxu0 %v501
    %2064 = vmatpush.msra.mxu0 %v496
    %2065 = vmatpush.msra.mxu0 %v491
    %2066 = vmatpush.msra.mxu0 %v486
    %2067 = vmatpush.msra.mxu0 %v481
    %2068 = vmatpush.msra.mxu0 %v476
    %2069 = vmatpush.msra.mxu0 %v471
    %2070 = vmatpush.msra.mxu0 %v466
    %2071 = vmatpush.msra.mxu0 %v461
    %2072 = vmatpush.msra.mxu0 %v456
    %2073 = vmatpush.msra.mxu0 %v451
    %2074 = vmatpush.msra.mxu0 %v446
    %2075 = vmatpush.msra.mxu0 %v441
    %2076 = vmatpush.msra.mxu0 %v436
    %2077 = vmatpush.msra.mxu0 %v431
    %2078 = vmatmul.f32.gmra.mxu0 %v590
    %v2079 = vpop.f32.mrf.mxu0
    %v2080 = vadd.f32 %v1631, %v2079
    %2081 = vmatmul.f32.gmra.mxu0 %v594
    %v2082 = vpop.f32.mrf.mxu0
    %v2083 = vadd.f32 %v1634, %v2082
    %2084 = vmatmul.f32.gmra.mxu0 %v598
    %v2085 = vpop.f32.mrf.mxu0
    %v2086 = vadd.f32 %v1637, %v2085
    %2087 = vmatmul.f32.gmra.mxu0 %v602
    %v2088 = vpop.f32.mrf.mxu0
    %v2089 = vadd.f32 %v1640, %v2088
    %2090 = vmatmul.f32.gmra.mxu0 %v606
    %v2091 = vpop.f32.mrf.mxu0
    %v2092 = vadd.f32 %v1643, %v2091
    %2093 = vmatmul.f32.gmra.mxu0 %v610
    %v2094 = vpop.f32.mrf.mxu0
    %v2095 = vadd.f32 %v1646, %v2094
    %2096 = vmatmul.f32.gmra.mxu0 %v614
    %v2097 = vpop.f32.mrf.mxu0
    %v2098 = vadd.f32 %v1649, %v2097
    %2099 = vmatmul.f32.gmra.mxu0 %v618
    %v2100 = vpop.f32.mrf.mxu0
    %v2101 = vadd.f32 %v1652, %v2100
    %2102 = vmatmul.f32.gmra.mxu0 %v622
    %v2103 = vpop.f32.mrf.mxu0
    %v2104 = vadd.f32 %v1655, %v2103
    %2105 = vmatmul.f32.gmra.mxu0 %v626
    %v2106 = vpop.f32.mrf.mxu0
    %v2107 = vadd.f32 %v1658, %v2106
    %2108 = vmatmul.f32.gmra.mxu0 %v630
    %v2109 = vpop.f32.mrf.mxu0
    %v2110 = vadd.f32 %v1661, %v2109
    %2111 = vmatmul.f32.gmra.mxu0 %v634
    %v2112 = vpop.f32.mrf.mxu0
    %v2113 = vadd.f32 %v1664, %v2112
    %2114 = vmatmul.f32.gmra.mxu0 %v638
    %v2115 = vpop.f32.mrf.mxu0
    %v2116 = vadd.f32 %v1667, %v2115
    %2117 = vmatmul.f32.gmra.mxu0 %v642
    %v2118 = vpop.f32.mrf.mxu0
    %v2119 = vadd.f32 %v1670, %v2118
    %2120 = vmatmul.f32.gmra.mxu0 %v646
    %v2121 = vpop.f32.mrf.mxu0
    %v2122 = vadd.f32 %v1673, %v2121
    %2123 = vmatmul.f32.gmra.mxu0 %v650
    %v2124 = vpop.f32.mrf.mxu0
    %v2125 = vadd.f32 %v1676, %v2124
    %2126 = vmatmul.f32.gmra.mxu0 %v654
    %v2127 = vpop.f32.mrf.mxu0
    %v2128 = vadd.f32 %v1679, %v2127
    %2129 = vmatmul.f32.gmra.mxu0 %v658
    %v2130 = vpop.f32.mrf.mxu0
    %v2131 = vadd.f32 %v1682, %v2130
    %2132 = vmatmul.f32.gmra.mxu0 %v662
    %v2133 = vpop.f32.mrf.mxu0
    %v2134 = vadd.f32 %v1685, %v2133
    %2135 = vmatmul.f32.gmra.mxu0 %v666
    %v2136 = vpop.f32.mrf.mxu0
    %v2137 = vadd.f32 %v1688, %v2136
    %2138 = vmatmul.f32.gmra.mxu0 %v670
    %v2139 = vpop.f32.mrf.mxu0
    %v2140 = vadd.f32 %v1691, %v2139
    %2141 = vmatmul.f32.gmra.mxu0 %v674
    %v2142 = vpop.f32.mrf.mxu0
    %v2143 = vadd.f32 %v1694, %v2142
    %2144 = vmatmul.f32.gmra.mxu0 %v678
    %v2145 = vpop.f32.mrf.mxu0
    %v2146 = vadd.f32 %v1697, %v2145
    %2147 = vmatmul.f32.gmra.mxu0 %v682
    %v2148 = vpop.f32.mrf.mxu0
    %v2149 = vadd.f32 %v1700, %v2148
    %2150 = vmatmul.f32.gmra.mxu0 %v686
    %v2151 = vpop.f32.mrf.mxu0
    %v2152 = vadd.f32 %v1703, %v2151
    %2153 = vmatmul.f32.gmra.mxu0 %v690
    %v2154 = vpop.f32.mrf.mxu0
    %v2155 = vadd.f32 %v1706, %v2154
    %2156 = vmatmul.f32.gmra.mxu0 %v694
    %v2157 = vpop.f32.mrf.mxu0
    %v2158 = vadd.f32 %v1709, %v2157
    %2159 = vmatmul.f32.gmra.mxu0 %v698
    %v2160 = vpop.f32.mrf.mxu0
    %v2161 = vadd.f32 %v1712, %v2160
    %2162 = vmatmul.f32.gmra.mxu0 %v702
    %v2163 = vpop.f32.mrf.mxu0
    %v2164 = vadd.f32 %v1715, %v2163
    %2165 = vmatmul.f32.gmra.mxu0 %v706
    %v2166 = vpop.f32.mrf.mxu0
    %v2167 = vadd.f32 %v1718, %v2166
    %2168 = vmatmul.f32.gmra.mxu0 %v710
    %v2169 = vpop.f32.mrf.mxu0
    %v2170 = vadd.f32 %v1721, %v2169
    %2171 = vmatmul.f32.gmra.mxu0 %v714
    %v2172 = vpop.f32.mrf.mxu0
    %v2173 = vadd.f32 %v1724, %v2172
    %2174 = vmatmul.f32.gmra.mxu0 %v718
    %v2175 = vpop.f32.mrf.mxu0
    %v2176 = vadd.f32 %v1727, %v2175
    %2177 = vmatmul.f32.gmra.mxu0 %v722
    %v2178 = vpop.f32.mrf.mxu0
    %v2179 = vadd.f32 %v1730, %v2178
    %2180 = vmatmul.f32.gmra.mxu0 %v726
    %v2181 = vpop.f32.mrf.mxu0
    %v2182 = vadd.f32 %v1733, %v2181
    %2183 = vmatmul.f32.gmra.mxu0 %v730
    %v2184 = vpop.f32.mrf.mxu0
    %v2185 = vadd.f32 %v1736, %v2184
    %2186 = vmatmul.f32.gmra.mxu0 %v734
    %v2187 = vpop.f32.mrf.mxu0
    %v2188 = vadd.f32 %v1739, %v2187
    %2189 = vmatmul.f32.gmra.mxu0 %v738
    %v2190 = vpop.f32.mrf.mxu0
    %v2191 = vadd.f32 %v1742, %v2190
    %2192 = vmatmul.f32.gmra.mxu0 %v742
    %v2193 = vpop.f32.mrf.mxu0
    %v2194 = vadd.f32 %v1745, %v2193
    %2195 = vmatmul.f32.gmra.mxu0 %v746
    %v2196 = vpop.f32.mrf.mxu0
    %v2197 = vadd.f32 %v1748, %v2196
    %2198 = vmatmul.f32.gmra.mxu0 %v750
    %v2199 = vpop.f32.mrf.mxu0
    %v2200 = vadd.f32 %v1751, %v2199
    %2201 = vmatmul.f32.gmra.mxu0 %v754
    %v2202 = vpop.f32.mrf.mxu0
    %v2203 = vadd.f32 %v1754, %v2202
    %2204 = vmatmul.f32.gmra.mxu0 %v758
    %v2205 = vpop.f32.mrf.mxu0
    %v2206 = vadd.f32 %v1757, %v2205
    %2207 = vmatmul.f32.gmra.mxu0 %v762
    %v2208 = vpop.f32.mrf.mxu0
    %v2209 = vadd.f32 %v1760, %v2208
    %2210 = vmatmul.f32.gmra.mxu0 %v766
    %v2211 = vpop.f32.mrf.mxu0
    %v2212 = vadd.f32 %v1763, %v2211
    %2213 = vmatmul.f32.gmra.mxu0 %v770
    %v2214 = vpop.f32.mrf.mxu0
    %v2215 = vadd.f32 %v1766, %v2214
    %2216 = vmatmul.f32.gmra.mxu0 %v774
    %v2217 = vpop.f32.mrf.mxu0
    %v2218 = vadd.f32 %v1769, %v2217
    %2219 = vmatmul.f32.gmra.mxu0 %v778
    %v2220 = vpop.f32.mrf.mxu0
    %v2221 = vadd.f32 %v1772, %v2220
    %2222 = vmatmul.f32.gmra.mxu0 %v782
    %v2223 = vpop.f32.mrf.mxu0
    %v2224 = vadd.f32 %v1775, %v2223
    %2225 = vmatmul.f32.gmra.mxu0 %v786
    %v2226 = vpop.f32.mrf.mxu0
    %v2227 = vadd.f32 %v1778, %v2226
    %2228 = vmatmul.f32.gmra.mxu0 %v790
    %v2229 = vpop.f32.mrf.mxu0
    %v2230 = vadd.f32 %v1781, %v2229
    %2231 = vmatmul.f32.gmra.mxu0 %v794
    %v2232 = vpop.f32.mrf.mxu0
    %v2233 = vadd.f32 %v1784, %v2232
    %2234 = vmatmul.f32.gmra.mxu0 %v798
    %v2235 = vpop.f32.mrf.mxu0
    %v2236 = vadd.f32 %v1787, %v2235
    %2237 = vmatmul.f32.gmra.mxu0 %v802
    %v2238 = vpop.f32.mrf.mxu0
    %v2239 = vadd.f32 %v1790, %v2238
    %2240 = vmatmul.f32.gmra.mxu0 %v806
    %v2241 = vpop.f32.mrf.mxu0
    %v2242 = vadd.f32 %v1793, %v2241
    %2243 = vmatmul.f32.gmra.mxu0 %v810
    %v2244 = vpop.f32.mrf.mxu0
    %v2245 = vadd.f32 %v1796, %v2244
    %2246 = vmatmul.f32.gmra.mxu0 %v814
    %v2247 = vpop.f32.mrf.mxu0
    %v2248 = vadd.f32 %v1799, %v2247
    %2249 = vmatmul.f32.gmra.mxu0 %v818
    %v2250 = vpop.f32.mrf.mxu0
    %v2251 = vadd.f32 %v1802, %v2250
    %2252 = vmatmul.f32.gmra.mxu0 %v822
    %v2253 = vpop.f32.mrf.mxu0
    %v2254 = vadd.f32 %v1805, %v2253
    %2255 = vmatmul.f32.gmra.mxu0 %v826
    %v2256 = vpop.f32.mrf.mxu0
    %v2257 = vadd.f32 %v1808, %v2256
    %2258 = vmatmul.f32.gmra.mxu0 %v830
    %v2259 = vpop.f32.mrf.mxu0
    %v2260 = vadd.f32 %v1811, %v2259
    %2261 = vmatmul.f32.gmra.mxu0 %v834
    %v2262 = vpop.f32.mrf.mxu0
    %v2263 = vadd.f32 %v1814, %v2262
    %2264 = vmatmul.f32.gmra.mxu0 %v838
    %v2265 = vpop.f32.mrf.mxu0
    %v2266 = vadd.f32 %v1817, %v2265
    %2267 = vmatmul.f32.gmra.mxu0 %v842
    %v2268 = vpop.f32.mrf.mxu0
    %v2269 = vadd.f32 %v1820, %v2268
    %2270 = vmatmul.f32.gmra.mxu0 %v846
    %v2271 = vpop.f32.mrf.mxu0
    %v2272 = vadd.f32 %v1823, %v2271
    %2273 = vmatmul.f32.gmra.mxu0 %v850
    %v2274 = vpop.f32.mrf.mxu0
    %v2275 = vadd.f32 %v1826, %v2274
    %2276 = vmatmul.f32.gmra.mxu0 %v854
    %v2277 = vpop.f32.mrf.mxu0
    %v2278 = vadd.f32 %v1829, %v2277
    %2279 = vmatmul.f32.gmra.mxu0 %v858
    %v2280 = vpop.f32.mrf.mxu0
    %v2281 = vadd.f32 %v1832, %v2280
    %2282 = vmatmul.f32.gmra.mxu0 %v862
    %v2283 = vpop.f32.mrf.mxu0
    %v2284 = vadd.f32 %v1835, %v2283
    %2285 = vmatmul.f32.gmra.mxu0 %v866
    %v2286 = vpop.f32.mrf.mxu0
    %v2287 = vadd.f32 %v1838, %v2286
    %2288 = vmatmul.f32.gmra.mxu0 %v870
    %v2289 = vpop.f32.mrf.mxu0
    %v2290 = vadd.f32 %v1841, %v2289
    %2291 = vmatmul.f32.gmra.mxu0 %v874
    %v2292 = vpop.f32.mrf.mxu0
    %v2293 = vadd.f32 %v1844, %v2292
    %2294 = vmatmul.f32.gmra.mxu0 %v878
    %v2295 = vpop.f32.mrf.mxu0
    %v2296 = vadd.f32 %v1847, %v2295
    %2297 = vmatmul.f32.gmra.mxu0 %v882
    %v2298 = vpop.f32.mrf.mxu0
    %v2299 = vadd.f32 %v1850, %v2298
    %2300 = vmatmul.f32.gmra.mxu0 %v886
    %v2301 = vpop.f32.mrf.mxu0
    %v2302 = vadd.f32 %v1853, %v2301
    %2303 = vmatmul.f32.gmra.mxu0 %v890
    %v2304 = vpop.f32.mrf.mxu0
    %v2305 = vadd.f32 %v1856, %v2304
    %2306 = vmatmul.f32.gmra.mxu0 %v894
    %v2307 = vpop.f32.mrf.mxu0
    %v2308 = vadd.f32 %v1859, %v2307
    %2309 = vmatmul.f32.gmra.mxu0 %v898
    %v2310 = vpop.f32.mrf.mxu0
    %v2311 = vadd.f32 %v1862, %v2310
    %2312 = vmatmul.f32.gmra.mxu0 %v902
    %v2313 = vpop.f32.mrf.mxu0
    %v2314 = vadd.f32 %v1865, %v2313
    %2315 = vmatmul.f32.gmra.mxu0 %v906
    %v2316 = vpop.f32.mrf.mxu0
    %v2317 = vadd.f32 %v1868, %v2316
    %2318 = vmatmul.f32.gmra.mxu0 %v910
    %v2319 = vpop.f32.mrf.mxu0
    %v2320 = vadd.f32 %v1871, %v2319
    %2321 = vmatmul.f32.gmra.mxu0 %v914
    %v2322 = vpop.f32.mrf.mxu0
    %v2323 = vadd.f32 %v1874, %v2322
    %2324 = vmatmul.f32.gmra.mxu0 %v918
    %v2325 = vpop.f32.mrf.mxu0
    %v2326 = vadd.f32 %v1877, %v2325
    %2327 = vmatmul.f32.gmra.mxu0 %v922
    %v2328 = vpop.f32.mrf.mxu0
    %v2329 = vadd.f32 %v1880, %v2328
    %2330 = vmatmul.f32.gmra.mxu0 %v926
    %v2331 = vpop.f32.mrf.mxu0
    %v2332 = vadd.f32 %v1883, %v2331
    %2333 = vmatmul.f32.gmra.mxu0 %v930
    %v2334 = vpop.f32.mrf.mxu0
    %v2335 = vadd.f32 %v1886, %v2334
    %2336 = vmatmul.f32.gmra.mxu0 %v934
    %v2337 = vpop.f32.mrf.mxu0
    %v2338 = vadd.f32 %v1889, %v2337
    %2339 = vmatmul.f32.gmra.mxu0 %v938
    %v2340 = vpop.f32.mrf.mxu0
    %v2341 = vadd.f32 %v1892, %v2340
    %2342 = vmatmul.f32.gmra.mxu0 %v942
    %v2343 = vpop.f32.mrf.mxu0
    %v2344 = vadd.f32 %v1895, %v2343
    %2345 = vmatmul.f32.gmra.mxu0 %v946
    %v2346 = vpop.f32.mrf.mxu0
    %v2347 = vadd.f32 %v1898, %v2346
    %2348 = vmatmul.f32.gmra.mxu0 %v950
    %v2349 = vpop.f32.mrf.mxu0
    %v2350 = vadd.f32 %v1901, %v2349
    %2351 = vmatmul.f32.gmra.mxu0 %v954
    %v2352 = vpop.f32.mrf.mxu0
    %v2353 = vadd.f32 %v1904, %v2352
    %2354 = vmatmul.f32.gmra.mxu0 %v958
    %v2355 = vpop.f32.mrf.mxu0
    %v2356 = vadd.f32 %v1907, %v2355
    %2357 = vmatmul.f32.gmra.mxu0 %v962
    %v2358 = vpop.f32.mrf.mxu0
    %v2359 = vadd.f32 %v1910, %v2358
    %2360 = vmatmul.f32.gmra.mxu0 %v966
    %v2361 = vpop.f32.mrf.mxu0
    %v2362 = vadd.f32 %v1913, %v2361
    %2363 = vmatmul.f32.gmra.mxu0 %v970
    %v2364 = vpop.f32.mrf.mxu0
    %v2365 = vadd.f32 %v1916, %v2364
    %2366 = vmatmul.f32.gmra.mxu0 %v974
    %v2367 = vpop.f32.mrf.mxu0
    %v2368 = vadd.f32 %v1919, %v2367
    %2369 = vmatmul.f32.gmra.mxu0 %v978
    %v2370 = vpop.f32.mrf.mxu0
    %v2371 = vadd.f32 %v1922, %v2370
    %2372 = vmatmul.f32.gmra.mxu0 %v982
    %v2373 = vpop.f32.mrf.mxu0
    %v2374 = vadd.f32 %v1925, %v2373
    %2375 = vmatmul.f32.gmra.mxu0 %v986
    %v2376 = vpop.f32.mrf.mxu0
    %v2377 = vadd.f32 %v1928, %v2376
    %2378 = vmatmul.f32.gmra.mxu0 %v990
    %v2379 = vpop.f32.mrf.mxu0
    %v2380 = vadd.f32 %v1931, %v2379
    %2381 = vmatmul.f32.gmra.mxu0 %v994
    %v2382 = vpop.f32.mrf.mxu0
    %v2383 = vadd.f32 %v1934, %v2382
    %2384 = vmatmul.f32.gmra.mxu0 %v998
    %v2385 = vpop.f32.mrf.mxu0
    %v2386 = vadd.f32 %v1937, %v2385
    %2387 = vmatmul.f32.gmra.mxu0 %v1002
    %v2388 = vpop.f32.mrf.mxu0
    %v2389 = vadd.f32 %v1940, %v2388
    %2390 = vmatmul.f32.gmra.mxu0 %v1006
    %v2391 = vpop.f32.mrf.mxu0
    %v2392 = vadd.f32 %v1943, %v2391
    %2393 = vmatmul.f32.gmra.mxu0 %v1010
    %v2394 = vpop.f32.mrf.mxu0
    %v2395 = vadd.f32 %v1946, %v2394
    %2396 = vmatmul.f32.gmra.mxu0 %v1014
    %v2397 = vpop.f32.mrf.mxu0
    %v2398 = vadd.f32 %v1949, %v2397
    %2399 = vmatmul.f32.gmra.mxu0 %v1018
    %v2400 = vpop.f32.mrf.mxu0
    %v2401 = vadd.f32 %v1952, %v2400
    %2402 = vmatmul.f32.gmra.mxu0 %v1022
    %v2403 = vpop.f32.mrf.mxu0
    %v2404 = vadd.f32 %v1955, %v2403
    %2405 = vmatmul.f32.gmra.mxu0 %v1026
    %v2406 = vpop.f32.mrf.mxu0
    %v2407 = vadd.f32 %v1958, %v2406
    %2408 = vmatmul.f32.gmra.mxu0 %v1030
    %v2409 = vpop.f32.mrf.mxu0
    %v2410 = vadd.f32 %v1961, %v2409
    %2411 = vmatmul.f32.gmra.mxu0 %v1034
    %v2412 = vpop.f32.mrf.mxu0
    %v2413 = vadd.f32 %v1964, %v2412
    %2414 = vmatmul.f32.gmra.mxu0 %v1038
    %v2415 = vpop.f32.mrf.mxu0
    %v2416 = vadd.f32 %v1967, %v2415
    %2417 = vmatmul.f32.gmra.mxu0 %v1042
    %v2418 = vpop.f32.mrf.mxu0
    %v2419 = vadd.f32 %v1970, %v2418
    %2420 = vmatmul.f32.gmra.mxu0 %v1046
    %v2421 = vpop.f32.mrf.mxu0
    %v2422 = vadd.f32 %v1973, %v2421
    %2423 = vmatmul.f32.gmra.mxu0 %v1050
    %v2424 = vpop.f32.mrf.mxu0
    %v2425 = vadd.f32 %v1976, %v2424
    %2426 = vmatmul.f32.gmra.mxu0 %v1054
    %v2427 = vpop.f32.mrf.mxu0
    %v2428 = vadd.f32 %v1979, %v2427
    %2429 = vmatmul.f32.gmra.mxu0 %v1058
    %v2430 = vpop.f32.mrf.mxu0
    %v2431 = vadd.f32 %v1982, %v2430
    %2432 = vmatmul.f32.gmra.mxu0 %v1062
    %v2433 = vpop.f32.mrf.mxu0
    %v2434 = vadd.f32 %v1985, %v2433
    %2435 = vmatmul.f32.gmra.mxu0 %v1066
    %v2436 = vpop.f32.mrf.mxu0
    %v2437 = vadd.f32 %v1988, %v2436
    %2438 = vmatmul.f32.gmra.mxu0 %v1070
    %v2439 = vpop.f32.mrf.mxu0
    %v2440 = vadd.f32 %v1991, %v2439
    %2441 = vmatmul.f32.gmra.mxu0 %v1074
    %v2442 = vpop.f32.mrf.mxu0
    %v2443 = vadd.f32 %v1994, %v2442
    %2444 = vmatmul.f32.gmra.mxu0 %v1078
    %v2445 = vpop.f32.mrf.mxu0
    %v2446 = vadd.f32 %v1997, %v2445
    %2447 = vmatmul.f32.gmra.mxu0 %v1082
    %v2448 = vpop.f32.mrf.mxu0
    %v2449 = vadd.f32 %v2000, %v2448
    %2450 = vmatmul.f32.gmra.mxu0 %v1086
    %v2451 = vpop.f32.mrf.mxu0
    %v2452 = vadd.f32 %v2003, %v2451
    %2453 = vmatmul.f32.gmra.mxu0 %v1090
    %v2454 = vpop.f32.mrf.mxu0
    %v2455 = vadd.f32 %v2006, %v2454
    %2456 = vmatmul.f32.gmra.mxu0 %v1094
    %v2457 = vpop.f32.mrf.mxu0
    %v2458 = vadd.f32 %v2009, %v2457
    %2459 = vmatmul.f32.gmra.mxu0 %v1098
    %v2460 = vpop.f32.mrf.mxu0
    %v2461 = vadd.f32 %v2012, %v2460
    %2462 = vmatmul.f32.gmra.mxu0 %v1102
    %v2463 = vpop.f32.mrf.mxu0
    %v2464 = vadd.f32 %v2015, %v2463
    %2465 = vmatmul.f32.gmra.mxu0 %v1106
    %v2466 = vpop.f32.mrf.mxu0
    %v2467 = vadd.f32 %v2018, %v2466
    %2468 = vmatmul.f32.gmra.mxu0 %v1110
    %v2469 = vpop.f32.mrf.mxu0
    %v2470 = vadd.f32 %v2021, %v2469
    %2471 = vmatmul.f32.gmra.mxu0 %v1114
    %v2472 = vpop.f32.mrf.mxu0
    %v2473 = vadd.f32 %v2024, %v2472
    %2474 = vmatmul.f32.gmra.mxu0 %v1118
    %v2475 = vpop.f32.mrf.mxu0
    %v2476 = vadd.f32 %v2027, %v2475
    %2477 = vmatmul.f32.gmra.mxu0 %v1122
    %v2478 = vpop.f32.mrf.mxu0
    %v2479 = vadd.f32 %v2030, %v2478
    %2480 = vmatmul.f32.gmra.mxu0 %v1126
    %v2481 = vpop.f32.mrf.mxu0
    %v2482 = vadd.f32 %v2033, %v2481
    %2483 = vmatmul.f32.gmra.mxu0 %v1130
    %v2484 = vpop.f32.mrf.mxu0
    %v2485 = vadd.f32 %v2036, %v2484
    %2486 = vmatmul.f32.gmra.mxu0 %v1134
    %v2487 = vpop.f32.mrf.mxu0
    %v2488 = vadd.f32 %v2039, %v2487
    %2489 = vmatmul.f32.gmra.mxu0 %v1138
    %v2490 = vpop.f32.mrf.mxu0
    %v2491 = vadd.f32 %v2042, %v2490
    %2492 = vmatmul.f32.gmra.mxu0 %v1142
    %v2493 = vpop.f32.mrf.mxu0
    %v2494 = vadd.f32 %v2045, %v2493
    %2495 = vmatmul.f32.gmra.mxu0 %v1146
    %v2496 = vpop.f32.mrf.mxu0
    %v2497 = vadd.f32 %v2048, %v2496
    %2498 = vmatmul.f32.gmra.mxu0 %v1150
    %v2499 = vpop.f32.mrf.mxu0
    %v2500 = vadd.f32 %v2051, %v2499
    %2501 = vmatmul.f32.gmra.mxu0 %v1154
    %v2502 = vpop.f32.mrf.mxu0
    %v2503 = vadd.f32 %v2054, %v2502
    %2504 = vmatmul.f32.gmra.mxu0 %v1158
    %v2505 = vpop.f32.mrf.mxu0
    %v2506 = vadd.f32 %v2057, %v2505
    %2507 = vmatmul.f32.gmra.mxu0 %v1162
    %v2508 = vpop.f32.mrf.mxu0
    %v2509 = vadd.f32 %v2060, %v2508
    %2510 = vdwg.mxu0
    %2511 = vmatpush.msra.mxu0 %v586
    %2512 = vmatpush.msra.mxu0 %v581
    %2513 = vmatpush.msra.mxu0 %v576
    %2514 = vmatpush.msra.mxu0 %v571
    %2515 = vmatpush.msra.mxu0 %v566
    %2516 = vmatpush.msra.mxu0 %v561
    %2517 = vmatpush.msra.mxu0 %v556
    %2518 = vmatpush.msra.mxu0 %v551
    %2519 = vmatpush.msra.mxu0 %v546
    %2520 = vmatpush.msra.mxu0 %v541
    %2521 = vmatpush.msra.mxu0 %v536
    %2522 = vmatpush.msra.mxu0 %v531
    %2523 = vmatpush.msra.mxu0 %v526
    %2524 = vmatpush.msra.mxu0 %v521
    %2525 = vmatpush.msra.mxu0 %v516
    %2526 = vmatpush.msra.mxu0 %v511
    %2527 = vmatmul.f32.gmra.mxu0 %v591
    %v2528 = vpop.f32.mrf.mxu0
    %v2529 = vadd.f32 %v2080, %v2528
    %2530 = vmatmul.f32.gmra.mxu0 %v595
    %v2531 = vpop.f32.mrf.mxu0
    %v2532 = vadd.f32 %v2083, %v2531
    %2533 = vmatmul.f32.gmra.mxu0 %v599
    %v2534 = vpop.f32.mrf.mxu0
    %v2535 = vadd.f32 %v2086, %v2534
    %2536 = vmatmul.f32.gmra.mxu0 %v603
    %v2537 = vpop.f32.mrf.mxu0
    %v2538 = vadd.f32 %v2089, %v2537
    %2539 = vmatmul.f32.gmra.mxu0 %v607
    %v2540 = vpop.f32.mrf.mxu0
    %v2541 = vadd.f32 %v2092, %v2540
    %2542 = vmatmul.f32.gmra.mxu0 %v611
    %v2543 = vpop.f32.mrf.mxu0
    %v2544 = vadd.f32 %v2095, %v2543
    %2545 = vmatmul.f32.gmra.mxu0 %v615
    %v2546 = vpop.f32.mrf.mxu0
    %v2547 = vadd.f32 %v2098, %v2546
    %2548 = vmatmul.f32.gmra.mxu0 %v619
    %v2549 = vpop.f32.mrf.mxu0
    %v2550 = vadd.f32 %v2101, %v2549
    %2551 = vmatmul.f32.gmra.mxu0 %v623
    %v2552 = vpop.f32.mrf.mxu0
    %v2553 = vadd.f32 %v2104, %v2552
    %2554 = vmatmul.f32.gmra.mxu0 %v627
    %v2555 = vpop.f32.mrf.mxu0
    %v2556 = vadd.f32 %v2107, %v2555
    %2557 = vmatmul.f32.gmra.mxu0 %v631
    %v2558 = vpop.f32.mrf.mxu0
    %v2559 = vadd.f32 %v2110, %v2558
    %2560 = vmatmul.f32.gmra.mxu0 %v635
    %v2561 = vpop.f32.mrf.mxu0
    %v2562 = vadd.f32 %v2113, %v2561
    %2563 = vmatmul.f32.gmra.mxu0 %v639
    %v2564 = vpop.f32.mrf.mxu0
    %v2565 = vadd.f32 %v2116, %v2564
    %2566 = vmatmul.f32.gmra.mxu0 %v643
    %v2567 = vpop.f32.mrf.mxu0
    %v2568 = vadd.f32 %v2119, %v2567
    %2569 = vmatmul.f32.gmra.mxu0 %v647
    %v2570 = vpop.f32.mrf.mxu0
    %v2571 = vadd.f32 %v2122, %v2570
    %2572 = vmatmul.f32.gmra.mxu0 %v651
    %v2573 = vpop.f32.mrf.mxu0
    %v2574 = vadd.f32 %v2125, %v2573
    %2575 = vmatmul.f32.gmra.mxu0 %v655
    %v2576 = vpop.f32.mrf.mxu0
    %v2577 = vadd.f32 %v2128, %v2576
    %2578 = vmatmul.f32.gmra.mxu0 %v659
    %v2579 = vpop.f32.mrf.mxu0
    %v2580 = vadd.f32 %v2131, %v2579
    %2581 = vmatmul.f32.gmra.mxu0 %v663
    %v2582 = vpop.f32.mrf.mxu0
    %v2583 = vadd.f32 %v2134, %v2582
    %2584 = vmatmul.f32.gmra.mxu0 %v667
    %v2585 = vpop.f32.mrf.mxu0
    %v2586 = vadd.f32 %v2137, %v2585
    %2587 = vmatmul.f32.gmra.mxu0 %v671
    %v2588 = vpop.f32.mrf.mxu0
    %v2589 = vadd.f32 %v2140, %v2588
    %2590 = vmatmul.f32.gmra.mxu0 %v675
    %v2591 = vpop.f32.mrf.mxu0
    %v2592 = vadd.f32 %v2143, %v2591
    %2593 = vmatmul.f32.gmra.mxu0 %v679
    %v2594 = vpop.f32.mrf.mxu0
    %v2595 = vadd.f32 %v2146, %v2594
    %2596 = vmatmul.f32.gmra.mxu0 %v683
    %v2597 = vpop.f32.mrf.mxu0
    %v2598 = vadd.f32 %v2149, %v2597
    %2599 = vmatmul.f32.gmra.mxu0 %v687
    %v2600 = vpop.f32.mrf.mxu0
    %v2601 = vadd.f32 %v2152, %v2600
    %2602 = vmatmul.f32.gmra.mxu0 %v691
    %v2603 = vpop.f32.mrf.mxu0
    %v2604 = vadd.f32 %v2155, %v2603
    %2605 = vmatmul.f32.gmra.mxu0 %v695
    %v2606 = vpop.f32.mrf.mxu0
    %v2607 = vadd.f32 %v2158, %v2606
    %2608 = vmatmul.f32.gmra.mxu0 %v699
    %v2609 = vpop.f32.mrf.mxu0
    %v2610 = vadd.f32 %v2161, %v2609
    %2611 = vmatmul.f32.gmra.mxu0 %v703
    %v2612 = vpop.f32.mrf.mxu0
    %v2613 = vadd.f32 %v2164, %v2612
    %2614 = vmatmul.f32.gmra.mxu0 %v707
    %v2615 = vpop.f32.mrf.mxu0
    %v2616 = vadd.f32 %v2167, %v2615
    %2617 = vmatmul.f32.gmra.mxu0 %v711
    %v2618 = vpop.f32.mrf.mxu0
    %v2619 = vadd.f32 %v2170, %v2618
    %2620 = vmatmul.f32.gmra.mxu0 %v715
    %v2621 = vpop.f32.mrf.mxu0
    %v2622 = vadd.f32 %v2173, %v2621
    %2623 = vmatmul.f32.gmra.mxu0 %v719
    %v2624 = vpop.f32.mrf.mxu0
    %v2625 = vadd.f32 %v2176, %v2624
    %2626 = vmatmul.f32.gmra.mxu0 %v723
    %v2627 = vpop.f32.mrf.mxu0
    %v2628 = vadd.f32 %v2179, %v2627
    %2629 = vmatmul.f32.gmra.mxu0 %v727
    %v2630 = vpop.f32.mrf.mxu0
    %v2631 = vadd.f32 %v2182, %v2630
    %2632 = vmatmul.f32.gmra.mxu0 %v731
    %v2633 = vpop.f32.mrf.mxu0
    %v2634 = vadd.f32 %v2185, %v2633
    %2635 = vmatmul.f32.gmra.mxu0 %v735
    %v2636 = vpop.f32.mrf.mxu0
    %v2637 = vadd.f32 %v2188, %v2636
    %2638 = vmatmul.f32.gmra.mxu0 %v739
    %v2639 = vpop.f32.mrf.mxu0
    %v2640 = vadd.f32 %v2191, %v2639
    %2641 = vmatmul.f32.gmra.mxu0 %v743
    %v2642 = vpop.f32.mrf.mxu0
    %v2643 = vadd.f32 %v2194, %v2642
    %2644 = vmatmul.f32.gmra.mxu0 %v747
    %v2645 = vpop.f32.mrf.mxu0
    %v2646 = vadd.f32 %v2197, %v2645
    %2647 = vmatmul.f32.gmra.mxu0 %v751
    %v2648 = vpop.f32.mrf.mxu0
    %v2649 = vadd.f32 %v2200, %v2648
    %2650 = vmatmul.f32.gmra.mxu0 %v755
    %v2651 = vpop.f32.mrf.mxu0
    %v2652 = vadd.f32 %v2203, %v2651
    %2653 = vmatmul.f32.gmra.mxu0 %v759
    %v2654 = vpop.f32.mrf.mxu0
    %v2655 = vadd.f32 %v2206, %v2654
    %2656 = vmatmul.f32.gmra.mxu0 %v763
    %v2657 = vpop.f32.mrf.mxu0
    %v2658 = vadd.f32 %v2209, %v2657
    %2659 = vmatmul.f32.gmra.mxu0 %v767
    %v2660 = vpop.f32.mrf.mxu0
    %v2661 = vadd.f32 %v2212, %v2660
    %2662 = vmatmul.f32.gmra.mxu0 %v771
    %v2663 = vpop.f32.mrf.mxu0
    %v2664 = vadd.f32 %v2215, %v2663
    %2665 = vmatmul.f32.gmra.mxu0 %v775
    %v2666 = vpop.f32.mrf.mxu0
    %v2667 = vadd.f32 %v2218, %v2666
    %2668 = vmatmul.f32.gmra.mxu0 %v779
    %v2669 = vpop.f32.mrf.mxu0
    %v2670 = vadd.f32 %v2221, %v2669
    %2671 = vmatmul.f32.gmra.mxu0 %v783
    %v2672 = vpop.f32.mrf.mxu0
    %v2673 = vadd.f32 %v2224, %v2672
    %2674 = vmatmul.f32.gmra.mxu0 %v787
    %v2675 = vpop.f32.mrf.mxu0
    %v2676 = vadd.f32 %v2227, %v2675
    %2677 = vmatmul.f32.gmra.mxu0 %v791
    %v2678 = vpop.f32.mrf.mxu0
    %v2679 = vadd.f32 %v2230, %v2678
    %2680 = vmatmul.f32.gmra.mxu0 %v795
    %v2681 = vpop.f32.mrf.mxu0
    %v2682 = vadd.f32 %v2233, %v2681
    %2683 = vmatmul.f32.gmra.mxu0 %v799
    %v2684 = vpop.f32.mrf.mxu0
    %v2685 = vadd.f32 %v2236, %v2684
    %2686 = vmatmul.f32.gmra.mxu0 %v803
    %v2687 = vpop.f32.mrf.mxu0
    %v2688 = vadd.f32 %v2239, %v2687
    %2689 = vmatmul.f32.gmra.mxu0 %v807
    %v2690 = vpop.f32.mrf.mxu0
    %v2691 = vadd.f32 %v2242, %v2690
    %2692 = vmatmul.f32.gmra.mxu0 %v811
    %v2693 = vpop.f32.mrf.mxu0
    %v2694 = vadd.f32 %v2245, %v2693
    %2695 = vmatmul.f32.gmra.mxu0 %v815
    %v2696 = vpop.f32.mrf.mxu0
    %v2697 = vadd.f32 %v2248, %v2696
    %2698 = vmatmul.f32.gmra.mxu0 %v819
    %v2699 = vpop.f32.mrf.mxu0
    %v2700 = vadd.f32 %v2251, %v2699
    %2701 = vmatmul.f32.gmra.mxu0 %v823
    %v2702 = vpop.f32.mrf.mxu0
    %v2703 = vadd.f32 %v2254, %v2702
    %2704 = vmatmul.f32.gmra.mxu0 %v827
    %v2705 = vpop.f32.mrf.mxu0
    %v2706 = vadd.f32 %v2257, %v2705
    %2707 = vmatmul.f32.gmra.mxu0 %v831
    %v2708 = vpop.f32.mrf.mxu0
    %v2709 = vadd.f32 %v2260, %v2708
    %2710 = vmatmul.f32.gmra.mxu0 %v835
    %v2711 = vpop.f32.mrf.mxu0
    %v2712 = vadd.f32 %v2263, %v2711
    %2713 = vmatmul.f32.gmra.mxu0 %v839
    %v2714 = vpop.f32.mrf.mxu0
    %v2715 = vadd.f32 %v2266, %v2714
    %2716 = vmatmul.f32.gmra.mxu0 %v843
    %v2717 = vpop.f32.mrf.mxu0
    %v2718 = vadd.f32 %v2269, %v2717
    %2719 = vmatmul.f32.gmra.mxu0 %v847
    %v2720 = vpop.f32.mrf.mxu0
    %v2721 = vadd.f32 %v2272, %v2720
    %2722 = vmatmul.f32.gmra.mxu0 %v851
    %v2723 = vpop.f32.mrf.mxu0
    %v2724 = vadd.f32 %v2275, %v2723
    %2725 = vmatmul.f32.gmra.mxu0 %v855
    %v2726 = vpop.f32.mrf.mxu0
    %v2727 = vadd.f32 %v2278, %v2726
    %2728 = vmatmul.f32.gmra.mxu0 %v859
    %v2729 = vpop.f32.mrf.mxu0
    %v2730 = vadd.f32 %v2281, %v2729
    %2731 = vmatmul.f32.gmra.mxu0 %v863
    %v2732 = vpop.f32.mrf.mxu0
    %v2733 = vadd.f32 %v2284, %v2732
    %2734 = vmatmul.f32.gmra.mxu0 %v867
    %v2735 = vpop.f32.mrf.mxu0
    %v2736 = vadd.f32 %v2287, %v2735
    %2737 = vmatmul.f32.gmra.mxu0 %v871
    %v2738 = vpop.f32.mrf.mxu0
    %v2739 = vadd.f32 %v2290, %v2738
    %2740 = vmatmul.f32.gmra.mxu0 %v875
    %v2741 = vpop.f32.mrf.mxu0
    %v2742 = vadd.f32 %v2293, %v2741
    %2743 = vmatmul.f32.gmra.mxu0 %v879
    %v2744 = vpop.f32.mrf.mxu0
    %v2745 = vadd.f32 %v2296, %v2744
    %2746 = vmatmul.f32.gmra.mxu0 %v883
    %v2747 = vpop.f32.mrf.mxu0
    %v2748 = vadd.f32 %v2299, %v2747
    %2749 = vmatmul.f32.gmra.mxu0 %v887
    %v2750 = vpop.f32.mrf.mxu0
    %v2751 = vadd.f32 %v2302, %v2750
    %2752 = vmatmul.f32.gmra.mxu0 %v891
    %v2753 = vpop.f32.mrf.mxu0
    %v2754 = vadd.f32 %v2305, %v2753
    %2755 = vmatmul.f32.gmra.mxu0 %v895
    %v2756 = vpop.f32.mrf.mxu0
    %v2757 = vadd.f32 %v2308, %v2756
    %2758 = vmatmul.f32.gmra.mxu0 %v899
    %v2759 = vpop.f32.mrf.mxu0
    %v2760 = vadd.f32 %v2311, %v2759
    %2761 = vmatmul.f32.gmra.mxu0 %v903
    %v2762 = vpop.f32.mrf.mxu0
    %v2763 = vadd.f32 %v2314, %v2762
    %2764 = vmatmul.f32.gmra.mxu0 %v907
    %v2765 = vpop.f32.mrf.mxu0
    %v2766 = vadd.f32 %v2317, %v2765
    %2767 = vmatmul.f32.gmra.mxu0 %v911
    %v2768 = vpop.f32.mrf.mxu0
    %v2769 = vadd.f32 %v2320, %v2768
    %2770 = vmatmul.f32.gmra.mxu0 %v915
    %v2771 = vpop.f32.mrf.mxu0
    %v2772 = vadd.f32 %v2323, %v2771
    %2773 = vmatmul.f32.gmra.mxu0 %v919
    %v2774 = vpop.f32.mrf.mxu0
    %v2775 = vadd.f32 %v2326, %v2774
    %2776 = vmatmul.f32.gmra.mxu0 %v923
    %v2777 = vpop.f32.mrf.mxu0
    %v2778 = vadd.f32 %v2329, %v2777
    %2779 = vmatmul.f32.gmra.mxu0 %v927
    %v2780 = vpop.f32.mrf.mxu0
    %v2781 = vadd.f32 %v2332, %v2780
    %2782 = vmatmul.f32.gmra.mxu0 %v931
    %v2783 = vpop.f32.mrf.mxu0
    %v2784 = vadd.f32 %v2335, %v2783
    %2785 = vmatmul.f32.gmra.mxu0 %v935
    %v2786 = vpop.f32.mrf.mxu0
    %v2787 = vadd.f32 %v2338, %v2786
    %2788 = vmatmul.f32.gmra.mxu0 %v939
    %v2789 = vpop.f32.mrf.mxu0
    %v2790 = vadd.f32 %v2341, %v2789
    %2791 = vmatmul.f32.gmra.mxu0 %v943
    %v2792 = vpop.f32.mrf.mxu0
    %v2793 = vadd.f32 %v2344, %v2792
    %2794 = vmatmul.f32.gmra.mxu0 %v947
    %v2795 = vpop.f32.mrf.mxu0
    %v2796 = vadd.f32 %v2347, %v2795
    %2797 = vmatmul.f32.gmra.mxu0 %v951
    %v2798 = vpop.f32.mrf.mxu0
    %v2799 = vadd.f32 %v2350, %v2798
    %2800 = vmatmul.f32.gmra.mxu0 %v955
    %v2801 = vpop.f32.mrf.mxu0
    %v2802 = vadd.f32 %v2353, %v2801
    %2803 = vmatmul.f32.gmra.mxu0 %v959
    %v2804 = vpop.f32.mrf.mxu0
    %v2805 = vadd.f32 %v2356, %v2804
    %2806 = vmatmul.f32.gmra.mxu0 %v963
    %v2807 = vpop.f32.mrf.mxu0
    %v2808 = vadd.f32 %v2359, %v2807
    %2809 = vmatmul.f32.gmra.mxu0 %v967
    %v2810 = vpop.f32.mrf.mxu0
    %v2811 = vadd.f32 %v2362, %v2810
    %2812 = vmatmul.f32.gmra.mxu0 %v971
    %v2813 = vpop.f32.mrf.mxu0
    %v2814 = vadd.f32 %v2365, %v2813
    %2815 = vmatmul.f32.gmra.mxu0 %v975
    %v2816 = vpop.f32.mrf.mxu0
    %v2817 = vadd.f32 %v2368, %v2816
    %2818 = vmatmul.f32.gmra.mxu0 %v979
    %v2819 = vpop.f32.mrf.mxu0
    %v2820 = vadd.f32 %v2371, %v2819
    %2821 = vmatmul.f32.gmra.mxu0 %v983
    %v2822 = vpop.f32.mrf.mxu0
    %v2823 = vadd.f32 %v2374, %v2822
    %2824 = vmatmul.f32.gmra.mxu0 %v987
    %v2825 = vpop.f32.mrf.mxu0
    %v2826 = vadd.f32 %v2377, %v2825
    %2827 = vmatmul.f32.gmra.mxu0 %v991
    %v2828 = vpop.f32.mrf.mxu0
    %v2829 = vadd.f32 %v2380, %v2828
    %2830 = vmatmul.f32.gmra.mxu0 %v995
    %v2831 = vpop.f32.mrf.mxu0
    %v2832 = vadd.f32 %v2383, %v2831
    %2833 = vmatmul.f32.gmra.mxu0 %v999
    %v2834 = vpop.f32.mrf.mxu0
    %v2835 = vadd.f32 %v2386, %v2834
    %2836 = vmatmul.f32.gmra.mxu0 %v1003
    %v2837 = vpop.f32.mrf.mxu0
    %v2838 = vadd.f32 %v2389, %v2837
    %2839 = vmatmul.f32.gmra.mxu0 %v1007
    %v2840 = vpop.f32.mrf.mxu0
    %v2841 = vadd.f32 %v2392, %v2840
    %2842 = vmatmul.f32.gmra.mxu0 %v1011
    %v2843 = vpop.f32.mrf.mxu0
    %v2844 = vadd.f32 %v2395, %v2843
    %2845 = vmatmul.f32.gmra.mxu0 %v1015
    %v2846 = vpop.f32.mrf.mxu0
    %v2847 = vadd.f32 %v2398, %v2846
    %2848 = vmatmul.f32.gmra.mxu0 %v1019
    %v2849 = vpop.f32.mrf.mxu0
    %v2850 = vadd.f32 %v2401, %v2849
    %2851 = vmatmul.f32.gmra.mxu0 %v1023
    %v2852 = vpop.f32.mrf.mxu0
    %v2853 = vadd.f32 %v2404, %v2852
    %2854 = vmatmul.f32.gmra.mxu0 %v1027
    %v2855 = vpop.f32.mrf.mxu0
    %v2856 = vadd.f32 %v2407, %v2855
    %2857 = vmatmul.f32.gmra.mxu0 %v1031
    %v2858 = vpop.f32.mrf.mxu0
    %v2859 = vadd.f32 %v2410, %v2858
    %2860 = vmatmul.f32.gmra.mxu0 %v1035
    %v2861 = vpop.f32.mrf.mxu0
    %v2862 = vadd.f32 %v2413, %v2861
    %2863 = vmatmul.f32.gmra.mxu0 %v1039
    %v2864 = vpop.f32.mrf.mxu0
    %v2865 = vadd.f32 %v2416, %v2864
    %2866 = vmatmul.f32.gmra.mxu0 %v1043
    %v2867 = vpop.f32.mrf.mxu0
    %v2868 = vadd.f32 %v2419, %v2867
    %2869 = vmatmul.f32.gmra.mxu0 %v1047
    %v2870 = vpop.f32.mrf.mxu0
    %v2871 = vadd.f32 %v2422, %v2870
    %2872 = vmatmul.f32.gmra.mxu0 %v1051
    %v2873 = vpop.f32.mrf.mxu0
    %v2874 = vadd.f32 %v2425, %v2873
    %2875 = vmatmul.f32.gmra.mxu0 %v1055
    %v2876 = vpop.f32.mrf.mxu0
    %v2877 = vadd.f32 %v2428, %v2876
    %2878 = vmatmul.f32.gmra.mxu0 %v1059
    %v2879 = vpop.f32.mrf.mxu0
    %v2880 = vadd.f32 %v2431, %v2879
    %2881 = vmatmul.f32.gmra.mxu0 %v1063
    %v2882 = vpop.f32.mrf.mxu0
    %v2883 = vadd.f32 %v2434, %v2882
    %2884 = vmatmul.f32.gmra.mxu0 %v1067
    %v2885 = vpop.f32.mrf.mxu0
    %v2886 = vadd.f32 %v2437, %v2885
    %2887 = vmatmul.f32.gmra.mxu0 %v1071
    %v2888 = vpop.f32.mrf.mxu0
    %v2889 = vadd.f32 %v2440, %v2888
    %2890 = vmatmul.f32.gmra.mxu0 %v1075
    %v2891 = vpop.f32.mrf.mxu0
    %v2892 = vadd.f32 %v2443, %v2891
    %2893 = vmatmul.f32.gmra.mxu0 %v1079
    %v2894 = vpop.f32.mrf.mxu0
    %v2895 = vadd.f32 %v2446, %v2894
    %2896 = vmatmul.f32.gmra.mxu0 %v1083
    %v2897 = vpop.f32.mrf.mxu0
    %v2898 = vadd.f32 %v2449, %v2897
    %2899 = vmatmul.f32.gmra.mxu0 %v1087
    %v2900 = vpop.f32.mrf.mxu0
    %v2901 = vadd.f32 %v2452, %v2900
    %2902 = vmatmul.f32.gmra.mxu0 %v1091
    %v2903 = vpop.f32.mrf.mxu0
    %v2904 = vadd.f32 %v2455, %v2903
    %2905 = vmatmul.f32.gmra.mxu0 %v1095
    %v2906 = vpop.f32.mrf.mxu0
    %v2907 = vadd.f32 %v2458, %v2906
    %2908 = vmatmul.f32.gmra.mxu0 %v1099
    %v2909 = vpop.f32.mrf.mxu0
    %v2910 = vadd.f32 %v2461, %v2909
    %2911 = vmatmul.f32.gmra.mxu0 %v1103
    %v2912 = vpop.f32.mrf.mxu0
    %v2913 = vadd.f32 %v2464, %v2912
    %2914 = vmatmul.f32.gmra.mxu0 %v1107
    %v2915 = vpop.f32.mrf.mxu0
    %v2916 = vadd.f32 %v2467, %v2915
    %2917 = vmatmul.f32.gmra.mxu0 %v1111
    %v2918 = vpop.f32.mrf.mxu0
    %v2919 = vadd.f32 %v2470, %v2918
    %2920 = vmatmul.f32.gmra.mxu0 %v1115
    %v2921 = vpop.f32.mrf.mxu0
    %v2922 = vadd.f32 %v2473, %v2921
    %2923 = vmatmul.f32.gmra.mxu0 %v1119
    %v2924 = vpop.f32.mrf.mxu0
    %v2925 = vadd.f32 %v2476, %v2924
    %2926 = vmatmul.f32.gmra.mxu0 %v1123
    %v2927 = vpop.f32.mrf.mxu0
    %v2928 = vadd.f32 %v2479, %v2927
    %2929 = vmatmul.f32.gmra.mxu0 %v1127
    %v2930 = vpop.f32.mrf.mxu0
    %v2931 = vadd.f32 %v2482, %v2930
    %2932 = vmatmul.f32.gmra.mxu0 %v1131
    %v2933 = vpop.f32.mrf.mxu0
    %v2934 = vadd.f32 %v2485, %v2933
    %2935 = vmatmul.f32.gmra.mxu0 %v1135
    %v2936 = vpop.f32.mrf.mxu0
    %v2937 = vadd.f32 %v2488, %v2936
    %2938 = vmatmul.f32.gmra.mxu0 %v1139
    %v2939 = vpop.f32.mrf.mxu0
    %v2940 = vadd.f32 %v2491, %v2939
    %2941 = vmatmul.f32.gmra.mxu0 %v1143
    %v2942 = vpop.f32.mrf.mxu0
    %v2943 = vadd.f32 %v2494, %v2942
    %2944 = vmatmul.f32.gmra.mxu0 %v1147
    %v2945 = vpop.f32.mrf.mxu0
    %v2946 = vadd.f32 %v2497, %v2945
    %2947 = vmatmul.f32.gmra.mxu0 %v1151
    %v2948 = vpop.f32.mrf.mxu0
    %v2949 = vadd.f32 %v2500, %v2948
    %2950 = vmatmul.f32.gmra.mxu0 %v1155
    %v2951 = vpop.f32.mrf.mxu0
    %v2952 = vadd.f32 %v2503, %v2951
    %2953 = vmatmul.f32.gmra.mxu0 %v1159
    %v2954 = vpop.f32.mrf.mxu0
    %v2955 = vadd.f32 %v2506, %v2954
    %2956 = vmatmul.f32.gmra.mxu0 %v1163
    %v2957 = vpop.f32.mrf.mxu0
    %v2958 = vadd.f32 %v2509, %v2957
    %2959 = vdwg.mxu0
    %v2960 = vld [vmem:[#allocation7] sm:$0xff]
    %v2961 = vld [vmem:[#allocation7 + $0x8] sm:$0xff]
    %v2962 = vld [vmem:[#allocation7 + $0x10] sm:$0xff]
    %v2963 = vld [vmem:[#allocation7 + $0x18] sm:$0xff]
    %v2964 = vld [vmem:[#allocation7 + $0x20] sm:$0xff]
    %v2965 = vld [vmem:[#allocation7 + $0x28] sm:$0xff]
    %v2966 = vld [vmem:[#allocation7 + $0x30] sm:$0xff]
    %v2967 = vld [vmem:[#allocation7 + $0x38] sm:$0xff]
    %v2968 = vld [vmem:[#allocation7 + $0x40] sm:$0xff]
    %v2969 = vld [vmem:[#allocation7 + $0x48] sm:$0xff]
    %v2970 = vld [vmem:[#allocation7 + $0x50] sm:$0xff]
    %v2971 = vld [vmem:[#allocation7 + $0x58] sm:$0xff]
    %v2972 = vld [vmem:[#allocation7 + $0x60] sm:$0xff]
    %v2973 = vld [vmem:[#allocation7 + $0x68] sm:$0xff]
    %v2974 = vld [vmem:[#allocation7 + $0x70] sm:$0xff]
    %v2975 = vld [vmem:[#allocation7 + $0x78] sm:$0xff]
    %s2976 = scalar_lea.vmem [#allocation7], 128
    %v2977 = vld [vmem:[%s2976] sm:$0xff]
    %v2978 = vld [vmem:[%s2976 + $0x8] sm:$0xff]
    %v2979 = vld [vmem:[%s2976 + $0x10] sm:$0xff]
    %v2980 = vld [vmem:[%s2976 + $0x18] sm:$0xff]
    %v2981 = vld [vmem:[%s2976 + $0x20] sm:$0xff]
    %v2982 = vld [vmem:[%s2976 + $0x28] sm:$0xff]
    %v2983 = vld [vmem:[%s2976 + $0x30] sm:$0xff]
    %v2984 = vld [vmem:[%s2976 + $0x38] sm:$0xff]
    %v2985 = vld [vmem:[%s2976 + $0x40] sm:$0xff]
    %v2986 = vld [vmem:[%s2976 + $0x48] sm:$0xff]
    %v2987 = vld [vmem:[%s2976 + $0x50] sm:$0xff]
    %v2988 = vld [vmem:[%s2976 + $0x58] sm:$0xff]
    %v2989 = vld [vmem:[%s2976 + $0x60] sm:$0xff]
    %v2990 = vld [vmem:[%s2976 + $0x68] sm:$0xff]
    %v2991 = vld [vmem:[%s2976 + $0x70] sm:$0xff]
    %v2992 = vld [vmem:[%s2976 + $0x78] sm:$0xff]
    %2993 = vmatpush.msra.mxu0 %v2992
    %2994 = vmatpush.msra.mxu0 %v2991
    %2995 = vmatpush.msra.mxu0 %v2990
    %2996 = vmatpush.msra.mxu0 %v2989
    %2997 = vmatpush.msra.mxu0 %v2988
    %2998 = vmatpush.msra.mxu0 %v2987
    %2999 = vmatpush.msra.mxu0 %v2986
    %3000 = vmatpush.msra.mxu0 %v2985
    %3001 = vmatpush.msra.mxu0 %v2984
    %3002 = vmatpush.msra.mxu0 %v2983
    %3003 = vmatpush.msra.mxu0 %v2982
    %3004 = vmatpush.msra.mxu0 %v2981
    %3005 = vmatpush.msra.mxu0 %v2980
    %3006 = vmatpush.msra.mxu0 %v2979
    %3007 = vmatpush.msra.mxu0 %v2978
    %3008 = vmatpush.msra.mxu0 %v2977
    %3009 = vmatmul.f32.gmra.mxu0 %v2577
    %v3010 = vpop.f32.mrf.mxu0
    %v3011 = vadd.f32 0.0, %v3010
    %3012 = vmatmul.f32.gmra.mxu0 %v2580
    %v3013 = vpop.f32.mrf.mxu0
    %v3014 = vadd.f32 0.0, %v3013
    %3015 = vmatmul.f32.gmra.mxu0 %v2583
    %v3016 = vpop.f32.mrf.mxu0
    %v3017 = vadd.f32 0.0, %v3016
    %3018 = vmatmul.f32.gmra.mxu0 %v2586
    %v3019 = vpop.f32.mrf.mxu0
    %v3020 = vadd.f32 0.0, %v3019
    %3021 = vmatmul.f32.gmra.mxu0 %v2589
    %v3022 = vpop.f32.mrf.mxu0
    %v3023 = vadd.f32 0.0, %v3022
    %3024 = vmatmul.f32.gmra.mxu0 %v2592
    %v3025 = vpop.f32.mrf.mxu0
    %v3026 = vadd.f32 0.0, %v3025
    %3027 = vmatmul.f32.gmra.mxu0 %v2595
    %v3028 = vpop.f32.mrf.mxu0
    %v3029 = vadd.f32 0.0, %v3028
    %3030 = vmatmul.f32.gmra.mxu0 %v2598
    %v3031 = vpop.f32.mrf.mxu0
    %v3032 = vadd.f32 0.0, %v3031
    %3033 = vmatmul.f32.gmra.mxu0 %v2601
    %v3034 = vpop.f32.mrf.mxu0
    %v3035 = vadd.f32 0.0, %v3034
    %3036 = vmatmul.f32.gmra.mxu0 %v2604
    %v3037 = vpop.f32.mrf.mxu0
    %v3038 = vadd.f32 0.0, %v3037
    %3039 = vmatmul.f32.gmra.mxu0 %v2607
    %v3040 = vpop.f32.mrf.mxu0
    %v3041 = vadd.f32 0.0, %v3040
    %3042 = vmatmul.f32.gmra.mxu0 %v2610
    %v3043 = vpop.f32.mrf.mxu0
    %v3044 = vadd.f32 0.0, %v3043
    %3045 = vmatmul.f32.gmra.mxu0 %v2613
    %v3046 = vpop.f32.mrf.mxu0
    %v3047 = vadd.f32 0.0, %v3046
    %3048 = vmatmul.f32.gmra.mxu0 %v2616
    %v3049 = vpop.f32.mrf.mxu0
    %v3050 = vadd.f32 0.0, %v3049
    %3051 = vmatmul.f32.gmra.mxu0 %v2619
    %v3052 = vpop.f32.mrf.mxu0
    %v3053 = vadd.f32 0.0, %v3052
    %3054 = vmatmul.f32.gmra.mxu0 %v2622
    %v3055 = vpop.f32.mrf.mxu0
    %v3056 = vadd.f32 0.0, %v3055
    %3057 = vdwg.mxu0
    %3058 = vmatpush.msra.mxu0 %v2975
    %3059 = vmatpush.msra.mxu0 %v2974
    %3060 = vmatpush.msra.mxu0 %v2973
    %3061 = vmatpush.msra.mxu0 %v2972
    %3062 = vmatpush.msra.mxu0 %v2971
    %3063 = vmatpush.msra.mxu0 %v2970
    %3064 = vmatpush.msra.mxu0 %v2969
    %3065 = vmatpush.msra.mxu0 %v2968
    %3066 = vmatpush.msra.mxu0 %v2967
    %3067 = vmatpush.msra.mxu0 %v2966
    %3068 = vmatpush.msra.mxu0 %v2965
    %3069 = vmatpush.msra.mxu0 %v2964
    %3070 = vmatpush.msra.mxu0 %v2963
    %3071 = vmatpush.msra.mxu0 %v2962
    %3072 = vmatpush.msra.mxu0 %v2961
    %3073 = vmatpush.msra.mxu0 %v2960
    %3074 = vmatmul.f32.gmra.mxu0 %v2529
    %v3075 = vpop.f32.mrf.mxu0
    %v3076 = vadd.f32 %v3011, %v3075
    %3077 = vmatmul.f32.gmra.mxu0 %v2532
    %v3078 = vpop.f32.mrf.mxu0
    %v3079 = vadd.f32 %v3014, %v3078
    %3080 = vmatmul.f32.gmra.mxu0 %v2535
    %v3081 = vpop.f32.mrf.mxu0
    %v3082 = vadd.f32 %v3017, %v3081
    %3083 = vmatmul.f32.gmra.mxu0 %v2538
    %v3084 = vpop.f32.mrf.mxu0
    %v3085 = vadd.f32 %v3020, %v3084
    %3086 = vmatmul.f32.gmra.mxu0 %v2541
    %v3087 = vpop.f32.mrf.mxu0
    %v3088 = vadd.f32 %v3023, %v3087
    %3089 = vmatmul.f32.gmra.mxu0 %v2544
    %v3090 = vpop.f32.mrf.mxu0
    %v3091 = vadd.f32 %v3026, %v3090
    %3092 = vmatmul.f32.gmra.mxu0 %v2547
    %v3093 = vpop.f32.mrf.mxu0
    %v3094 = vadd.f32 %v3029, %v3093
    %3095 = vmatmul.f32.gmra.mxu0 %v2550
    %v3096 = vpop.f32.mrf.mxu0
    %v3097 = vadd.f32 %v3032, %v3096
    %3098 = vmatmul.f32.gmra.mxu0 %v2553
    %v3099 = vpop.f32.mrf.mxu0
    %v3100 = vadd.f32 %v3035, %v3099
    %3101 = vmatmul.f32.gmra.mxu0 %v2556
    %v3102 = vpop.f32.mrf.mxu0
    %v3103 = vadd.f32 %v3038, %v3102
    %3104 = vmatmul.f32.gmra.mxu0 %v2559
    %v3105 = vpop.f32.mrf.mxu0
    %v3106 = vadd.f32 %v3041, %v3105
    %3107 = vmatmul.f32.gmra.mxu0 %v2562
    %v3108 = vpop.f32.mrf.mxu0
    %v3109 = vadd.f32 %v3044, %v3108
    %3110 = vmatmul.f32.gmra.mxu0 %v2565
    %v3111 = vpop.f32.mrf.mxu0
    %v3112 = vadd.f32 %v3047, %v3111
    %3113 = vmatmul.f32.gmra.mxu0 %v2568
    %v3114 = vpop.f32.mrf.mxu0
    %v3115 = vadd.f32 %v3050, %v3114
    %3116 = vmatmul.f32.gmra.mxu0 %v2571
    %v3117 = vpop.f32.mrf.mxu0
    %v3118 = vadd.f32 %v3053, %v3117
    %3119 = vmatmul.f32.gmra.mxu0 %v2574
    %v3120 = vpop.f32.mrf.mxu0
    %v3121 = vadd.f32 %v3056, %v3120
    %3122 = vdwg.mxu0
    %s3123 = scalar_lea.vmem [#allocation7], 256
    %v3124 = vld [vmem:[%s3123] sm:$0xff]
    %v3125 = vld [vmem:[%s3123 + $0x8] sm:$0xff]
    %v3126 = vld [vmem:[%s3123 + $0x10] sm:$0xff]
    %v3127 = vld [vmem:[%s3123 + $0x18] sm:$0xff]
    %v3128 = vld [vmem:[%s3123 + $0x20] sm:$0xff]
    %v3129 = vld [vmem:[%s3123 + $0x28] sm:$0xff]
    %v3130 = vld [vmem:[%s3123 + $0x30] sm:$0xff]
    %v3131 = vld [vmem:[%s3123 + $0x38] sm:$0xff]
    %v3132 = vld [vmem:[%s3123 + $0x40] sm:$0xff]
    %v3133 = vld [vmem:[%s3123 + $0x48] sm:$0xff]
    %v3134 = vld [vmem:[%s3123 + $0x50] sm:$0xff]
    %v3135 = vld [vmem:[%s3123 + $0x58] sm:$0xff]
    %v3136 = vld [vmem:[%s3123 + $0x60] sm:$0xff]
    %v3137 = vld [vmem:[%s3123 + $0x68] sm:$0xff]
    %v3138 = vld [vmem:[%s3123 + $0x70] sm:$0xff]
    %v3139 = vld [vmem:[%s3123 + $0x78] sm:$0xff]
    %3140 = vmatpush.msra.mxu0 %v3139
    %3141 = vmatpush.msra.mxu0 %v3138
    %3142 = vmatpush.msra.mxu0 %v3137
    %3143 = vmatpush.msra.mxu0 %v3136
    %3144 = vmatpush.msra.mxu0 %v3135
    %3145 = vmatpush.msra.mxu0 %v3134
    %3146 = vmatpush.msra.mxu0 %v3133
    %3147 = vmatpush.msra.mxu0 %v3132
    %3148 = vmatpush.msra.mxu0 %v3131
    %3149 = vmatpush.msra.mxu0 %v3130
    %3150 = vmatpush.msra.mxu0 %v3129
    %3151 = vmatpush.msra.mxu0 %v3128
    %3152 = vmatpush.msra.mxu0 %v3127
    %3153 = vmatpush.msra.mxu0 %v3126
    %3154 = vmatpush.msra.mxu0 %v3125
    %3155 = vmatpush.msra.mxu0 %v3124
    %3156 = vmatmul.f32.gmra.mxu0 %v2625
    %v3157 = vpop.f32.mrf.mxu0
    %v3158 = vadd.f32 0.0, %v3157
    %3159 = vmatmul.f32.gmra.mxu0 %v2628
    %v3160 = vpop.f32.mrf.mxu0
    %v3161 = vadd.f32 0.0, %v3160
    %3162 = vmatmul.f32.gmra.mxu0 %v2631
    %v3163 = vpop.f32.mrf.mxu0
    %v3164 = vadd.f32 0.0, %v3163
    %3165 = vmatmul.f32.gmra.mxu0 %v2634
    %v3166 = vpop.f32.mrf.mxu0
    %v3167 = vadd.f32 0.0, %v3166
    %3168 = vmatmul.f32.gmra.mxu0 %v2637
    %v3169 = vpop.f32.mrf.mxu0
    %v3170 = vadd.f32 0.0, %v3169
    %3171 = vmatmul.f32.gmra.mxu0 %v2640
    %v3172 = vpop.f32.mrf.mxu0
    %v3173 = vadd.f32 0.0, %v3172
    %3174 = vmatmul.f32.gmra.mxu0 %v2643
    %v3175 = vpop.f32.mrf.mxu0
    %v3176 = vadd.f32 0.0, %v3175
    %3177 = vmatmul.f32.gmra.mxu0 %v2646
    %v3178 = vpop.f32.mrf.mxu0
    %v3179 = vadd.f32 0.0, %v3178
    %3180 = vmatmul.f32.gmra.mxu0 %v2649
    %v3181 = vpop.f32.mrf.mxu0
    %v3182 = vadd.f32 0.0, %v3181
    %3183 = vmatmul.f32.gmra.mxu0 %v2652
    %v3184 = vpop.f32.mrf.mxu0
    %v3185 = vadd.f32 0.0, %v3184
    %3186 = vmatmul.f32.gmra.mxu0 %v2655
    %v3187 = vpop.f32.mrf.mxu0
    %v3188 = vadd.f32 0.0, %v3187
    %3189 = vmatmul.f32.gmra.mxu0 %v2658
    %v3190 = vpop.f32.mrf.mxu0
    %v3191 = vadd.f32 0.0, %v3190
    %3192 = vmatmul.f32.gmra.mxu0 %v2661
    %v3193 = vpop.f32.mrf.mxu0
    %v3194 = vadd.f32 0.0, %v3193
    %3195 = vmatmul.f32.gmra.mxu0 %v2664
    %v3196 = vpop.f32.mrf.mxu0
    %v3197 = vadd.f32 0.0, %v3196
    %3198 = vmatmul.f32.gmra.mxu0 %v2667
    %v3199 = vpop.f32.mrf.mxu0
    %v3200 = vadd.f32 0.0, %v3199
    %3201 = vmatmul.f32.gmra.mxu0 %v2670
    %v3202 = vpop.f32.mrf.mxu0
    %v3203 = vadd.f32 0.0, %v3202
    %3204 = vdwg.mxu0
    %v3205 = vadd.f32 %v3076, %v3158
    %v3206 = vadd.f32 %v3079, %v3161
    %v3207 = vadd.f32 %v3082, %v3164
    %v3208 = vadd.f32 %v3085, %v3167
    %v3209 = vadd.f32 %v3088, %v3170
    %v3210 = vadd.f32 %v3091, %v3173
    %v3211 = vadd.f32 %v3094, %v3176
    %v3212 = vadd.f32 %v3097, %v3179
    %v3213 = vadd.f32 %v3100, %v3182
    %v3214 = vadd.f32 %v3103, %v3185
    %v3215 = vadd.f32 %v3106, %v3188
    %v3216 = vadd.f32 %v3109, %v3191
    %v3217 = vadd.f32 %v3112, %v3194
    %v3218 = vadd.f32 %v3115, %v3197
    %v3219 = vadd.f32 %v3118, %v3200
    %v3220 = vadd.f32 %v3121, %v3203
    %s3221 = scalar_lea.vmem [#allocation7], 384
    %v3222 = vld [vmem:[%s3221] sm:$0xff]
    %v3223 = vld [vmem:[%s3221 + $0x8] sm:$0xff]
    %v3224 = vld [vmem:[%s3221 + $0x10] sm:$0xff]
    %v3225 = vld [vmem:[%s3221 + $0x18] sm:$0xff]
    %v3226 = vld [vmem:[%s3221 + $0x20] sm:$0xff]
    %v3227 = vld [vmem:[%s3221 + $0x28] sm:$0xff]
    %v3228 = vld [vmem:[%s3221 + $0x30] sm:$0xff]
    %v3229 = vld [vmem:[%s3221 + $0x38] sm:$0xff]
    %v3230 = vld [vmem:[%s3221 + $0x40] sm:$0xff]
    %v3231 = vld [vmem:[%s3221 + $0x48] sm:$0xff]
    %v3232 = vld [vmem:[%s3221 + $0x50] sm:$0xff]
    %v3233 = vld [vmem:[%s3221 + $0x58] sm:$0xff]
    %v3234 = vld [vmem:[%s3221 + $0x60] sm:$0xff]
    %v3235 = vld [vmem:[%s3221 + $0x68] sm:$0xff]
    %v3236 = vld [vmem:[%s3221 + $0x70] sm:$0xff]
    %v3237 = vld [vmem:[%s3221 + $0x78] sm:$0xff]
    %3238 = vmatpush.msra.mxu0 %v3237
    %3239 = vmatpush.msra.mxu0 %v3236
    %3240 = vmatpush.msra.mxu0 %v3235
    %3241 = vmatpush.msra.mxu0 %v3234
    %3242 = vmatpush.msra.mxu0 %v3233
    %3243 = vmatpush.msra.mxu0 %v3232
    %3244 = vmatpush.msra.mxu0 %v3231
    %3245 = vmatpush.msra.mxu0 %v3230
    %3246 = vmatpush.msra.mxu0 %v3229
    %3247 = vmatpush.msra.mxu0 %v3228
    %3248 = vmatpush.msra.mxu0 %v3227
    %3249 = vmatpush.msra.mxu0 %v3226
    %3250 = vmatpush.msra.mxu0 %v3225
    %3251 = vmatpush.msra.mxu0 %v3224
    %3252 = vmatpush.msra.mxu0 %v3223
    %3253 = vmatpush.msra.mxu0 %v3222
    %3254 = vmatmul.f32.gmra.mxu0 %v2673
    %v3255 = vpop.f32.mrf.mxu0
    %v3256 = vadd.f32 0.0, %v3255
    %3257 = vmatmul.f32.gmra.mxu0 %v2676
    %v3258 = vpop.f32.mrf.mxu0
    %v3259 = vadd.f32 0.0, %v3258
    %3260 = vmatmul.f32.gmra.mxu0 %v2679
    %v3261 = vpop.f32.mrf.mxu0
    %v3262 = vadd.f32 0.0, %v3261
    %3263 = vmatmul.f32.gmra.mxu0 %v2682
    %v3264 = vpop.f32.mrf.mxu0
    %v3265 = vadd.f32 0.0, %v3264
    %3266 = vmatmul.f32.gmra.mxu0 %v2685
    %v3267 = vpop.f32.mrf.mxu0
    %v3268 = vadd.f32 0.0, %v3267
    %3269 = vmatmul.f32.gmra.mxu0 %v2688
    %v3270 = vpop.f32.mrf.mxu0
    %v3271 = vadd.f32 0.0, %v3270
    %3272 = vmatmul.f32.gmra.mxu0 %v2691
    %v3273 = vpop.f32.mrf.mxu0
    %v3274 = vadd.f32 0.0, %v3273
    %3275 = vmatmul.f32.gmra.mxu0 %v2694
    %v3276 = vpop.f32.mrf.mxu0
    %v3277 = vadd.f32 0.0, %v3276
    %3278 = vmatmul.f32.gmra.mxu0 %v2697
    %v3279 = vpop.f32.mrf.mxu0
    %v3280 = vadd.f32 0.0, %v3279
    %3281 = vmatmul.f32.gmra.mxu0 %v2700
    %v3282 = vpop.f32.mrf.mxu0
    %v3283 = vadd.f32 0.0, %v3282
    %3284 = vmatmul.f32.gmra.mxu0 %v2703
    %v3285 = vpop.f32.mrf.mxu0
    %v3286 = vadd.f32 0.0, %v3285
    %3287 = vmatmul.f32.gmra.mxu0 %v2706
    %v3288 = vpop.f32.mrf.mxu0
    %v3289 = vadd.f32 0.0, %v3288
    %3290 = vmatmul.f32.gmra.mxu0 %v2709
    %v3291 = vpop.f32.mrf.mxu0
    %v3292 = vadd.f32 0.0, %v3291
    %3293 = vmatmul.f32.gmra.mxu0 %v2712
    %v3294 = vpop.f32.mrf.mxu0
    %v3295 = vadd.f32 0.0, %v3294
    %3296 = vmatmul.f32.gmra.mxu0 %v2715
    %v3297 = vpop.f32.mrf.mxu0
    %v3298 = vadd.f32 0.0, %v3297
    %3299 = vmatmul.f32.gmra.mxu0 %v2718
    %v3300 = vpop.f32.mrf.mxu0
    %v3301 = vadd.f32 0.0, %v3300
    %3302 = vdwg.mxu0
    %v3303 = vadd.f32 %v3205, %v3256
    %v3304 = vadd.f32 %v3206, %v3259
    %v3305 = vadd.f32 %v3207, %v3262
    %v3306 = vadd.f32 %v3208, %v3265
    %v3307 = vadd.f32 %v3209, %v3268
    %v3308 = vadd.f32 %v3210, %v3271
    %v3309 = vadd.f32 %v3211, %v3274
    %v3310 = vadd.f32 %v3212, %v3277
    %v3311 = vadd.f32 %v3213, %v3280
    %v3312 = vadd.f32 %v3214, %v3283
    %v3313 = vadd.f32 %v3215, %v3286
    %v3314 = vadd.f32 %v3216, %v3289
    %v3315 = vadd.f32 %v3217, %v3292
    %v3316 = vadd.f32 %v3218, %v3295
    %v3317 = vadd.f32 %v3219, %v3298
    %v3318 = vadd.f32 %v3220, %v3301
    %s3319 = scalar_lea.vmem [#allocation7], 512
    %v3320 = vld [vmem:[%s3319] sm:$0xff]
    %v3321 = vld [vmem:[%s3319 + $0x8] sm:$0xff]
    %v3322 = vld [vmem:[%s3319 + $0x10] sm:$0xff]
    %v3323 = vld [vmem:[%s3319 + $0x18] sm:$0xff]
    %v3324 = vld [vmem:[%s3319 + $0x20] sm:$0xff]
    %v3325 = vld [vmem:[%s3319 + $0x28] sm:$0xff]
    %v3326 = vld [vmem:[%s3319 + $0x30] sm:$0xff]
    %v3327 = vld [vmem:[%s3319 + $0x38] sm:$0xff]
    %v3328 = vld [vmem:[%s3319 + $0x40] sm:$0xff]
    %v3329 = vld [vmem:[%s3319 + $0x48] sm:$0xff]
    %v3330 = vld [vmem:[%s3319 + $0x50] sm:$0xff]
    %v3331 = vld [vmem:[%s3319 + $0x58] sm:$0xff]
    %v3332 = vld [vmem:[%s3319 + $0x60] sm:$0xff]
    %v3333 = vld [vmem:[%s3319 + $0x68] sm:$0xff]
    %v3334 = vld [vmem:[%s3319 + $0x70] sm:$0xff]
    %v3335 = vld [vmem:[%s3319 + $0x78] sm:$0xff]
    %3336 = vmatpush.msra.mxu0 %v3335
    %3337 = vmatpush.msra.mxu0 %v3334
    %3338 = vmatpush.msra.mxu0 %v3333
    %3339 = vmatpush.msra.mxu0 %v3332
    %3340 = vmatpush.msra.mxu0 %v3331
    %3341 = vmatpush.msra.mxu0 %v3330
    %3342 = vmatpush.msra.mxu0 %v3329
    %3343 = vmatpush.msra.mxu0 %v3328
    %3344 = vmatpush.msra.mxu0 %v3327
    %3345 = vmatpush.msra.mxu0 %v3326
    %3346 = vmatpush.msra.mxu0 %v3325
    %3347 = vmatpush.msra.mxu0 %v3324
    %3348 = vmatpush.msra.mxu0 %v3323
    %3349 = vmatpush.msra.mxu0 %v3322
    %3350 = vmatpush.msra.mxu0 %v3321
    %3351 = vmatpush.msra.mxu0 %v3320
    %3352 = vmatmul.f32.gmra.mxu0 %v2721
    %v3353 = vpop.f32.mrf.mxu0
    %v3354 = vadd.f32 0.0, %v3353
    %3355 = vmatmul.f32.gmra.mxu0 %v2724
    %v3356 = vpop.f32.mrf.mxu0
    %v3357 = vadd.f32 0.0, %v3356
    %3358 = vmatmul.f32.gmra.mxu0 %v2727
    %v3359 = vpop.f32.mrf.mxu0
    %v3360 = vadd.f32 0.0, %v3359
    %3361 = vmatmul.f32.gmra.mxu0 %v2730
    %v3362 = vpop.f32.mrf.mxu0
    %v3363 = vadd.f32 0.0, %v3362
    %3364 = vmatmul.f32.gmra.mxu0 %v2733
    %v3365 = vpop.f32.mrf.mxu0
    %v3366 = vadd.f32 0.0, %v3365
    %3367 = vmatmul.f32.gmra.mxu0 %v2736
    %v3368 = vpop.f32.mrf.mxu0
    %v3369 = vadd.f32 0.0, %v3368
    %3370 = vmatmul.f32.gmra.mxu0 %v2739
    %v3371 = vpop.f32.mrf.mxu0
    %v3372 = vadd.f32 0.0, %v3371
    %3373 = vmatmul.f32.gmra.mxu0 %v2742
    %v3374 = vpop.f32.mrf.mxu0
    %v3375 = vadd.f32 0.0, %v3374
    %3376 = vmatmul.f32.gmra.mxu0 %v2745
    %v3377 = vpop.f32.mrf.mxu0
    %v3378 = vadd.f32 0.0, %v3377
    %3379 = vmatmul.f32.gmra.mxu0 %v2748
    %v3380 = vpop.f32.mrf.mxu0
    %v3381 = vadd.f32 0.0, %v3380
    %3382 = vmatmul.f32.gmra.mxu0 %v2751
    %v3383 = vpop.f32.mrf.mxu0
    %v3384 = vadd.f32 0.0, %v3383
    %3385 = vmatmul.f32.gmra.mxu0 %v2754
    %v3386 = vpop.f32.mrf.mxu0
    %v3387 = vadd.f32 0.0, %v3386
    %3388 = vmatmul.f32.gmra.mxu0 %v2757
    %v3389 = vpop.f32.mrf.mxu0
    %v3390 = vadd.f32 0.0, %v3389
    %3391 = vmatmul.f32.gmra.mxu0 %v2760
    %v3392 = vpop.f32.mrf.mxu0
    %v3393 = vadd.f32 0.0, %v3392
    %3394 = vmatmul.f32.gmra.mxu0 %v2763
    %v3395 = vpop.f32.mrf.mxu0
    %v3396 = vadd.f32 0.0, %v3395
    %3397 = vmatmul.f32.gmra.mxu0 %v2766
    %v3398 = vpop.f32.mrf.mxu0
    %v3399 = vadd.f32 0.0, %v3398
    %3400 = vdwg.mxu0
    %v3401 = vadd.f32 %v3303, %v3354
    %v3402 = vadd.f32 %v3304, %v3357
    %v3403 = vadd.f32 %v3305, %v3360
    %v3404 = vadd.f32 %v3306, %v3363
    %v3405 = vadd.f32 %v3307, %v3366
    %v3406 = vadd.f32 %v3308, %v3369
    %v3407 = vadd.f32 %v3309, %v3372
    %v3408 = vadd.f32 %v3310, %v3375
    %v3409 = vadd.f32 %v3311, %v3378
    %v3410 = vadd.f32 %v3312, %v3381
    %v3411 = vadd.f32 %v3313, %v3384
    %v3412 = vadd.f32 %v3314, %v3387
    %v3413 = vadd.f32 %v3315, %v3390
    %v3414 = vadd.f32 %v3316, %v3393
    %v3415 = vadd.f32 %v3317, %v3396
    %v3416 = vadd.f32 %v3318, %v3399
    %s3417 = scalar_lea.vmem [#allocation7], 640
    %v3418 = vld [vmem:[%s3417] sm:$0xff]
    %v3419 = vld [vmem:[%s3417 + $0x8] sm:$0xff]
    %v3420 = vld [vmem:[%s3417 + $0x10] sm:$0xff]
    %v3421 = vld [vmem:[%s3417 + $0x18] sm:$0xff]
    %v3422 = vld [vmem:[%s3417 + $0x20] sm:$0xff]
    %v3423 = vld [vmem:[%s3417 + $0x28] sm:$0xff]
    %v3424 = vld [vmem:[%s3417 + $0x30] sm:$0xff]
    %v3425 = vld [vmem:[%s3417 + $0x38] sm:$0xff]
    %v3426 = vld [vmem:[%s3417 + $0x40] sm:$0xff]
    %v3427 = vld [vmem:[%s3417 + $0x48] sm:$0xff]
    %v3428 = vld [vmem:[%s3417 + $0x50] sm:$0xff]
    %v3429 = vld [vmem:[%s3417 + $0x58] sm:$0xff]
    %v3430 = vld [vmem:[%s3417 + $0x60] sm:$0xff]
    %v3431 = vld [vmem:[%s3417 + $0x68] sm:$0xff]
    %v3432 = vld [vmem:[%s3417 + $0x70] sm:$0xff]
    %v3433 = vld [vmem:[%s3417 + $0x78] sm:$0xff]
    %3434 = vmatpush.msra.mxu0 %v3433
    %3435 = vmatpush.msra.mxu0 %v3432
    %3436 = vmatpush.msra.mxu0 %v3431
    %3437 = vmatpush.msra.mxu0 %v3430
    %3438 = vmatpush.msra.mxu0 %v3429
    %3439 = vmatpush.msra.mxu0 %v3428
    %3440 = vmatpush.msra.mxu0 %v3427
    %3441 = vmatpush.msra.mxu0 %v3426
    %3442 = vmatpush.msra.mxu0 %v3425
    %3443 = vmatpush.msra.mxu0 %v3424
    %3444 = vmatpush.msra.mxu0 %v3423
    %3445 = vmatpush.msra.mxu0 %v3422
    %3446 = vmatpush.msra.mxu0 %v3421
    %3447 = vmatpush.msra.mxu0 %v3420
    %3448 = vmatpush.msra.mxu0 %v3419
    %3449 = vmatpush.msra.mxu0 %v3418
    %3450 = vmatmul.f32.gmra.mxu0 %v2769
    %v3451 = vpop.f32.mrf.mxu0
    %v3452 = vadd.f32 0.0, %v3451
    %3453 = vmatmul.f32.gmra.mxu0 %v2772
    %v3454 = vpop.f32.mrf.mxu0
    %v3455 = vadd.f32 0.0, %v3454
    %3456 = vmatmul.f32.gmra.mxu0 %v2775
    %v3457 = vpop.f32.mrf.mxu0
    %v3458 = vadd.f32 0.0, %v3457
    %3459 = vmatmul.f32.gmra.mxu0 %v2778
    %v3460 = vpop.f32.mrf.mxu0
    %v3461 = vadd.f32 0.0, %v3460
    %3462 = vmatmul.f32.gmra.mxu0 %v2781
    %v3463 = vpop.f32.mrf.mxu0
    %v3464 = vadd.f32 0.0, %v3463
    %3465 = vmatmul.f32.gmra.mxu0 %v2784
    %v3466 = vpop.f32.mrf.mxu0
    %v3467 = vadd.f32 0.0, %v3466
    %3468 = vmatmul.f32.gmra.mxu0 %v2787
    %v3469 = vpop.f32.mrf.mxu0
    %v3470 = vadd.f32 0.0, %v3469
    %3471 = vmatmul.f32.gmra.mxu0 %v2790
    %v3472 = vpop.f32.mrf.mxu0
    %v3473 = vadd.f32 0.0, %v3472
    %3474 = vmatmul.f32.gmra.mxu0 %v2793
    %v3475 = vpop.f32.mrf.mxu0
    %v3476 = vadd.f32 0.0, %v3475
    %3477 = vmatmul.f32.gmra.mxu0 %v2796
    %v3478 = vpop.f32.mrf.mxu0
    %v3479 = vadd.f32 0.0, %v3478
    %3480 = vmatmul.f32.gmra.mxu0 %v2799
    %v3481 = vpop.f32.mrf.mxu0
    %v3482 = vadd.f32 0.0, %v3481
    %3483 = vmatmul.f32.gmra.mxu0 %v2802
    %v3484 = vpop.f32.mrf.mxu0
    %v3485 = vadd.f32 0.0, %v3484
    %3486 = vmatmul.f32.gmra.mxu0 %v2805
    %v3487 = vpop.f32.mrf.mxu0
    %v3488 = vadd.f32 0.0, %v3487
    %3489 = vmatmul.f32.gmra.mxu0 %v2808
    %v3490 = vpop.f32.mrf.mxu0
    %v3491 = vadd.f32 0.0, %v3490
    %3492 = vmatmul.f32.gmra.mxu0 %v2811
    %v3493 = vpop.f32.mrf.mxu0
    %v3494 = vadd.f32 0.0, %v3493
    %3495 = vmatmul.f32.gmra.mxu0 %v2814
    %v3496 = vpop.f32.mrf.mxu0
    %v3497 = vadd.f32 0.0, %v3496
    %3498 = vdwg.mxu0
    %v3499 = vadd.f32 %v3401, %v3452
    %v3500 = vadd.f32 %v3402, %v3455
    %v3501 = vadd.f32 %v3403, %v3458
    %v3502 = vadd.f32 %v3404, %v3461
    %v3503 = vadd.f32 %v3405, %v3464
    %v3504 = vadd.f32 %v3406, %v3467
    %v3505 = vadd.f32 %v3407, %v3470
    %v3506 = vadd.f32 %v3408, %v3473
    %v3507 = vadd.f32 %v3409, %v3476
    %v3508 = vadd.f32 %v3410, %v3479
    %v3509 = vadd.f32 %v3411, %v3482
    %v3510 = vadd.f32 %v3412, %v3485
    %v3511 = vadd.f32 %v3413, %v3488
    %v3512 = vadd.f32 %v3414, %v3491
    %v3513 = vadd.f32 %v3415, %v3494
    %v3514 = vadd.f32 %v3416, %v3497
    %s3515 = scalar_lea.vmem [#allocation7], 768
    %v3516 = vld [vmem:[%s3515] sm:$0xff]
    %v3517 = vld [vmem:[%s3515 + $0x8] sm:$0xff]
    %v3518 = vld [vmem:[%s3515 + $0x10] sm:$0xff]
    %v3519 = vld [vmem:[%s3515 + $0x18] sm:$0xff]
    %v3520 = vld [vmem:[%s3515 + $0x20] sm:$0xff]
    %v3521 = vld [vmem:[%s3515 + $0x28] sm:$0xff]
    %v3522 = vld [vmem:[%s3515 + $0x30] sm:$0xff]
    %v3523 = vld [vmem:[%s3515 + $0x38] sm:$0xff]
    %v3524 = vld [vmem:[%s3515 + $0x40] sm:$0xff]
    %v3525 = vld [vmem:[%s3515 + $0x48] sm:$0xff]
    %v3526 = vld [vmem:[%s3515 + $0x50] sm:$0xff]
    %v3527 = vld [vmem:[%s3515 + $0x58] sm:$0xff]
    %v3528 = vld [vmem:[%s3515 + $0x60] sm:$0xff]
    %v3529 = vld [vmem:[%s3515 + $0x68] sm:$0xff]
    %v3530 = vld [vmem:[%s3515 + $0x70] sm:$0xff]
    %v3531 = vld [vmem:[%s3515 + $0x78] sm:$0xff]
    %3532 = vmatpush.msra.mxu0 %v3531
    %3533 = vmatpush.msra.mxu0 %v3530
    %3534 = vmatpush.msra.mxu0 %v3529
    %3535 = vmatpush.msra.mxu0 %v3528
    %3536 = vmatpush.msra.mxu0 %v3527
    %3537 = vmatpush.msra.mxu0 %v3526
    %3538 = vmatpush.msra.mxu0 %v3525
    %3539 = vmatpush.msra.mxu0 %v3524
    %3540 = vmatpush.msra.mxu0 %v3523
    %3541 = vmatpush.msra.mxu0 %v3522
    %3542 = vmatpush.msra.mxu0 %v3521
    %3543 = vmatpush.msra.mxu0 %v3520
    %3544 = vmatpush.msra.mxu0 %v3519
    %3545 = vmatpush.msra.mxu0 %v3518
    %3546 = vmatpush.msra.mxu0 %v3517
    %3547 = vmatpush.msra.mxu0 %v3516
    %3548 = vmatmul.f32.gmra.mxu0 %v2817
    %v3549 = vpop.f32.mrf.mxu0
    %v3550 = vadd.f32 0.0, %v3549
    %3551 = vmatmul.f32.gmra.mxu0 %v2820
    %v3552 = vpop.f32.mrf.mxu0
    %v3553 = vadd.f32 0.0, %v3552
    %3554 = vmatmul.f32.gmra.mxu0 %v2823
    %v3555 = vpop.f32.mrf.mxu0
    %v3556 = vadd.f32 0.0, %v3555
    %3557 = vmatmul.f32.gmra.mxu0 %v2826
    %v3558 = vpop.f32.mrf.mxu0
    %v3559 = vadd.f32 0.0, %v3558
    %3560 = vmatmul.f32.gmra.mxu0 %v2829
    %v3561 = vpop.f32.mrf.mxu0
    %v3562 = vadd.f32 0.0, %v3561
    %3563 = vmatmul.f32.gmra.mxu0 %v2832
    %v3564 = vpop.f32.mrf.mxu0
    %v3565 = vadd.f32 0.0, %v3564
    %3566 = vmatmul.f32.gmra.mxu0 %v2835
    %v3567 = vpop.f32.mrf.mxu0
    %v3568 = vadd.f32 0.0, %v3567
    %3569 = vmatmul.f32.gmra.mxu0 %v2838
    %v3570 = vpop.f32.mrf.mxu0
    %v3571 = vadd.f32 0.0, %v3570
    %3572 = vmatmul.f32.gmra.mxu0 %v2841
    %v3573 = vpop.f32.mrf.mxu0
    %v3574 = vadd.f32 0.0, %v3573
    %3575 = vmatmul.f32.gmra.mxu0 %v2844
    %v3576 = vpop.f32.mrf.mxu0
    %v3577 = vadd.f32 0.0, %v3576
    %3578 = vmatmul.f32.gmra.mxu0 %v2847
    %v3579 = vpop.f32.mrf.mxu0
    %v3580 = vadd.f32 0.0, %v3579
    %3581 = vmatmul.f32.gmra.mxu0 %v2850
    %v3582 = vpop.f32.mrf.mxu0
    %v3583 = vadd.f32 0.0, %v3582
    %3584 = vmatmul.f32.gmra.mxu0 %v2853
    %v3585 = vpop.f32.mrf.mxu0
    %v3586 = vadd.f32 0.0, %v3585
    %3587 = vmatmul.f32.gmra.mxu0 %v2856
    %v3588 = vpop.f32.mrf.mxu0
    %v3589 = vadd.f32 0.0, %v3588
    %3590 = vmatmul.f32.gmra.mxu0 %v2859
    %v3591 = vpop.f32.mrf.mxu0
    %v3592 = vadd.f32 0.0, %v3591
    %3593 = vmatmul.f32.gmra.mxu0 %v2862
    %v3594 = vpop.f32.mrf.mxu0
    %v3595 = vadd.f32 0.0, %v3594
    %3596 = vdwg.mxu0
    %v3597 = vadd.f32 %v3499, %v3550
    %v3598 = vadd.f32 %v3500, %v3553
    %v3599 = vadd.f32 %v3501, %v3556
    %v3600 = vadd.f32 %v3502, %v3559
    %v3601 = vadd.f32 %v3503, %v3562
    %v3602 = vadd.f32 %v3504, %v3565
    %v3603 = vadd.f32 %v3505, %v3568
    %v3604 = vadd.f32 %v3506, %v3571
    %v3605 = vadd.f32 %v3507, %v3574
    %v3606 = vadd.f32 %v3508, %v3577
    %v3607 = vadd.f32 %v3509, %v3580
    %v3608 = vadd.f32 %v3510, %v3583
    %v3609 = vadd.f32 %v3511, %v3586
    %v3610 = vadd.f32 %v3512, %v3589
    %v3611 = vadd.f32 %v3513, %v3592
    %v3612 = vadd.f32 %v3514, %v3595
    %s3613 = scalar_lea.vmem [#allocation7], 896
    %v3614 = vld [vmem:[%s3613] sm:$0xff]
    %v3615 = vld [vmem:[%s3613 + $0x8] sm:$0xff]
    %v3616 = vld [vmem:[%s3613 + $0x10] sm:$0xff]
    %v3617 = vld [vmem:[%s3613 + $0x18] sm:$0xff]
    %v3618 = vld [vmem:[%s3613 + $0x20] sm:$0xff]
    %v3619 = vld [vmem:[%s3613 + $0x28] sm:$0xff]
    %v3620 = vld [vmem:[%s3613 + $0x30] sm:$0xff]
    %v3621 = vld [vmem:[%s3613 + $0x38] sm:$0xff]
    %v3622 = vld [vmem:[%s3613 + $0x40] sm:$0xff]
    %v3623 = vld [vmem:[%s3613 + $0x48] sm:$0xff]
    %v3624 = vld [vmem:[%s3613 + $0x50] sm:$0xff]
    %v3625 = vld [vmem:[%s3613 + $0x58] sm:$0xff]
    %v3626 = vld [vmem:[%s3613 + $0x60] sm:$0xff]
    %v3627 = vld [vmem:[%s3613 + $0x68] sm:$0xff]
    %v3628 = vld [vmem:[%s3613 + $0x70] sm:$0xff]
    %v3629 = vld [vmem:[%s3613 + $0x78] sm:$0xff]
    %3630 = vmatpush.msra.mxu0 %v3629
    %3631 = vmatpush.msra.mxu0 %v3628
    %3632 = vmatpush.msra.mxu0 %v3627
    %3633 = vmatpush.msra.mxu0 %v3626
    %3634 = vmatpush.msra.mxu0 %v3625
    %3635 = vmatpush.msra.mxu0 %v3624
    %3636 = vmatpush.msra.mxu0 %v3623
    %3637 = vmatpush.msra.mxu0 %v3622
    %3638 = vmatpush.msra.mxu0 %v3621
    %3639 = vmatpush.msra.mxu0 %v3620
    %3640 = vmatpush.msra.mxu0 %v3619
    %3641 = vmatpush.msra.mxu0 %v3618
    %3642 = vmatpush.msra.mxu0 %v3617
    %3643 = vmatpush.msra.mxu0 %v3616
    %3644 = vmatpush.msra.mxu0 %v3615
    %3645 = vmatpush.msra.mxu0 %v3614
    %3646 = vmatmul.f32.gmra.mxu0 %v2865
    %v3647 = vpop.f32.mrf.mxu0
    %v3648 = vadd.f32 0.0, %v3647
    %3649 = vmatmul.f32.gmra.mxu0 %v2868
    %v3650 = vpop.f32.mrf.mxu0
    %v3651 = vadd.f32 0.0, %v3650
    %3652 = vmatmul.f32.gmra.mxu0 %v2871
    %v3653 = vpop.f32.mrf.mxu0
    %v3654 = vadd.f32 0.0, %v3653
    %3655 = vmatmul.f32.gmra.mxu0 %v2874
    %v3656 = vpop.f32.mrf.mxu0
    %v3657 = vadd.f32 0.0, %v3656
    %3658 = vmatmul.f32.gmra.mxu0 %v2877
    %v3659 = vpop.f32.mrf.mxu0
    %v3660 = vadd.f32 0.0, %v3659
    %3661 = vmatmul.f32.gmra.mxu0 %v2880
    %v3662 = vpop.f32.mrf.mxu0
    %v3663 = vadd.f32 0.0, %v3662
    %3664 = vmatmul.f32.gmra.mxu0 %v2883
    %v3665 = vpop.f32.mrf.mxu0
    %v3666 = vadd.f32 0.0, %v3665
    %3667 = vmatmul.f32.gmra.mxu0 %v2886
    %v3668 = vpop.f32.mrf.mxu0
    %v3669 = vadd.f32 0.0, %v3668
    %3670 = vmatmul.f32.gmra.mxu0 %v2889
    %v3671 = vpop.f32.mrf.mxu0
    %v3672 = vadd.f32 0.0, %v3671
    %3673 = vmatmul.f32.gmra.mxu0 %v2892
    %v3674 = vpop.f32.mrf.mxu0
    %v3675 = vadd.f32 0.0, %v3674
    %3676 = vmatmul.f32.gmra.mxu0 %v2895
    %v3677 = vpop.f32.mrf.mxu0
    %v3678 = vadd.f32 0.0, %v3677
    %3679 = vmatmul.f32.gmra.mxu0 %v2898
    %v3680 = vpop.f32.mrf.mxu0
    %v3681 = vadd.f32 0.0, %v3680
    %3682 = vmatmul.f32.gmra.mxu0 %v2901
    %v3683 = vpop.f32.mrf.mxu0
    %v3684 = vadd.f32 0.0, %v3683
    %3685 = vmatmul.f32.gmra.mxu0 %v2904
    %v3686 = vpop.f32.mrf.mxu0
    %v3687 = vadd.f32 0.0, %v3686
    %3688 = vmatmul.f32.gmra.mxu0 %v2907
    %v3689 = vpop.f32.mrf.mxu0
    %v3690 = vadd.f32 0.0, %v3689
    %3691 = vmatmul.f32.gmra.mxu0 %v2910
    %v3692 = vpop.f32.mrf.mxu0
    %v3693 = vadd.f32 0.0, %v3692
    %3694 = vdwg.mxu0
    %v3695 = vadd.f32 %v3597, %v3648
    %v3696 = vadd.f32 %v3598, %v3651
    %v3697 = vadd.f32 %v3599, %v3654
    %v3698 = vadd.f32 %v3600, %v3657
    %v3699 = vadd.f32 %v3601, %v3660
    %v3700 = vadd.f32 %v3602, %v3663
    %v3701 = vadd.f32 %v3603, %v3666
    %v3702 = vadd.f32 %v3604, %v3669
    %v3703 = vadd.f32 %v3605, %v3672
    %v3704 = vadd.f32 %v3606, %v3675
    %v3705 = vadd.f32 %v3607, %v3678
    %v3706 = vadd.f32 %v3608, %v3681
    %v3707 = vadd.f32 %v3609, %v3684
    %v3708 = vadd.f32 %v3610, %v3687
    %v3709 = vadd.f32 %v3611, %v3690
    %v3710 = vadd.f32 %v3612, %v3693
    %s3711 = scalar_lea.vmem [#allocation7], 1024
    %v3712 = vld [vmem:[%s3711] sm:$0xff]
    %v3713 = vld [vmem:[%s3711 + $0x8] sm:$0xff]
    %v3714 = vld [vmem:[%s3711 + $0x10] sm:$0xff]
    %v3715 = vld [vmem:[%s3711 + $0x18] sm:$0xff]
    %v3716 = vld [vmem:[%s3711 + $0x20] sm:$0xff]
    %v3717 = vld [vmem:[%s3711 + $0x28] sm:$0xff]
    %v3718 = vld [vmem:[%s3711 + $0x30] sm:$0xff]
    %v3719 = vld [vmem:[%s3711 + $0x38] sm:$0xff]
    %v3720 = vld [vmem:[%s3711 + $0x40] sm:$0xff]
    %v3721 = vld [vmem:[%s3711 + $0x48] sm:$0xff]
    %v3722 = vld [vmem:[%s3711 + $0x50] sm:$0xff]
    %v3723 = vld [vmem:[%s3711 + $0x58] sm:$0xff]
    %v3724 = vld [vmem:[%s3711 + $0x60] sm:$0xff]
    %v3725 = vld [vmem:[%s3711 + $0x68] sm:$0xff]
    %v3726 = vld [vmem:[%s3711 + $0x70] sm:$0xff]
    %v3727 = vld [vmem:[%s3711 + $0x78] sm:$0xff]
    %3728 = vmatpush.msra.mxu0 %v3727
    %3729 = vmatpush.msra.mxu0 %v3726
    %3730 = vmatpush.msra.mxu0 %v3725
    %3731 = vmatpush.msra.mxu0 %v3724
    %3732 = vmatpush.msra.mxu0 %v3723
    %3733 = vmatpush.msra.mxu0 %v3722
    %3734 = vmatpush.msra.mxu0 %v3721
    %3735 = vmatpush.msra.mxu0 %v3720
    %3736 = vmatpush.msra.mxu0 %v3719
    %3737 = vmatpush.msra.mxu0 %v3718
    %3738 = vmatpush.msra.mxu0 %v3717
    %3739 = vmatpush.msra.mxu0 %v3716
    %3740 = vmatpush.msra.mxu0 %v3715
    %3741 = vmatpush.msra.mxu0 %v3714
    %3742 = vmatpush.msra.mxu0 %v3713
    %3743 = vmatpush.msra.mxu0 %v3712
    %3744 = vmatmul.f32.gmra.mxu0 %v2913
    %v3745 = vpop.f32.mrf.mxu0
    %v3746 = vadd.f32 0.0, %v3745
    %3747 = vmatmul.f32.gmra.mxu0 %v2916
    %v3748 = vpop.f32.mrf.mxu0
    %v3749 = vadd.f32 0.0, %v3748
    %3750 = vmatmul.f32.gmra.mxu0 %v2919
    %v3751 = vpop.f32.mrf.mxu0
    %v3752 = vadd.f32 0.0, %v3751
    %3753 = vmatmul.f32.gmra.mxu0 %v2922
    %v3754 = vpop.f32.mrf.mxu0
    %v3755 = vadd.f32 0.0, %v3754
    %3756 = vmatmul.f32.gmra.mxu0 %v2925
    %v3757 = vpop.f32.mrf.mxu0
    %v3758 = vadd.f32 0.0, %v3757
    %3759 = vmatmul.f32.gmra.mxu0 %v2928
    %v3760 = vpop.f32.mrf.mxu0
    %v3761 = vadd.f32 0.0, %v3760
    %3762 = vmatmul.f32.gmra.mxu0 %v2931
    %v3763 = vpop.f32.mrf.mxu0
    %v3764 = vadd.f32 0.0, %v3763
    %3765 = vmatmul.f32.gmra.mxu0 %v2934
    %v3766 = vpop.f32.mrf.mxu0
    %v3767 = vadd.f32 0.0, %v3766
    %3768 = vmatmul.f32.gmra.mxu0 %v2937
    %v3769 = vpop.f32.mrf.mxu0
    %v3770 = vadd.f32 0.0, %v3769
    %3771 = vmatmul.f32.gmra.mxu0 %v2940
    %v3772 = vpop.f32.mrf.mxu0
    %v3773 = vadd.f32 0.0, %v3772
    %3774 = vmatmul.f32.gmra.mxu0 %v2943
    %v3775 = vpop.f32.mrf.mxu0
    %v3776 = vadd.f32 0.0, %v3775
    %3777 = vmatmul.f32.gmra.mxu0 %v2946
    %v3778 = vpop.f32.mrf.mxu0
    %v3779 = vadd.f32 0.0, %v3778
    %3780 = vmatmul.f32.gmra.mxu0 %v2949
    %v3781 = vpop.f32.mrf.mxu0
    %v3782 = vadd.f32 0.0, %v3781
    %3783 = vmatmul.f32.gmra.mxu0 %v2952
    %v3784 = vpop.f32.mrf.mxu0
    %v3785 = vadd.f32 0.0, %v3784
    %3786 = vmatmul.f32.gmra.mxu0 %v2955
    %v3787 = vpop.f32.mrf.mxu0
    %v3788 = vadd.f32 0.0, %v3787
    %3789 = vmatmul.f32.gmra.mxu0 %v2958
    %v3790 = vpop.f32.mrf.mxu0
    %v3791 = vadd.f32 0.0, %v3790
    %3792 = vdwg.mxu0
    %v3793 = vadd.f32 %v3695, %v3746
    %v3794 = vadd.f32 %v3696, %v3749
    %v3795 = vadd.f32 %v3697, %v3752
    %v3796 = vadd.f32 %v3698, %v3755
    %v3797 = vadd.f32 %v3699, %v3758
    %v3798 = vadd.f32 %v3700, %v3761
    %v3799 = vadd.f32 %v3701, %v3764
    %v3800 = vadd.f32 %v3702, %v3767
    %v3801 = vadd.f32 %v3703, %v3770
    %v3802 = vadd.f32 %v3704, %v3773
    %v3803 = vadd.f32 %v3705, %v3776
    %v3804 = vadd.f32 %v3706, %v3779
    %v3805 = vadd.f32 %v3707, %v3782
    %v3806 = vadd.f32 %v3708, %v3785
    %v3807 = vadd.f32 %v3709, %v3788
    %v3808 = vadd.f32 %v3710, %v3791
    %v3809 = vadd.f32 %v3793, %v3794
    %v3810 = vadd.f32 %v3809, %v3795
    %v3811 = vadd.f32 %v3810, %v3796
    %v3812 = vadd.f32 %v3811, %v3797
    %v3813 = vadd.f32 %v3812, %v3798
    %v3814 = vadd.f32 %v3813, %v3799
    %v3815 = vadd.f32 %v3814, %v3800
    %v3816 = vadd.f32 %v3815, %v3801
    %v3817 = vadd.f32 %v3816, %v3802
    %v3818 = vadd.f32 %v3817, %v3803
    %v3819 = vadd.f32 %v3818, %v3804
    %v3820 = vadd.f32 %v3819, %v3805
    %v3821 = vadd.f32 %v3820, %v3806
    %v3822 = vadd.f32 %v3821, %v3807
    %v3823 = vadd.f32 %v3822, %v3808
    %v3824 = vrot.slane %v3823, 4
    %v3825 = vadd.f32 %v3823, %v3824
    %v3826 = vrot.slane %v3825, 2
    %v3827 = vadd.f32 %v3825, %v3826
    %v3828 = vrot.slane %v3827, 1
    %v3829 = vadd.f32 %v3827, %v3828
    %v3830 = vmul.f32 %v3793, %v3793
    %v3831 = vmul.f32 %v3794, %v3794
    %v3832 = vmul.f32 %v3795, %v3795
    %v3833 = vmul.f32 %v3796, %v3796
    %v3834 = vmul.f32 %v3797, %v3797
    %v3835 = vmul.f32 %v3798, %v3798
    %v3836 = vmul.f32 %v3799, %v3799
    %v3837 = vmul.f32 %v3800, %v3800
    %v3838 = vmul.f32 %v3801, %v3801
    %v3839 = vmul.f32 %v3802, %v3802
    %v3840 = vmul.f32 %v3803, %v3803
    %v3841 = vmul.f32 %v3804, %v3804
    %v3842 = vmul.f32 %v3805, %v3805
    %v3843 = vmul.f32 %v3806, %v3806
    %v3844 = vmul.f32 %v3807, %v3807
    %v3845 = vmul.f32 %v3808, %v3808
    %v3846 = vadd.f32 %v3830, %v3831
    %v3847 = vadd.f32 %v3846, %v3832
    %v3848 = vadd.f32 %v3847, %v3833
    %v3849 = vadd.f32 %v3848, %v3834
    %v3850 = vadd.f32 %v3849, %v3835
    %v3851 = vadd.f32 %v3850, %v3836
    %v3852 = vadd.f32 %v3851, %v3837
    %v3853 = vadd.f32 %v3852, %v3838
    %v3854 = vadd.f32 %v3853, %v3839
    %v3855 = vadd.f32 %v3854, %v3840
    %v3856 = vadd.f32 %v3855, %v3841
    %v3857 = vadd.f32 %v3856, %v3842
    %v3858 = vadd.f32 %v3857, %v3843
    %v3859 = vadd.f32 %v3858, %v3844
    %v3860 = vadd.f32 %v3859, %v3845
    %v3861 = vrot.slane %v3860, 4
    %v3862 = vadd.f32 %v3860, %v3861
    %v3863 = vrot.slane %v3862, 2
    %v3864 = vadd.f32 %v3862, %v3863
    %v3865 = vrot.slane %v3864, 1
    %v3866 = vadd.f32 %v3864, %v3865
    %v3867 = vmul.f32 %v3829, 0.0078125
    %v3868 = vmul.f32 %v3866, 0.0078125
    %v3869 = vmul.f32 %v3867, %v3867
    %v3870 = vsub.f32 %v3868, %v3869
    %v3871 = vld [vmem:[#allocation11] sm:$0x1]
    %v3872 = vadd.f32 %v3870, 1e-05
    %v3873 = vrsqrt.pop %v3872
    %v3874 = vmul.f32 %v3873, %v3872
    %v3875 = vmul.f32 %v3874, %v3873
    %v3876 = vmul.f32 0.5, %v3875
    %v3877 = vsub.f32 1.5, %v3876
    %v3878 = vmul.f32 %v3873, %v3877
    %vm3879 = vweird.f32 %v3872
    %vm3880 = vweird.f32 %v3873
    %vm3881 = vmor %vm3879, %vm3880
    %v3882 = vsel %vm3881, %v3873, %v3878
    %v3883 = vmul.f32 %v3871, %v3882
    %v3884 = vld [vmem:[#allocation13] sm:$0x1]
    %v3885 = vmul.f32 %v3883, %v3867
    %v3886 = vsub.f32 %v3884, %v3885
    %v3888 = vperm.slane %v3883, 0
    %v3890 = vmul.f32 %v3793, %v3888
    %v3891 = vmul.f32 %v3794, %v3888
    %v3892 = vmul.f32 %v3795, %v3888
    %v3893 = vmul.f32 %v3796, %v3888
    %v3894 = vmul.f32 %v3797, %v3888
    %v3895 = vmul.f32 %v3798, %v3888
    %v3896 = vmul.f32 %v3799, %v3888
    %v3897 = vmul.f32 %v3800, %v3888
    %v3898 = vmul.f32 %v3801, %v3888
    %v3899 = vmul.f32 %v3802, %v3888
    %v3900 = vmul.f32 %v3803, %v3888
    %v3901 = vmul.f32 %v3804, %v3888
    %v3902 = vmul.f32 %v3805, %v3888
    %v3903 = vmul.f32 %v3806, %v3888
    %v3904 = vmul.f32 %v3807, %v3888
    %v3905 = vmul.f32 %v3808, %v3888
    %v3907 = vperm.slane %v3886, 0
    %v3909 = vadd.f32 %v3890, %v3907
    %v3910 = vadd.f32 %v3891, %v3907
    %v3911 = vadd.f32 %v3892, %v3907
    %v3912 = vadd.f32 %v3893, %v3907
    %v3913 = vadd.f32 %v3894, %v3907
    %v3914 = vadd.f32 %v3895, %v3907
    %v3915 = vadd.f32 %v3896, %v3907
    %v3916 = vadd.f32 %v3897, %v3907
    %v3917 = vadd.f32 %v3898, %v3907
    %v3918 = vadd.f32 %v3899, %v3907
    %v3919 = vadd.f32 %v3900, %v3907
    %v3920 = vadd.f32 %v3901, %v3907
    %v3921 = vadd.f32 %v3902, %v3907
    %v3922 = vadd.f32 %v3903, %v3907
    %v3923 = vadd.f32 %v3904, %v3907
    %v3924 = vadd.f32 %v3905, %v3907
    %v3925 = vmax.f32 %v3909, 0.0
    %v3926 = vmax.f32 %v3910, 0.0
    %v3927 = vmax.f32 %v3911, 0.0
    %v3928 = vmax.f32 %v3912, 0.0
    %v3929 = vmax.f32 %v3913, 0.0
    %v3930 = vmax.f32 %v3914, 0.0
    %v3931 = vmax.f32 %v3915, 0.0
    %v3932 = vmax.f32 %v3916, 0.0
    %v3933 = vmax.f32 %v3917, 0.0
    %v3934 = vmax.f32 %v3918, 0.0
    %v3935 = vmax.f32 %v3919, 0.0
    %v3936 = vmax.f32 %v3920, 0.0
    %v3937 = vmax.f32 %v3921, 0.0
    %v3938 = vmax.f32 %v3922, 0.0
    %v3939 = vmax.f32 %v3923, 0.0
    %v3940 = vmax.f32 %v3924, 0.0
    %v3941 = vld [vmem:[#allocation5] sm:$0xff]
    %v3942 = vld [vmem:[#allocation5 + $0x8] sm:$0xff]
    %v3943 = vld [vmem:[#allocation5 + $0x10] sm:$0xff]
    %v3944 = vld [vmem:[#allocation5 + $0x18] sm:$0xff]
    %v3945 = vld [vmem:[#allocation5 + $0x20] sm:$0xff]
    %v3946 = vld [vmem:[#allocation5 + $0x28] sm:$0xff]
    %v3947 = vld [vmem:[#allocation5 + $0x30] sm:$0xff]
    %v3948 = vld [vmem:[#allocation5 + $0x38] sm:$0xff]
    %v3949 = vld [vmem:[#allocation5 + $0x40] sm:$0xff]
    %v3950 = vld [vmem:[#allocation5 + $0x48] sm:$0xff]
    %v3951 = vld [vmem:[#allocation5 + $0x50] sm:$0xff]
    %v3952 = vld [vmem:[#allocation5 + $0x58] sm:$0xff]
    %v3953 = vld [vmem:[#allocation5 + $0x60] sm:$0xff]
    %v3954 = vld [vmem:[#allocation5 + $0x68] sm:$0xff]
    %v3955 = vld [vmem:[#allocation5 + $0x70] sm:$0xff]
    %v3956 = vld [vmem:[#allocation5 + $0x78] sm:$0xff]
    %v3957 = vld [vmem:[#allocation5 + $0x80] sm:$0xff]
    %v3958 = vld [vmem:[#allocation5 + $0x88] sm:$0xff]
    %v3959 = vld [vmem:[#allocation5 + $0x90] sm:$0xff]
    %v3960 = vld [vmem:[#allocation5 + $0x98] sm:$0xff]
    %v3961 = vld [vmem:[#allocation5 + $0xa0] sm:$0xff]
    %v3962 = vld [vmem:[#allocation5 + $0xa8] sm:$0xff]
    %v3963 = vld [vmem:[#allocation5 + $0xb0] sm:$0xff]
    %v3964 = vld [vmem:[#allocation5 + $0xb8] sm:$0xff]
    %v3965 = vld [vmem:[#allocation5 + $0xc0] sm:$0xff]
    %v3966 = vld [vmem:[#allocation5 + $0xc8] sm:$0xff]
    %v3967 = vld [vmem:[#allocation5 + $0xd0] sm:$0xff]
    %v3968 = vld [vmem:[#allocation5 + $0xd8] sm:$0xff]
    %v3969 = vld [vmem:[#allocation5 + $0xe0] sm:$0xff]
    %v3970 = vld [vmem:[#allocation5 + $0xe8] sm:$0xff]
    %v3971 = vld [vmem:[#allocation5 + $0xf0] sm:$0xff]
    %v3972 = vld [vmem:[#allocation5 + $0xf8] sm:$0xff]
    %v3973 = vld [vmem:[#allocation5 + $0x100] sm:$0xff]
    %v3974 = vld [vmem:[#allocation5 + $0x108] sm:$0xff]
    %v3975 = vld [vmem:[#allocation5 + $0x110] sm:$0xff]
    %v3976 = vld [vmem:[#allocation5 + $0x118] sm:$0xff]
    %3977 = vmatpush.msra.mxu0 %v3940
    %3978 = vmatpush.msra.mxu0 %v3939
    %3979 = vmatpush.msra.mxu0 %v3938
    %3980 = vmatpush.msra.mxu0 %v3937
    %3981 = vmatpush.msra.mxu0 %v3936
    %3982 = vmatpush.msra.mxu0 %v3935
    %3983 = vmatpush.msra.mxu0 %v3934
    %3984 = vmatpush.msra.mxu0 %v3933
    %3985 = vmatpush.msra.mxu0 %v3932
    %3986 = vmatpush.msra.mxu0 %v3931
    %3987 = vmatpush.msra.mxu0 %v3930
    %3988 = vmatpush.msra.mxu0 %v3929
    %3989 = vmatpush.msra.mxu0 %v3928
    %3990 = vmatpush.msra.mxu0 %v3927
    %3991 = vmatpush.msra.mxu0 %v3926
    %3992 = vmatpush.msra.mxu0 %v3925
    %3993 = vmatmul.f32.gmra.mxu0 %v3941
    %v3994 = vpop.f32.mrf.mxu0
    %v3995 = vadd.f32 0.0, %v3994
    %3996 = vmatmul.f32.gmra.mxu0 %v3942
    %v3997 = vpop.f32.mrf.mxu0
    %v3998 = vadd.f32 0.0, %v3997
    %3999 = vmatmul.f32.gmra.mxu0 %v3943
    %v4000 = vpop.f32.mrf.mxu0
    %v4001 = vadd.f32 0.0, %v4000
    %4002 = vmatmul.f32.gmra.mxu0 %v3944
    %v4003 = vpop.f32.mrf.mxu0
    %v4004 = vadd.f32 0.0, %v4003
    %4005 = vmatmul.f32.gmra.mxu0 %v3945
    %v4006 = vpop.f32.mrf.mxu0
    %v4007 = vadd.f32 0.0, %v4006
    %4008 = vmatmul.f32.gmra.mxu0 %v3946
    %v4009 = vpop.f32.mrf.mxu0
    %v4010 = vadd.f32 0.0, %v4009
    %4011 = vmatmul.f32.gmra.mxu0 %v3947
    %v4012 = vpop.f32.mrf.mxu0
    %v4013 = vadd.f32 0.0, %v4012
    %4014 = vmatmul.f32.gmra.mxu0 %v3948
    %v4015 = vpop.f32.mrf.mxu0
    %v4016 = vadd.f32 0.0, %v4015
    %4017 = vmatmul.f32.gmra.mxu0 %v3949
    %v4018 = vpop.f32.mrf.mxu0
    %v4019 = vadd.f32 0.0, %v4018
    %4020 = vmatmul.f32.gmra.mxu0 %v3950
    %v4021 = vpop.f32.mrf.mxu0
    %v4022 = vadd.f32 0.0, %v4021
    %4023 = vmatmul.f32.gmra.mxu0 %v3951
    %v4024 = vpop.f32.mrf.mxu0
    %v4025 = vadd.f32 0.0, %v4024
    %4026 = vmatmul.f32.gmra.mxu0 %v3952
    %v4027 = vpop.f32.mrf.mxu0
    %v4028 = vadd.f32 0.0, %v4027
    %4029 = vmatmul.f32.gmra.mxu0 %v3953
    %v4030 = vpop.f32.mrf.mxu0
    %v4031 = vadd.f32 0.0, %v4030
    %4032 = vmatmul.f32.gmra.mxu0 %v3954
    %v4033 = vpop.f32.mrf.mxu0
    %v4034 = vadd.f32 0.0, %v4033
    %4035 = vmatmul.f32.gmra.mxu0 %v3955
    %v4036 = vpop.f32.mrf.mxu0
    %v4037 = vadd.f32 0.0, %v4036
    %4038 = vmatmul.f32.gmra.mxu0 %v3956
    %v4039 = vpop.f32.mrf.mxu0
    %v4040 = vadd.f32 0.0, %v4039
    %4041 = vmatmul.f32.gmra.mxu0 %v3957
    %v4042 = vpop.f32.mrf.mxu0
    %v4043 = vadd.f32 0.0, %v4042
    %4044 = vmatmul.f32.gmra.mxu0 %v3958
    %v4045 = vpop.f32.mrf.mxu0
    %v4046 = vadd.f32 0.0, %v4045
    %4047 = vmatmul.f32.gmra.mxu0 %v3959
    %v4048 = vpop.f32.mrf.mxu0
    %v4049 = vadd.f32 0.0, %v4048
    %4050 = vmatmul.f32.gmra.mxu0 %v3960
    %v4051 = vpop.f32.mrf.mxu0
    %v4052 = vadd.f32 0.0, %v4051
    %4053 = vmatmul.f32.gmra.mxu0 %v3961
    %v4054 = vpop.f32.mrf.mxu0
    %v4055 = vadd.f32 0.0, %v4054
    %4056 = vmatmul.f32.gmra.mxu0 %v3962
    %v4057 = vpop.f32.mrf.mxu0
    %v4058 = vadd.f32 0.0, %v4057
    %4059 = vmatmul.f32.gmra.mxu0 %v3963
    %v4060 = vpop.f32.mrf.mxu0
    %v4061 = vadd.f32 0.0, %v4060
    %4062 = vmatmul.f32.gmra.mxu0 %v3964
    %v4063 = vpop.f32.mrf.mxu0
    %v4064 = vadd.f32 0.0, %v4063
    %4065 = vmatmul.f32.gmra.mxu0 %v3965
    %v4066 = vpop.f32.mrf.mxu0
    %v4067 = vadd.f32 0.0, %v4066
    %4068 = vmatmul.f32.gmra.mxu0 %v3966
    %v4069 = vpop.f32.mrf.mxu0
    %v4070 = vadd.f32 0.0, %v4069
    %4071 = vmatmul.f32.gmra.mxu0 %v3967
    %v4072 = vpop.f32.mrf.mxu0
    %v4073 = vadd.f32 0.0, %v4072
    %4074 = vmatmul.f32.gmra.mxu0 %v3968
    %v4075 = vpop.f32.mrf.mxu0
    %v4076 = vadd.f32 0.0, %v4075
    %4077 = vmatmul.f32.gmra.mxu0 %v3969
    %v4078 = vpop.f32.mrf.mxu0
    %v4079 = vadd.f32 0.0, %v4078
    %4080 = vmatmul.f32.gmra.mxu0 %v3970
    %v4081 = vpop.f32.mrf.mxu0
    %v4082 = vadd.f32 0.0, %v4081
    %4083 = vmatmul.f32.gmra.mxu0 %v3971
    %v4084 = vpop.f32.mrf.mxu0
    %v4085 = vadd.f32 0.0, %v4084
    %4086 = vmatmul.f32.gmra.mxu0 %v3972
    %v4087 = vpop.f32.mrf.mxu0
    %v4088 = vadd.f32 0.0, %v4087
    %4089 = vmatmul.f32.gmra.mxu0 %v3973
    %v4090 = vpop.f32.mrf.mxu0
    %v4091 = vadd.f32 0.0, %v4090
    %4092 = vmatmul.f32.gmra.mxu0 %v3974
    %v4093 = vpop.f32.mrf.mxu0
    %v4094 = vadd.f32 0.0, %v4093
    %4095 = vmatmul.f32.gmra.mxu0 %v3975
    %v4096 = vpop.f32.mrf.mxu0
    %v4097 = vadd.f32 0.0, %v4096
    %4098 = vmatmul.f32.gmra.mxu0 %v3976
    %v4099 = vpop.f32.mrf.mxu0
    %v4100 = vadd.f32 0.0, %v4099
    %4101 = vdwg.mxu0
    %v4102 = vld [vmem:[#allocation8] sm:$0xff]
    %v4103 = vld [vmem:[#allocation8 + $0x8] sm:$0xff]
    %v4104 = vld [vmem:[#allocation8 + $0x10] sm:$0xff]
    %v4105 = vld [vmem:[#allocation8 + $0x18] sm:$0xff]
    %v4106 = vld [vmem:[#allocation8 + $0x20] sm:$0xff]
    %v4107 = vld [vmem:[#allocation8 + $0x28] sm:$0xff]
    %v4108 = vld [vmem:[#allocation8 + $0x30] sm:$0xff]
    %v4109 = vld [vmem:[#allocation8 + $0x38] sm:$0xff]
    %v4110 = vld [vmem:[#allocation8 + $0x40] sm:$0xff]
    %v4111 = vld [vmem:[#allocation8 + $0x48] sm:$0xff]
    %v4112 = vld [vmem:[#allocation8 + $0x50] sm:$0xff]
    %v4113 = vld [vmem:[#allocation8 + $0x58] sm:$0xff]
    %v4114 = vld [vmem:[#allocation8 + $0x60] sm:$0xff]
    %v4115 = vld [vmem:[#allocation8 + $0x68] sm:$0xff]
    %v4116 = vld [vmem:[#allocation8 + $0x70] sm:$0xff]
    %v4117 = vld [vmem:[#allocation8 + $0x78] sm:$0xff]
    %s4118 = scalar_lea.vmem [#allocation8], 128
    %v4119 = vld [vmem:[%s4118] sm:$0xff]
    %v4120 = vld [vmem:[%s4118 + $0x8] sm:$0xff]
    %v4121 = vld [vmem:[%s4118 + $0x10] sm:$0xff]
    %v4122 = vld [vmem:[%s4118 + $0x18] sm:$0xff]
    %v4123 = vld [vmem:[%s4118 + $0x20] sm:$0xff]
    %v4124 = vld [vmem:[%s4118 + $0x28] sm:$0xff]
    %v4125 = vld [vmem:[%s4118 + $0x30] sm:$0xff]
    %v4126 = vld [vmem:[%s4118 + $0x38] sm:$0xff]
    %v4127 = vld [vmem:[%s4118 + $0x40] sm:$0xff]
    %v4128 = vld [vmem:[%s4118 + $0x48] sm:$0xff]
    %v4129 = vld [vmem:[%s4118 + $0x50] sm:$0xff]
    %v4130 = vld [vmem:[%s4118 + $0x58] sm:$0xff]
    %v4131 = vld [vmem:[%s4118 + $0x60] sm:$0xff]
    %v4132 = vld [vmem:[%s4118 + $0x68] sm:$0xff]
    %v4133 = vld [vmem:[%s4118 + $0x70] sm:$0xff]
    %v4134 = vld [vmem:[%s4118 + $0x78] sm:$0xff]
    %4135 = vmatpush.msra.mxu0 %v4134
    %4136 = vmatpush.msra.mxu0 %v4133
    %4137 = vmatpush.msra.mxu0 %v4132
    %4138 = vmatpush.msra.mxu0 %v4131
    %4139 = vmatpush.msra.mxu0 %v4130
    %4140 = vmatpush.msra.mxu0 %v4129
    %4141 = vmatpush.msra.mxu0 %v4128
    %4142 = vmatpush.msra.mxu0 %v4127
    %4143 = vmatpush.msra.mxu0 %v4126
    %4144 = vmatpush.msra.mxu0 %v4125
    %4145 = vmatpush.msra.mxu0 %v4124
    %4146 = vmatpush.msra.mxu0 %v4123
    %4147 = vmatpush.msra.mxu0 %v4122
    %4148 = vmatpush.msra.mxu0 %v4121
    %4149 = vmatpush.msra.mxu0 %v4120
    %4150 = vmatpush.msra.mxu0 %v4119
    %4151 = vmatmul.f32.gmra.mxu0 %v4007
    %v4152 = vpop.f32.mrf.mxu0
    %v4153 = vadd.f32 0.0, %v4152
    %4154 = vmatmul.f32.gmra.mxu0 %v4010
    %v4155 = vpop.f32.mrf.mxu0
    %v4156 = vadd.f32 0.0, %v4155
    %4157 = vmatmul.f32.gmra.mxu0 %v4013
    %v4158 = vpop.f32.mrf.mxu0
    %v4159 = vadd.f32 0.0, %v4158
    %4160 = vmatmul.f32.gmra.mxu0 %v4016
    %v4161 = vpop.f32.mrf.mxu0
    %v4162 = vadd.f32 0.0, %v4161
    %4163 = vdwg.mxu0
    %4164 = vmatpush.msra.mxu0 %v4117
    %4165 = vmatpush.msra.mxu0 %v4116
    %4166 = vmatpush.msra.mxu0 %v4115
    %4167 = vmatpush.msra.mxu0 %v4114
    %4168 = vmatpush.msra.mxu0 %v4113
    %4169 = vmatpush.msra.mxu0 %v4112
    %4170 = vmatpush.msra.mxu0 %v4111
    %4171 = vmatpush.msra.mxu0 %v4110
    %4172 = vmatpush.msra.mxu0 %v4109
    %4173 = vmatpush.msra.mxu0 %v4108
    %4174 = vmatpush.msra.mxu0 %v4107
    %4175 = vmatpush.msra.mxu0 %v4106
    %4176 = vmatpush.msra.mxu0 %v4105
    %4177 = vmatpush.msra.mxu0 %v4104
    %4178 = vmatpush.msra.mxu0 %v4103
    %4179 = vmatpush.msra.mxu0 %v4102
    %4180 = vmatmul.f32.gmra.mxu0 %v3995
    %v4181 = vpop.f32.mrf.mxu0
    %v4182 = vadd.f32 %v4153, %v4181
    %4183 = vmatmul.f32.gmra.mxu0 %v3998
    %v4184 = vpop.f32.mrf.mxu0
    %v4185 = vadd.f32 %v4156, %v4184
    %4186 = vmatmul.f32.gmra.mxu0 %v4001
    %v4187 = vpop.f32.mrf.mxu0
    %v4188 = vadd.f32 %v4159, %v4187
    %4189 = vmatmul.f32.gmra.mxu0 %v4004
    %v4190 = vpop.f32.mrf.mxu0
    %v4191 = vadd.f32 %v4162, %v4190
    %4192 = vdwg.mxu0
    %s4193 = scalar_lea.vmem [#allocation8], 256
    %v4194 = vld [vmem:[%s4193] sm:$0xff]
    %v4195 = vld [vmem:[%s4193 + $0x8] sm:$0xff]
    %v4196 = vld [vmem:[%s4193 + $0x10] sm:$0xff]
    %v4197 = vld [vmem:[%s4193 + $0x18] sm:$0xff]
    %v4198 = vld [vmem:[%s4193 + $0x20] sm:$0xff]
    %v4199 = vld [vmem:[%s4193 + $0x28] sm:$0xff]
    %v4200 = vld [vmem:[%s4193 + $0x30] sm:$0xff]
    %v4201 = vld [vmem:[%s4193 + $0x38] sm:$0xff]
    %v4202 = vld [vmem:[%s4193 + $0x40] sm:$0xff]
    %v4203 = vld [vmem:[%s4193 + $0x48] sm:$0xff]
    %v4204 = vld [vmem:[%s4193 + $0x50] sm:$0xff]
    %v4205 = vld [vmem:[%s4193 + $0x58] sm:$0xff]
    %v4206 = vld [vmem:[%s4193 + $0x60] sm:$0xff]
    %v4207 = vld [vmem:[%s4193 + $0x68] sm:$0xff]
    %v4208 = vld [vmem:[%s4193 + $0x70] sm:$0xff]
    %v4209 = vld [vmem:[%s4193 + $0x78] sm:$0xff]
    %4210 = vmatpush.msra.mxu0 %v4209
    %4211 = vmatpush.msra.mxu0 %v4208
    %4212 = vmatpush.msra.mxu0 %v4207
    %4213 = vmatpush.msra.mxu0 %v4206
    %4214 = vmatpush.msra.mxu0 %v4205
    %4215 = vmatpush.msra.mxu0 %v4204
    %4216 = vmatpush.msra.mxu0 %v4203
    %4217 = vmatpush.msra.mxu0 %v4202
    %4218 = vmatpush.msra.mxu0 %v4201
    %4219 = vmatpush.msra.mxu0 %v4200
    %4220 = vmatpush.msra.mxu0 %v4199
    %4221 = vmatpush.msra.mxu0 %v4198
    %4222 = vmatpush.msra.mxu0 %v4197
    %4223 = vmatpush.msra.mxu0 %v4196
    %4224 = vmatpush.msra.mxu0 %v4195
    %4225 = vmatpush.msra.mxu0 %v4194
    %4226 = vmatmul.f32.gmra.mxu0 %v4019
    %v4227 = vpop.f32.mrf.mxu0
    %v4228 = vadd.f32 0.0, %v4227
    %4229 = vmatmul.f32.gmra.mxu0 %v4022
    %v4230 = vpop.f32.mrf.mxu0
    %v4231 = vadd.f32 0.0, %v4230
    %4232 = vmatmul.f32.gmra.mxu0 %v4025
    %v4233 = vpop.f32.mrf.mxu0
    %v4234 = vadd.f32 0.0, %v4233
    %4235 = vmatmul.f32.gmra.mxu0 %v4028
    %v4236 = vpop.f32.mrf.mxu0
    %v4237 = vadd.f32 0.0, %v4236
    %4238 = vdwg.mxu0
    %v4239 = vadd.f32 %v4182, %v4228
    %v4240 = vadd.f32 %v4185, %v4231
    %v4241 = vadd.f32 %v4188, %v4234
    %v4242 = vadd.f32 %v4191, %v4237
    %s4243 = scalar_lea.vmem [#allocation8], 384
    %v4244 = vld [vmem:[%s4243] sm:$0xff]
    %v4245 = vld [vmem:[%s4243 + $0x8] sm:$0xff]
    %v4246 = vld [vmem:[%s4243 + $0x10] sm:$0xff]
    %v4247 = vld [vmem:[%s4243 + $0x18] sm:$0xff]
    %v4248 = vld [vmem:[%s4243 + $0x20] sm:$0xff]
    %v4249 = vld [vmem:[%s4243 + $0x28] sm:$0xff]
    %v4250 = vld [vmem:[%s4243 + $0x30] sm:$0xff]
    %v4251 = vld [vmem:[%s4243 + $0x38] sm:$0xff]
    %v4252 = vld [vmem:[%s4243 + $0x40] sm:$0xff]
    %v4253 = vld [vmem:[%s4243 + $0x48] sm:$0xff]
    %v4254 = vld [vmem:[%s4243 + $0x50] sm:$0xff]
    %v4255 = vld [vmem:[%s4243 + $0x58] sm:$0xff]
    %v4256 = vld [vmem:[%s4243 + $0x60] sm:$0xff]
    %v4257 = vld [vmem:[%s4243 + $0x68] sm:$0xff]
    %v4258 = vld [vmem:[%s4243 + $0x70] sm:$0xff]
    %v4259 = vld [vmem:[%s4243 + $0x78] sm:$0xff]
    %4260 = vmatpush.msra.mxu0 %v4259
    %4261 = vmatpush.msra.mxu0 %v4258
    %4262 = vmatpush.msra.mxu0 %v4257
    %4263 = vmatpush.msra.mxu0 %v4256
    %4264 = vmatpush.msra.mxu0 %v4255
    %4265 = vmatpush.msra.mxu0 %v4254
    %4266 = vmatpush.msra.mxu0 %v4253
    %4267 = vmatpush.msra.mxu0 %v4252
    %4268 = vmatpush.msra.mxu0 %v4251
    %4269 = vmatpush.msra.mxu0 %v4250
    %4270 = vmatpush.msra.mxu0 %v4249
    %4271 = vmatpush.msra.mxu0 %v4248
    %4272 = vmatpush.msra.mxu0 %v4247
    %4273 = vmatpush.msra.mxu0 %v4246
    %4274 = vmatpush.msra.mxu0 %v4245
    %4275 = vmatpush.msra.mxu0 %v4244
    %4276 = vmatmul.f32.gmra.mxu0 %v4031
    %v4277 = vpop.f32.mrf.mxu0
    %v4278 = vadd.f32 0.0, %v4277
    %4279 = vmatmul.f32.gmra.mxu0 %v4034
    %v4280 = vpop.f32.mrf.mxu0
    %v4281 = vadd.f32 0.0, %v4280
    %4282 = vmatmul.f32.gmra.mxu0 %v4037
    %v4283 = vpop.f32.mrf.mxu0
    %v4284 = vadd.f32 0.0, %v4283
    %4285 = vmatmul.f32.gmra.mxu0 %v4040
    %v4286 = vpop.f32.mrf.mxu0
    %v4287 = vadd.f32 0.0, %v4286
    %4288 = vdwg.mxu0
    %v4289 = vadd.f32 %v4239, %v4278
    %v4290 = vadd.f32 %v4240, %v4281
    %v4291 = vadd.f32 %v4241, %v4284
    %v4292 = vadd.f32 %v4242, %v4287
    %s4293 = scalar_lea.vmem [#allocation8], 512
    %v4294 = vld [vmem:[%s4293] sm:$0xff]
    %v4295 = vld [vmem:[%s4293 + $0x8] sm:$0xff]
    %v4296 = vld [vmem:[%s4293 + $0x10] sm:$0xff]
    %v4297 = vld [vmem:[%s4293 + $0x18] sm:$0xff]
    %v4298 = vld [vmem:[%s4293 + $0x20] sm:$0xff]
    %v4299 = vld [vmem:[%s4293 + $0x28] sm:$0xff]
    %v4300 = vld [vmem:[%s4293 + $0x30] sm:$0xff]
    %v4301 = vld [vmem:[%s4293 + $0x38] sm:$0xff]
    %v4302 = vld [vmem:[%s4293 + $0x40] sm:$0xff]
    %v4303 = vld [vmem:[%s4293 + $0x48] sm:$0xff]
    %v4304 = vld [vmem:[%s4293 + $0x50] sm:$0xff]
    %v4305 = vld [vmem:[%s4293 + $0x58] sm:$0xff]
    %v4306 = vld [vmem:[%s4293 + $0x60] sm:$0xff]
    %v4307 = vld [vmem:[%s4293 + $0x68] sm:$0xff]
    %v4308 = vld [vmem:[%s4293 + $0x70] sm:$0xff]
    %v4309 = vld [vmem:[%s4293 + $0x78] sm:$0xff]
    %4310 = vmatpush.msra.mxu0 %v4309
    %4311 = vmatpush.msra.mxu0 %v4308
    %4312 = vmatpush.msra.mxu0 %v4307
    %4313 = vmatpush.msra.mxu0 %v4306
    %4314 = vmatpush.msra.mxu0 %v4305
    %4315 = vmatpush.msra.mxu0 %v4304
    %4316 = vmatpush.msra.mxu0 %v4303
    %4317 = vmatpush.msra.mxu0 %v4302
    %4318 = vmatpush.msra.mxu0 %v4301
    %4319 = vmatpush.msra.mxu0 %v4300
    %4320 = vmatpush.msra.mxu0 %v4299
    %4321 = vmatpush.msra.mxu0 %v4298
    %4322 = vmatpush.msra.mxu0 %v4297
    %4323 = vmatpush.msra.mxu0 %v4296
    %4324 = vmatpush.msra.mxu0 %v4295
    %4325 = vmatpush.msra.mxu0 %v4294
    %4326 = vmatmul.f32.gmra.mxu0 %v4043
    %v4327 = vpop.f32.mrf.mxu0
    %v4328 = vadd.f32 0.0, %v4327
    %4329 = vmatmul.f32.gmra.mxu0 %v4046
    %v4330 = vpop.f32.mrf.mxu0
    %v4331 = vadd.f32 0.0, %v4330
    %4332 = vmatmul.f32.gmra.mxu0 %v4049
    %v4333 = vpop.f32.mrf.mxu0
    %v4334 = vadd.f32 0.0, %v4333
    %4335 = vmatmul.f32.gmra.mxu0 %v4052
    %v4336 = vpop.f32.mrf.mxu0
    %v4337 = vadd.f32 0.0, %v4336
    %4338 = vdwg.mxu0
    %v4339 = vadd.f32 %v4289, %v4328
    %v4340 = vadd.f32 %v4290, %v4331
    %v4341 = vadd.f32 %v4291, %v4334
    %v4342 = vadd.f32 %v4292, %v4337
    %s4343 = scalar_lea.vmem [#allocation8], 640
    %v4344 = vld [vmem:[%s4343] sm:$0xff]
    %v4345 = vld [vmem:[%s4343 + $0x8] sm:$0xff]
    %v4346 = vld [vmem:[%s4343 + $0x10] sm:$0xff]
    %v4347 = vld [vmem:[%s4343 + $0x18] sm:$0xff]
    %v4348 = vld [vmem:[%s4343 + $0x20] sm:$0xff]
    %v4349 = vld [vmem:[%s4343 + $0x28] sm:$0xff]
    %v4350 = vld [vmem:[%s4343 + $0x30] sm:$0xff]
    %v4351 = vld [vmem:[%s4343 + $0x38] sm:$0xff]
    %v4352 = vld [vmem:[%s4343 + $0x40] sm:$0xff]
    %v4353 = vld [vmem:[%s4343 + $0x48] sm:$0xff]
    %v4354 = vld [vmem:[%s4343 + $0x50] sm:$0xff]
    %v4355 = vld [vmem:[%s4343 + $0x58] sm:$0xff]
    %v4356 = vld [vmem:[%s4343 + $0x60] sm:$0xff]
    %v4357 = vld [vmem:[%s4343 + $0x68] sm:$0xff]
    %v4358 = vld [vmem:[%s4343 + $0x70] sm:$0xff]
    %v4359 = vld [vmem:[%s4343 + $0x78] sm:$0xff]
    %4360 = vmatpush.msra.mxu0 %v4359
    %4361 = vmatpush.msra.mxu0 %v4358
    %4362 = vmatpush.msra.mxu0 %v4357
    %4363 = vmatpush.msra.mxu0 %v4356
    %4364 = vmatpush.msra.mxu0 %v4355
    %4365 = vmatpush.msra.mxu0 %v4354
    %4366 = vmatpush.msra.mxu0 %v4353
    %4367 = vmatpush.msra.mxu0 %v4352
    %4368 = vmatpush.msra.mxu0 %v4351
    %4369 = vmatpush.msra.mxu0 %v4350
    %4370 = vmatpush.msra.mxu0 %v4349
    %4371 = vmatpush.msra.mxu0 %v4348
    %4372 = vmatpush.msra.mxu0 %v4347
    %4373 = vmatpush.msra.mxu0 %v4346
    %4374 = vmatpush.msra.mxu0 %v4345
    %4375 = vmatpush.msra.mxu0 %v4344
    %4376 = vmatmul.f32.gmra.mxu0 %v4055
    %v4377 = vpop.f32.mrf.mxu0
    %v4378 = vadd.f32 0.0, %v4377
    %4379 = vmatmul.f32.gmra.mxu0 %v4058
    %v4380 = vpop.f32.mrf.mxu0
    %v4381 = vadd.f32 0.0, %v4380
    %4382 = vmatmul.f32.gmra.mxu0 %v4061
    %v4383 = vpop.f32.mrf.mxu0
    %v4384 = vadd.f32 0.0, %v4383
    %4385 = vmatmul.f32.gmra.mxu0 %v4064
    %v4386 = vpop.f32.mrf.mxu0
    %v4387 = vadd.f32 0.0, %v4386
    %4388 = vdwg.mxu0
    %v4389 = vadd.f32 %v4339, %v4378
    %v4390 = vadd.f32 %v4340, %v4381
    %v4391 = vadd.f32 %v4341, %v4384
    %v4392 = vadd.f32 %v4342, %v4387
    %s4393 = scalar_lea.vmem [#allocation8], 768
    %v4394 = vld [vmem:[%s4393] sm:$0xff]
    %v4395 = vld [vmem:[%s4393 + $0x8] sm:$0xff]
    %v4396 = vld [vmem:[%s4393 + $0x10] sm:$0xff]
    %v4397 = vld [vmem:[%s4393 + $0x18] sm:$0xff]
    %v4398 = vld [vmem:[%s4393 + $0x20] sm:$0xff]
    %v4399 = vld [vmem:[%s4393 + $0x28] sm:$0xff]
    %v4400 = vld [vmem:[%s4393 + $0x30] sm:$0xff]
    %v4401 = vld [vmem:[%s4393 + $0x38] sm:$0xff]
    %v4402 = vld [vmem:[%s4393 + $0x40] sm:$0xff]
    %v4403 = vld [vmem:[%s4393 + $0x48] sm:$0xff]
    %v4404 = vld [vmem:[%s4393 + $0x50] sm:$0xff]
    %v4405 = vld [vmem:[%s4393 + $0x58] sm:$0xff]
    %v4406 = vld [vmem:[%s4393 + $0x60] sm:$0xff]
    %v4407 = vld [vmem:[%s4393 + $0x68] sm:$0xff]
    %v4408 = vld [vmem:[%s4393 + $0x70] sm:$0xff]
    %v4409 = vld [vmem:[%s4393 + $0x78] sm:$0xff]
    %4410 = vmatpush.msra.mxu0 %v4409
    %4411 = vmatpush.msra.mxu0 %v4408
    %4412 = vmatpush.msra.mxu0 %v4407
    %4413 = vmatpush.msra.mxu0 %v4406
    %4414 = vmatpush.msra.mxu0 %v4405
    %4415 = vmatpush.msra.mxu0 %v4404
    %4416 = vmatpush.msra.mxu0 %v4403
    %4417 = vmatpush.msra.mxu0 %v4402
    %4418 = vmatpush.msra.mxu0 %v4401
    %4419 = vmatpush.msra.mxu0 %v4400
    %4420 = vmatpush.msra.mxu0 %v4399
    %4421 = vmatpush.msra.mxu0 %v4398
    %4422 = vmatpush.msra.mxu0 %v4397
    %4423 = vmatpush.msra.mxu0 %v4396
    %4424 = vmatpush.msra.mxu0 %v4395
    %4425 = vmatpush.msra.mxu0 %v4394
    %4426 = vmatmul.f32.gmra.mxu0 %v4067
    %v4427 = vpop.f32.mrf.mxu0
    %v4428 = vadd.f32 0.0, %v4427
    %4429 = vmatmul.f32.gmra.mxu0 %v4070
    %v4430 = vpop.f32.mrf.mxu0
    %v4431 = vadd.f32 0.0, %v4430
    %4432 = vmatmul.f32.gmra.mxu0 %v4073
    %v4433 = vpop.f32.mrf.mxu0
    %v4434 = vadd.f32 0.0, %v4433
    %4435 = vmatmul.f32.gmra.mxu0 %v4076
    %v4436 = vpop.f32.mrf.mxu0
    %v4437 = vadd.f32 0.0, %v4436
    %4438 = vdwg.mxu0
    %v4439 = vadd.f32 %v4389, %v4428
    %v4440 = vadd.f32 %v4390, %v4431
    %v4441 = vadd.f32 %v4391, %v4434
    %v4442 = vadd.f32 %v4392, %v4437
    %s4443 = scalar_lea.vmem [#allocation8], 896
    %v4444 = vld [vmem:[%s4443] sm:$0xff]
    %v4445 = vld [vmem:[%s4443 + $0x8] sm:$0xff]
    %v4446 = vld [vmem:[%s4443 + $0x10] sm:$0xff]
    %v4447 = vld [vmem:[%s4443 + $0x18] sm:$0xff]
    %v4448 = vld [vmem:[%s4443 + $0x20] sm:$0xff]
    %v4449 = vld [vmem:[%s4443 + $0x28] sm:$0xff]
    %v4450 = vld [vmem:[%s4443 + $0x30] sm:$0xff]
    %v4451 = vld [vmem:[%s4443 + $0x38] sm:$0xff]
    %v4452 = vld [vmem:[%s4443 + $0x40] sm:$0xff]
    %v4453 = vld [vmem:[%s4443 + $0x48] sm:$0xff]
    %v4454 = vld [vmem:[%s4443 + $0x50] sm:$0xff]
    %v4455 = vld [vmem:[%s4443 + $0x58] sm:$0xff]
    %v4456 = vld [vmem:[%s4443 + $0x60] sm:$0xff]
    %v4457 = vld [vmem:[%s4443 + $0x68] sm:$0xff]
    %v4458 = vld [vmem:[%s4443 + $0x70] sm:$0xff]
    %v4459 = vld [vmem:[%s4443 + $0x78] sm:$0xff]
    %4460 = vmatpush.msra.mxu0 %v4459
    %4461 = vmatpush.msra.mxu0 %v4458
    %4462 = vmatpush.msra.mxu0 %v4457
    %4463 = vmatpush.msra.mxu0 %v4456
    %4464 = vmatpush.msra.mxu0 %v4455
    %4465 = vmatpush.msra.mxu0 %v4454
    %4466 = vmatpush.msra.mxu0 %v4453
    %4467 = vmatpush.msra.mxu0 %v4452
    %4468 = vmatpush.msra.mxu0 %v4451
    %4469 = vmatpush.msra.mxu0 %v4450
    %4470 = vmatpush.msra.mxu0 %v4449
    %4471 = vmatpush.msra.mxu0 %v4448
    %4472 = vmatpush.msra.mxu0 %v4447
    %4473 = vmatpush.msra.mxu0 %v4446
    %4474 = vmatpush.msra.mxu0 %v4445
    %4475 = vmatpush.msra.mxu0 %v4444
    %4476 = vmatmul.f32.gmra.mxu0 %v4079
    %v4477 = vpop.f32.mrf.mxu0
    %v4478 = vadd.f32 0.0, %v4477
    %4479 = vmatmul.f32.gmra.mxu0 %v4082
    %v4480 = vpop.f32.mrf.mxu0
    %v4481 = vadd.f32 0.0, %v4480
    %4482 = vmatmul.f32.gmra.mxu0 %v4085
    %v4483 = vpop.f32.mrf.mxu0
    %v4484 = vadd.f32 0.0, %v4483
    %4485 = vmatmul.f32.gmra.mxu0 %v4088
    %v4486 = vpop.f32.mrf.mxu0
    %v4487 = vadd.f32 0.0, %v4486
    %4488 = vdwg.mxu0
    %v4489 = vadd.f32 %v4439, %v4478
    %v4490 = vadd.f32 %v4440, %v4481
    %v4491 = vadd.f32 %v4441, %v4484
    %v4492 = vadd.f32 %v4442, %v4487
    %s4493 = scalar_lea.vmem [#allocation8], 1024
    %v4494 = vld [vmem:[%s4493] sm:$0xff]
    %v4495 = vld [vmem:[%s4493 + $0x8] sm:$0xff]
    %v4496 = vld [vmem:[%s4493 + $0x10] sm:$0xff]
    %v4497 = vld [vmem:[%s4493 + $0x18] sm:$0xff]
    %v4498 = vld [vmem:[%s4493 + $0x20] sm:$0xff]
    %v4499 = vld [vmem:[%s4493 + $0x28] sm:$0xff]
    %v4500 = vld [vmem:[%s4493 + $0x30] sm:$0xff]
    %v4501 = vld [vmem:[%s4493 + $0x38] sm:$0xff]
    %v4502 = vld [vmem:[%s4493 + $0x40] sm:$0xff]
    %v4503 = vld [vmem:[%s4493 + $0x48] sm:$0xff]
    %v4504 = vld [vmem:[%s4493 + $0x50] sm:$0xff]
    %v4505 = vld [vmem:[%s4493 + $0x58] sm:$0xff]
    %v4506 = vld [vmem:[%s4493 + $0x60] sm:$0xff]
    %v4507 = vld [vmem:[%s4493 + $0x68] sm:$0xff]
    %v4508 = vld [vmem:[%s4493 + $0x70] sm:$0xff]
    %v4509 = vld [vmem:[%s4493 + $0x78] sm:$0xff]
    %4510 = vmatpush.msra.mxu0 %v4509
    %4511 = vmatpush.msra.mxu0 %v4508
    %4512 = vmatpush.msra.mxu0 %v4507
    %4513 = vmatpush.msra.mxu0 %v4506
    %4514 = vmatpush.msra.mxu0 %v4505
    %4515 = vmatpush.msra.mxu0 %v4504
    %4516 = vmatpush.msra.mxu0 %v4503
    %4517 = vmatpush.msra.mxu0 %v4502
    %4518 = vmatpush.msra.mxu0 %v4501
    %4519 = vmatpush.msra.mxu0 %v4500
    %4520 = vmatpush.msra.mxu0 %v4499
    %4521 = vmatpush.msra.mxu0 %v4498
    %4522 = vmatpush.msra.mxu0 %v4497
    %4523 = vmatpush.msra.mxu0 %v4496
    %4524 = vmatpush.msra.mxu0 %v4495
    %4525 = vmatpush.msra.mxu0 %v4494
    %4526 = vmatmul.f32.gmra.mxu0 %v4091
    %v4527 = vpop.f32.mrf.mxu0
    %v4528 = vadd.f32 0.0, %v4527
    %4529 = vmatmul.f32.gmra.mxu0 %v4094
    %v4530 = vpop.f32.mrf.mxu0
    %v4531 = vadd.f32 0.0, %v4530
    %4532 = vmatmul.f32.gmra.mxu0 %v4097
    %v4533 = vpop.f32.mrf.mxu0
    %v4534 = vadd.f32 0.0, %v4533
    %4535 = vmatmul.f32.gmra.mxu0 %v4100
    %v4536 = vpop.f32.mrf.mxu0
    %v4537 = vadd.f32 0.0, %v4536
    %4538 = vdwg.mxu0
    %v4539 = vadd.f32 %v4489, %v4528
    %v4540 = vadd.f32 %v4490, %v4531
    %v4541 = vadd.f32 %v4491, %v4534
    %v4542 = vadd.f32 %v4492, %v4537
    %v4543 = vadd.f32 %v4539, %v4540
    %v4544 = vadd.f32 %v4543, %v4541
    %v4545 = vadd.f32 %v4544, %v4542
    %v4546 = vrot.slane %v4545, 4
    %v4547 = vadd.f32 %v4545, %v4546
    %v4548 = vrot.slane %v4547, 2
    %v4549 = vadd.f32 %v4547, %v4548
    %v4550 = vrot.slane %v4549, 1
    %v4551 = vadd.f32 %v4549, %v4550
    %v4552 = vmul.f32 %v4539, %v4539
    %v4553 = vmul.f32 %v4540, %v4540
    %v4554 = vmul.f32 %v4541, %v4541
    %v4555 = vmul.f32 %v4542, %v4542
    %v4556 = vadd.f32 %v4552, %v4553
    %v4557 = vadd.f32 %v4556, %v4554
    %v4558 = vadd.f32 %v4557, %v4555
    %v4559 = vrot.slane %v4558, 4
    %v4560 = vadd.f32 %v4558, %v4559
    %v4561 = vrot.slane %v4560, 2
    %v4562 = vadd.f32 %v4560, %v4561
    %v4563 = vrot.slane %v4562, 1
    %v4564 = vadd.f32 %v4562, %v4563
    %v4565 = vmul.f32 %v4551, 0.03125
    %v4566 = vmul.f32 %v4564, 0.03125
    %v4567 = vmul.f32 %v4565, %v4565
    %v4568 = vsub.f32 %v4566, %v4567
    %v4569 = vld [vmem:[#allocation14] sm:$0x1]
    %v4570 = vadd.f32 %v4568, 1e-05
    %v4571 = vrsqrt.pop %v4570
    %v4572 = vmul.f32 %v4571, %v4570
    %v4573 = vmul.f32 %v4572, %v4571
    %v4574 = vmul.f32 0.5, %v4573
    %v4575 = vsub.f32 1.5, %v4574
    %v4576 = vmul.f32 %v4571, %v4575
    %vm4577 = vweird.f32 %v4570
    %vm4578 = vweird.f32 %v4571
    %vm4579 = vmor %vm4577, %vm4578
    %v4580 = vsel %vm4579, %v4571, %v4576
    %v4581 = vmul.f32 %v4569, %v4580
    %v4582 = vld [vmem:[#allocation16] sm:$0x1]
    %v4583 = vmul.f32 %v4581, %v4565
    %v4584 = vsub.f32 %v4582, %v4583
    %v4586 = vperm.slane %v4581, 0
    %v4588 = vmul.f32 %v4539, %v4586
    %v4589 = vmul.f32 %v4540, %v4586
    %v4590 = vmul.f32 %v4541, %v4586
    %v4591 = vmul.f32 %v4542, %v4586
    %v4593 = vperm.slane %v4584, 0
    %v4595 = vadd.f32 %v4588, %v4593
    %v4596 = vadd.f32 %v4589, %v4593
    %v4597 = vadd.f32 %v4590, %v4593
    %v4598 = vadd.f32 %v4591, %v4593
    %v4599 = vmax.f32 %v4595, 0.0
    %v4600 = vmax.f32 %v4596, 0.0
    %v4601 = vmax.f32 %v4597, 0.0
    %v4602 = vmax.f32 %v4598, 0.0
    %v4603 = vld [vmem:[%s3] sm:$0xff]
    %v4604 = vld [vmem:[%s3 + $0x8] sm:$0xff]
    %v4605 = vld [vmem:[%s3 + $0x10] sm:$0xff]
    %v4606 = vld [vmem:[%s3 + $0x18] sm:$0xff]
    %v4607 = vld [vmem:[%s3 + $0x20] sm:$0xff]
    %v4608 = vld [vmem:[%s3 + $0x28] sm:$0xff]
    %v4609 = vld [vmem:[%s3 + $0x30] sm:$0xff]
    %v4610 = vld [vmem:[%s3 + $0x38] sm:$0xff]
    %v4611 = vld [vmem:[%s3 + $0x40] sm:$0xff]
    %vm4612 = vcmask 261120
    %v4614 = vsel %vm4612, %v4603, 0
    %v4617 = vsel %vm4612, %v4604, 0
    %v4620 = vsel %vm4612, %v4605, 0
    %v4623 = vsel %vm4612, %v4606, 0
    %v4626 = vsel %vm4612, %v4607, 0
    %v4629 = vsel %vm4612, %v4608, 0
    %v4632 = vsel %vm4612, %v4609, 0
    %v4635 = vsel %vm4612, %v4610, 0
    %v4638 = vsel %vm4612, %v4611, 0
    %4640 = vmatpush.msra.mxu0 0.0
    %4641 = vmatpush.msra.mxu0 0.0
    %4642 = vmatpush.msra.mxu0 0.0
    %4643 = vmatpush.msra.mxu0 0.0
    %4644 = vmatpush.msra.mxu0 0.0
    %4645 = vmatpush.msra.mxu0 0.0
    %4646 = vmatpush.msra.mxu0 0.0
    %4647 = vmatpush.msra.mxu0 0.0
    %4648 = vmatpush.msra.mxu0 0.0
    %4649 = vmatpush.msra.mxu0 0.0
    %4650 = vmatpush.msra.mxu0 0.0
    %4651 = vmatpush.msra.mxu0 0.0
    %4652 = vmatpush.msra.mxu0 %v4602
    %4653 = vmatpush.msra.mxu0 %v4601
    %4654 = vmatpush.msra.mxu0 %v4600
    %4655 = vmatpush.msra.mxu0 %v4599
    %4656 = vmatmul.f32.gmra.mxu0 %v4614
    %v4657 = vpop.f32.mrf.mxu0
    %v4658 = vadd.f32 0.0, %v4657
    %4659 = vmatmul.f32.gmra.mxu0 %v4617
    %v4660 = vpop.f32.mrf.mxu0
    %v4661 = vadd.f32 0.0, %v4660
    %4662 = vmatmul.f32.gmra.mxu0 %v4620
    %v4663 = vpop.f32.mrf.mxu0
    %v4664 = vadd.f32 0.0, %v4663
    %4665 = vmatmul.f32.gmra.mxu0 %v4623
    %v4666 = vpop.f32.mrf.mxu0
    %v4667 = vadd.f32 0.0, %v4666
    %4668 = vmatmul.f32.gmra.mxu0 %v4626
    %v4669 = vpop.f32.mrf.mxu0
    %v4670 = vadd.f32 0.0, %v4669
    %4671 = vmatmul.f32.gmra.mxu0 %v4629
    %v4672 = vpop.f32.mrf.mxu0
    %v4673 = vadd.f32 0.0, %v4672
    %4674 = vmatmul.f32.gmra.mxu0 %v4632
    %v4675 = vpop.f32.mrf.mxu0
    %v4676 = vadd.f32 0.0, %v4675
    %4677 = vmatmul.f32.gmra.mxu0 %v4635
    %v4678 = vpop.f32.mrf.mxu0
    %v4679 = vadd.f32 0.0, %v4678
    %4680 = vmatmul.f32.gmra.mxu0 %v4638
    %v4681 = vpop.f32.mrf.mxu0
    %v4682 = vadd.f32 0.0, %v4681
    %4683 = vdwg.mxu0
    %v4684 = vld [vmem:[#allocation10] sm:$0xff]
    %v4685 = vld [vmem:[#allocation10 + $0x8] sm:$0xff]
    %v4686 = vld [vmem:[#allocation10 + $0x10] sm:$0xff]
    %v4687 = vld [vmem:[#allocation10 + $0x18] sm:$0xff]
    %v4688 = vld [vmem:[#allocation10 + $0x20] sm:$0xff]
    %v4689 = vld [vmem:[#allocation10 + $0x28] sm:$0xff]
    %v4690 = vld [vmem:[#allocation10 + $0x30] sm:$0xff]
    %v4691 = vld [vmem:[#allocation10 + $0x38] sm:$0xff]
    %v4692 = vld [vmem:[#allocation10 + $0x40] sm:$0xff]
    %v4693 = vld [vmem:[#allocation10 + $0x48] sm:$0xff]
    %v4694 = vld [vmem:[#allocation10 + $0x50] sm:$0xff]
    %v4695 = vld [vmem:[#allocation10 + $0x58] sm:$0xff]
    %v4696 = vld [vmem:[#allocation10 + $0x60] sm:$0xff]
    %v4697 = vld [vmem:[#allocation10 + $0x68] sm:$0xff]
    %v4698 = vld [vmem:[#allocation10 + $0x70] sm:$0xff]
    %v4699 = vld [vmem:[#allocation10 + $0x78] sm:$0xff]
    %s4700 = scalar_lea.vmem [#allocation10], 128
    %v4701 = vld [vmem:[%s4700] sm:$0xff]
    %v4702 = vld [vmem:[%s4700 + $0x8] sm:$0xff]
    %v4703 = vld [vmem:[%s4700 + $0x10] sm:$0xff]
    %v4704 = vld [vmem:[%s4700 + $0x18] sm:$0xff]
    %v4705 = vld [vmem:[%s4700 + $0x20] sm:$0xff]
    %v4706 = vld [vmem:[%s4700 + $0x28] sm:$0xff]
    %v4707 = vld [vmem:[%s4700 + $0x30] sm:$0xff]
    %v4708 = vld [vmem:[%s4700 + $0x38] sm:$0xff]
    %v4709 = vld [vmem:[%s4700 + $0x40] sm:$0xff]
    %v4710 = vld [vmem:[%s4700 + $0x48] sm:$0xff]
    %v4711 = vld [vmem:[%s4700 + $0x50] sm:$0xff]
    %v4712 = vld [vmem:[%s4700 + $0x58] sm:$0xff]
    %v4713 = vld [vmem:[%s4700 + $0x60] sm:$0xff]
    %v4714 = vld [vmem:[%s4700 + $0x68] sm:$0xff]
    %v4715 = vld [vmem:[%s4700 + $0x70] sm:$0xff]
    %v4716 = vld [vmem:[%s4700 + $0x78] sm:$0xff]
    %4717 = vmatpush.msra.mxu0 %v4716
    %4718 = vmatpush.msra.mxu0 %v4715
    %4719 = vmatpush.msra.mxu0 %v4714
    %4720 = vmatpush.msra.mxu0 %v4713
    %4721 = vmatpush.msra.mxu0 %v4712
    %4722 = vmatpush.msra.mxu0 %v4711
    %4723 = vmatpush.msra.mxu0 %v4710
    %4724 = vmatpush.msra.mxu0 %v4709
    %4725 = vmatpush.msra.mxu0 %v4708
    %4726 = vmatpush.msra.mxu0 %v4707
    %4727 = vmatpush.msra.mxu0 %v4706
    %4728 = vmatpush.msra.mxu0 %v4705
    %4729 = vmatpush.msra.mxu0 %v4704
    %4730 = vmatpush.msra.mxu0 %v4703
    %4731 = vmatpush.msra.mxu0 %v4702
    %4732 = vmatpush.msra.mxu0 %v4701
    %4733 = vmatmul.f32.gmra.mxu0 %v4661
    %v4734 = vpop.f32.mrf.mxu0
    %v4735 = vadd.f32 0.0, %v4734
    %4736 = vdwg.mxu0
    %4737 = vmatpush.msra.mxu0 %v4699
    %4738 = vmatpush.msra.mxu0 %v4698
    %4739 = vmatpush.msra.mxu0 %v4697
    %4740 = vmatpush.msra.mxu0 %v4696
    %4741 = vmatpush.msra.mxu0 %v4695
    %4742 = vmatpush.msra.mxu0 %v4694
    %4743 = vmatpush.msra.mxu0 %v4693
    %4744 = vmatpush.msra.mxu0 %v4692
    %4745 = vmatpush.msra.mxu0 %v4691
    %4746 = vmatpush.msra.mxu0 %v4690
    %4747 = vmatpush.msra.mxu0 %v4689
    %4748 = vmatpush.msra.mxu0 %v4688
    %4749 = vmatpush.msra.mxu0 %v4687
    %4750 = vmatpush.msra.mxu0 %v4686
    %4751 = vmatpush.msra.mxu0 %v4685
    %4752 = vmatpush.msra.mxu0 %v4684
    %4753 = vmatmul.f32.gmra.mxu0 %v4658
    %v4754 = vpop.f32.mrf.mxu0
    %v4755 = vadd.f32 %v4735, %v4754
    %4756 = vdwg.mxu0
    %s4757 = scalar_lea.vmem [#allocation10], 256
    %v4758 = vld [vmem:[%s4757] sm:$0xff]
    %v4759 = vld [vmem:[%s4757 + $0x8] sm:$0xff]
    %v4760 = vld [vmem:[%s4757 + $0x10] sm:$0xff]
    %v4761 = vld [vmem:[%s4757 + $0x18] sm:$0xff]
    %v4762 = vld [vmem:[%s4757 + $0x20] sm:$0xff]
    %v4763 = vld [vmem:[%s4757 + $0x28] sm:$0xff]
    %v4764 = vld [vmem:[%s4757 + $0x30] sm:$0xff]
    %v4765 = vld [vmem:[%s4757 + $0x38] sm:$0xff]
    %v4766 = vld [vmem:[%s4757 + $0x40] sm:$0xff]
    %v4767 = vld [vmem:[%s4757 + $0x48] sm:$0xff]
    %v4768 = vld [vmem:[%s4757 + $0x50] sm:$0xff]
    %v4769 = vld [vmem:[%s4757 + $0x58] sm:$0xff]
    %v4770 = vld [vmem:[%s4757 + $0x60] sm:$0xff]
    %v4771 = vld [vmem:[%s4757 + $0x68] sm:$0xff]
    %v4772 = vld [vmem:[%s4757 + $0x70] sm:$0xff]
    %v4773 = vld [vmem:[%s4757 + $0x78] sm:$0xff]
    %4774 = vmatpush.msra.mxu0 %v4773
    %4775 = vmatpush.msra.mxu0 %v4772
    %4776 = vmatpush.msra.mxu0 %v4771
    %4777 = vmatpush.msra.mxu0 %v4770
    %4778 = vmatpush.msra.mxu0 %v4769
    %4779 = vmatpush.msra.mxu0 %v4768
    %4780 = vmatpush.msra.mxu0 %v4767
    %4781 = vmatpush.msra.mxu0 %v4766
    %4782 = vmatpush.msra.mxu0 %v4765
    %4783 = vmatpush.msra.mxu0 %v4764
    %4784 = vmatpush.msra.mxu0 %v4763
    %4785 = vmatpush.msra.mxu0 %v4762
    %4786 = vmatpush.msra.mxu0 %v4761
    %4787 = vmatpush.msra.mxu0 %v4760
    %4788 = vmatpush.msra.mxu0 %v4759
    %4789 = vmatpush.msra.mxu0 %v4758
    %4790 = vmatmul.f32.gmra.mxu0 %v4664
    %v4791 = vpop.f32.mrf.mxu0
    %v4792 = vadd.f32 0.0, %v4791
    %4793 = vdwg.mxu0
    %v4794 = vadd.f32 %v4755, %v4792
    %s4795 = scalar_lea.vmem [#allocation10], 384
    %v4796 = vld [vmem:[%s4795] sm:$0xff]
    %v4797 = vld [vmem:[%s4795 + $0x8] sm:$0xff]
    %v4798 = vld [vmem:[%s4795 + $0x10] sm:$0xff]
    %v4799 = vld [vmem:[%s4795 + $0x18] sm:$0xff]
    %v4800 = vld [vmem:[%s4795 + $0x20] sm:$0xff]
    %v4801 = vld [vmem:[%s4795 + $0x28] sm:$0xff]
    %v4802 = vld [vmem:[%s4795 + $0x30] sm:$0xff]
    %v4803 = vld [vmem:[%s4795 + $0x38] sm:$0xff]
    %v4804 = vld [vmem:[%s4795 + $0x40] sm:$0xff]
    %v4805 = vld [vmem:[%s4795 + $0x48] sm:$0xff]
    %v4806 = vld [vmem:[%s4795 + $0x50] sm:$0xff]
    %v4807 = vld [vmem:[%s4795 + $0x58] sm:$0xff]
    %v4808 = vld [vmem:[%s4795 + $0x60] sm:$0xff]
    %v4809 = vld [vmem:[%s4795 + $0x68] sm:$0xff]
    %v4810 = vld [vmem:[%s4795 + $0x70] sm:$0xff]
    %v4811 = vld [vmem:[%s4795 + $0x78] sm:$0xff]
    %4812 = vmatpush.msra.mxu0 %v4811
    %4813 = vmatpush.msra.mxu0 %v4810
    %4814 = vmatpush.msra.mxu0 %v4809
    %4815 = vmatpush.msra.mxu0 %v4808
    %4816 = vmatpush.msra.mxu0 %v4807
    %4817 = vmatpush.msra.mxu0 %v4806
    %4818 = vmatpush.msra.mxu0 %v4805
    %4819 = vmatpush.msra.mxu0 %v4804
    %4820 = vmatpush.msra.mxu0 %v4803
    %4821 = vmatpush.msra.mxu0 %v4802
    %4822 = vmatpush.msra.mxu0 %v4801
    %4823 = vmatpush.msra.mxu0 %v4800
    %4824 = vmatpush.msra.mxu0 %v4799
    %4825 = vmatpush.msra.mxu0 %v4798
    %4826 = vmatpush.msra.mxu0 %v4797
    %4827 = vmatpush.msra.mxu0 %v4796
    %4828 = vmatmul.f32.gmra.mxu0 %v4667
    %v4829 = vpop.f32.mrf.mxu0
    %v4830 = vadd.f32 0.0, %v4829
    %4831 = vdwg.mxu0
    %v4832 = vadd.f32 %v4794, %v4830
    %s4833 = scalar_lea.vmem [#allocation10], 512
    %v4834 = vld [vmem:[%s4833] sm:$0xff]
    %v4835 = vld [vmem:[%s4833 + $0x8] sm:$0xff]
    %v4836 = vld [vmem:[%s4833 + $0x10] sm:$0xff]
    %v4837 = vld [vmem:[%s4833 + $0x18] sm:$0xff]
    %v4838 = vld [vmem:[%s4833 + $0x20] sm:$0xff]
    %v4839 = vld [vmem:[%s4833 + $0x28] sm:$0xff]
    %v4840 = vld [vmem:[%s4833 + $0x30] sm:$0xff]
    %v4841 = vld [vmem:[%s4833 + $0x38] sm:$0xff]
    %v4842 = vld [vmem:[%s4833 + $0x40] sm:$0xff]
    %v4843 = vld [vmem:[%s4833 + $0x48] sm:$0xff]
    %v4844 = vld [vmem:[%s4833 + $0x50] sm:$0xff]
    %v4845 = vld [vmem:[%s4833 + $0x58] sm:$0xff]
    %v4846 = vld [vmem:[%s4833 + $0x60] sm:$0xff]
    %v4847 = vld [vmem:[%s4833 + $0x68] sm:$0xff]
    %v4848 = vld [vmem:[%s4833 + $0x70] sm:$0xff]
    %v4849 = vld [vmem:[%s4833 + $0x78] sm:$0xff]
    %4850 = vmatpush.msra.mxu0 %v4849
    %4851 = vmatpush.msra.mxu0 %v4848
    %4852 = vmatpush.msra.mxu0 %v4847
    %4853 = vmatpush.msra.mxu0 %v4846
    %4854 = vmatpush.msra.mxu0 %v4845
    %4855 = vmatpush.msra.mxu0 %v4844
    %4856 = vmatpush.msra.mxu0 %v4843
    %4857 = vmatpush.msra.mxu0 %v4842
    %4858 = vmatpush.msra.mxu0 %v4841
    %4859 = vmatpush.msra.mxu0 %v4840
    %4860 = vmatpush.msra.mxu0 %v4839
    %4861 = vmatpush.msra.mxu0 %v4838
    %4862 = vmatpush.msra.mxu0 %v4837
    %4863 = vmatpush.msra.mxu0 %v4836
    %4864 = vmatpush.msra.mxu0 %v4835
    %4865 = vmatpush.msra.mxu0 %v4834
    %4866 = vmatmul.f32.gmra.mxu0 %v4670
    %v4867 = vpop.f32.mrf.mxu0
    %v4868 = vadd.f32 0.0, %v4867
    %4869 = vdwg.mxu0
    %v4870 = vadd.f32 %v4832, %v4868
    %s4871 = scalar_lea.vmem [#allocation10], 640
    %v4872 = vld [vmem:[%s4871] sm:$0xff]
    %v4873 = vld [vmem:[%s4871 + $0x8] sm:$0xff]
    %v4874 = vld [vmem:[%s4871 + $0x10] sm:$0xff]
    %v4875 = vld [vmem:[%s4871 + $0x18] sm:$0xff]
    %v4876 = vld [vmem:[%s4871 + $0x20] sm:$0xff]
    %v4877 = vld [vmem:[%s4871 + $0x28] sm:$0xff]
    %v4878 = vld [vmem:[%s4871 + $0x30] sm:$0xff]
    %v4879 = vld [vmem:[%s4871 + $0x38] sm:$0xff]
    %v4880 = vld [vmem:[%s4871 + $0x40] sm:$0xff]
    %v4881 = vld [vmem:[%s4871 + $0x48] sm:$0xff]
    %v4882 = vld [vmem:[%s4871 + $0x50] sm:$0xff]
    %v4883 = vld [vmem:[%s4871 + $0x58] sm:$0xff]
    %v4884 = vld [vmem:[%s4871 + $0x60] sm:$0xff]
    %v4885 = vld [vmem:[%s4871 + $0x68] sm:$0xff]
    %v4886 = vld [vmem:[%s4871 + $0x70] sm:$0xff]
    %v4887 = vld [vmem:[%s4871 + $0x78] sm:$0xff]
    %4888 = vmatpush.msra.mxu0 %v4887
    %4889 = vmatpush.msra.mxu0 %v4886
    %4890 = vmatpush.msra.mxu0 %v4885
    %4891 = vmatpush.msra.mxu0 %v4884
    %4892 = vmatpush.msra.mxu0 %v4883
    %4893 = vmatpush.msra.mxu0 %v4882
    %4894 = vmatpush.msra.mxu0 %v4881
    %4895 = vmatpush.msra.mxu0 %v4880
    %4896 = vmatpush.msra.mxu0 %v4879
    %4897 = vmatpush.msra.mxu0 %v4878
    %4898 = vmatpush.msra.mxu0 %v4877
    %4899 = vmatpush.msra.mxu0 %v4876
    %4900 = vmatpush.msra.mxu0 %v4875
    %4901 = vmatpush.msra.mxu0 %v4874
    %4902 = vmatpush.msra.mxu0 %v4873
    %4903 = vmatpush.msra.mxu0 %v4872
    %4904 = vmatmul.f32.gmra.mxu0 %v4673
    %v4905 = vpop.f32.mrf.mxu0
    %v4906 = vadd.f32 0.0, %v4905
    %4907 = vdwg.mxu0
    %v4908 = vadd.f32 %v4870, %v4906
    %s4909 = scalar_lea.vmem [#allocation10], 768
    %v4910 = vld [vmem:[%s4909] sm:$0xff]
    %v4911 = vld [vmem:[%s4909 + $0x8] sm:$0xff]
    %v4912 = vld [vmem:[%s4909 + $0x10] sm:$0xff]
    %v4913 = vld [vmem:[%s4909 + $0x18] sm:$0xff]
    %v4914 = vld [vmem:[%s4909 + $0x20] sm:$0xff]
    %v4915 = vld [vmem:[%s4909 + $0x28] sm:$0xff]
    %v4916 = vld [vmem:[%s4909 + $0x30] sm:$0xff]
    %v4917 = vld [vmem:[%s4909 + $0x38] sm:$0xff]
    %v4918 = vld [vmem:[%s4909 + $0x40] sm:$0xff]
    %v4919 = vld [vmem:[%s4909 + $0x48] sm:$0xff]
    %v4920 = vld [vmem:[%s4909 + $0x50] sm:$0xff]
    %v4921 = vld [vmem:[%s4909 + $0x58] sm:$0xff]
    %v4922 = vld [vmem:[%s4909 + $0x60] sm:$0xff]
    %v4923 = vld [vmem:[%s4909 + $0x68] sm:$0xff]
    %v4924 = vld [vmem:[%s4909 + $0x70] sm:$0xff]
    %v4925 = vld [vmem:[%s4909 + $0x78] sm:$0xff]
    %4926 = vmatpush.msra.mxu0 %v4925
    %4927 = vmatpush.msra.mxu0 %v4924
    %4928 = vmatpush.msra.mxu0 %v4923
    %4929 = vmatpush.msra.mxu0 %v4922
    %4930 = vmatpush.msra.mxu0 %v4921
    %4931 = vmatpush.msra.mxu0 %v4920
    %4932 = vmatpush.msra.mxu0 %v4919
    %4933 = vmatpush.msra.mxu0 %v4918
    %4934 = vmatpush.msra.mxu0 %v4917
    %4935 = vmatpush.msra.mxu0 %v4916
    %4936 = vmatpush.msra.mxu0 %v4915
    %4937 = vmatpush.msra.mxu0 %v4914
    %4938 = vmatpush.msra.mxu0 %v4913
    %4939 = vmatpush.msra.mxu0 %v4912
    %4940 = vmatpush.msra.mxu0 %v4911
    %4941 = vmatpush.msra.mxu0 %v4910
    %4942 = vmatmul.f32.gmra.mxu0 %v4676
    %v4943 = vpop.f32.mrf.mxu0
    %v4944 = vadd.f32 0.0, %v4943
    %4945 = vdwg.mxu0
    %v4946 = vadd.f32 %v4908, %v4944
    %s4947 = scalar_lea.vmem [#allocation10], 896
    %v4948 = vld [vmem:[%s4947] sm:$0xff]
    %v4949 = vld [vmem:[%s4947 + $0x8] sm:$0xff]
    %v4950 = vld [vmem:[%s4947 + $0x10] sm:$0xff]
    %v4951 = vld [vmem:[%s4947 + $0x18] sm:$0xff]
    %v4952 = vld [vmem:[%s4947 + $0x20] sm:$0xff]
    %v4953 = vld [vmem:[%s4947 + $0x28] sm:$0xff]
    %v4954 = vld [vmem:[%s4947 + $0x30] sm:$0xff]
    %v4955 = vld [vmem:[%s4947 + $0x38] sm:$0xff]
    %v4956 = vld [vmem:[%s4947 + $0x40] sm:$0xff]
    %v4957 = vld [vmem:[%s4947 + $0x48] sm:$0xff]
    %v4958 = vld [vmem:[%s4947 + $0x50] sm:$0xff]
    %v4959 = vld [vmem:[%s4947 + $0x58] sm:$0xff]
    %v4960 = vld [vmem:[%s4947 + $0x60] sm:$0xff]
    %v4961 = vld [vmem:[%s4947 + $0x68] sm:$0xff]
    %v4962 = vld [vmem:[%s4947 + $0x70] sm:$0xff]
    %v4963 = vld [vmem:[%s4947 + $0x78] sm:$0xff]
    %4964 = vmatpush.msra.mxu0 %v4963
    %4965 = vmatpush.msra.mxu0 %v4962
    %4966 = vmatpush.msra.mxu0 %v4961
    %4967 = vmatpush.msra.mxu0 %v4960
    %4968 = vmatpush.msra.mxu0 %v4959
    %4969 = vmatpush.msra.mxu0 %v4958
    %4970 = vmatpush.msra.mxu0 %v4957
    %4971 = vmatpush.msra.mxu0 %v4956
    %4972 = vmatpush.msra.mxu0 %v4955
    %4973 = vmatpush.msra.mxu0 %v4954
    %4974 = vmatpush.msra.mxu0 %v4953
    %4975 = vmatpush.msra.mxu0 %v4952
    %4976 = vmatpush.msra.mxu0 %v4951
    %4977 = vmatpush.msra.mxu0 %v4950
    %4978 = vmatpush.msra.mxu0 %v4949
    %4979 = vmatpush.msra.mxu0 %v4948
    %4980 = vmatmul.f32.gmra.mxu0 %v4679
    %v4981 = vpop.f32.mrf.mxu0
    %v4982 = vadd.f32 0.0, %v4981
    %4983 = vdwg.mxu0
    %v4984 = vadd.f32 %v4946, %v4982
    %s4985 = scalar_lea.vmem [#allocation10], 1024
    %v4986 = vld [vmem:[%s4985] sm:$0xff]
    %v4987 = vld [vmem:[%s4985 + $0x8] sm:$0xff]
    %v4988 = vld [vmem:[%s4985 + $0x10] sm:$0xff]
    %v4989 = vld [vmem:[%s4985 + $0x18] sm:$0xff]
    %v4990 = vld [vmem:[%s4985 + $0x20] sm:$0xff]
    %v4991 = vld [vmem:[%s4985 + $0x28] sm:$0xff]
    %v4992 = vld [vmem:[%s4985 + $0x30] sm:$0xff]
    %v4993 = vld [vmem:[%s4985 + $0x38] sm:$0xff]
    %v4994 = vld [vmem:[%s4985 + $0x40] sm:$0xff]
    %v4995 = vld [vmem:[%s4985 + $0x48] sm:$0xff]
    %v4996 = vld [vmem:[%s4985 + $0x50] sm:$0xff]
    %v4997 = vld [vmem:[%s4985 + $0x58] sm:$0xff]
    %v4998 = vld [vmem:[%s4985 + $0x60] sm:$0xff]
    %v4999 = vld [vmem:[%s4985 + $0x68] sm:$0xff]
    %v5000 = vld [vmem:[%s4985 + $0x70] sm:$0xff]
    %v5001 = vld [vmem:[%s4985 + $0x78] sm:$0xff]
    %5002 = vmatpush.msra.mxu0 %v5001
    %5003 = vmatpush.msra.mxu0 %v5000
    %5004 = vmatpush.msra.mxu0 %v4999
    %5005 = vmatpush.msra.mxu0 %v4998
    %5006 = vmatpush.msra.mxu0 %v4997
    %5007 = vmatpush.msra.mxu0 %v4996
    %5008 = vmatpush.msra.mxu0 %v4995
    %5009 = vmatpush.msra.mxu0 %v4994
    %5010 = vmatpush.msra.mxu0 %v4993
    %5011 = vmatpush.msra.mxu0 %v4992
    %5012 = vmatpush.msra.mxu0 %v4991
    %5013 = vmatpush.msra.mxu0 %v4990
    %5014 = vmatpush.msra.mxu0 %v4989
    %5015 = vmatpush.msra.mxu0 %v4988
    %5016 = vmatpush.msra.mxu0 %v4987
    %5017 = vmatpush.msra.mxu0 %v4986
    %5018 = vmatmul.f32.gmra.mxu0 %v4682
    %v5019 = vpop.f32.mrf.mxu0
    %v5020 = vadd.f32 0.0, %v5019
    %5021 = vdwg.mxu0
    %v5022 = vadd.f32 %v4984, %v5020
    %v5023 = vrot.slane %v5022, 4
    %v5024 = vadd.f32 %v5022, %v5023
    %v5025 = vrot.slane %v5024, 2
    %v5026 = vadd.f32 %v5024, %v5025
    %v5027 = vrot.slane %v5026, 1
    %v5028 = vadd.f32 %v5026, %v5027
    %v5029 = vmul.f32 %v5022, %v5022
    %v5030 = vrot.slane %v5029, 4
    %v5031 = vadd.f32 %v5029, %v5030
    %v5032 = vrot.slane %v5031, 2
    %v5033 = vadd.f32 %v5031, %v5032
    %v5034 = vrot.slane %v5033, 1
    %v5035 = vadd.f32 %v5033, %v5034
    %v5036 = vmul.f32 %v5028, 0.125
    %v5037 = vmul.f32 %v5035, 0.125
    %v5038 = vmul.f32 %v5036, %v5036
    %v5039 = vsub.f32 %v5037, %v5038
    %v5040 = vld [vmem:[#allocation17] sm:$0x1]
    %v5041 = vadd.f32 %v5039, 1e-05
    %v5042 = vrsqrt.pop %v5041
    %v5043 = vmul.f32 %v5042, %v5041
    %v5044 = vmul.f32 %v5043, %v5042
    %v5045 = vmul.f32 0.5, %v5044
    %v5046 = vsub.f32 1.5, %v5045
    %v5047 = vmul.f32 %v5042, %v5046
    %vm5048 = vweird.f32 %v5041
    %vm5049 = vweird.f32 %v5042
    %vm5050 = vmor %vm5048, %vm5049
    %v5051 = vsel %vm5050, %v5042, %v5047
    %v5052 = vmul.f32 %v5040, %v5051
    %v5053 = vld [vmem:[#allocation19] sm:$0x1]
    %v5054 = vmul.f32 %v5052, %v5036
    %v5055 = vsub.f32 %v5053, %v5054
    %v5057 = vperm.slane %v5052, 0
    %v5059 = vmul.f32 %v5022, %v5057
    %v5061 = vperm.slane %v5055, 0
    %v5063 = vadd.f32 %v5059, %v5061
    %v5064 = vmax.f32 %v5063, 0.0
    %vm5065 = vcmask 523264
    %5066 = vst.msk [vmem:[#allocation20] sm:$0xff] %vm5065, %v5064
    // Predicated region
    $region98: #{encoder_forward.1} parent=1 // pred_check
      _
    $region99: #{encoder_forward.1} parent=1 // pred_check_branch
      %5068 = sbr.rel (0) target = $region101
    $region100: #{encoder_forward.1} parent=1 // pred_region
      %5070 = vsyncadd [#allocation4], 0
      %s5072 = sshll.u32 [#allocation20], 4
      %s5073 = int_to_ptr.vmem [resolvable:$true] %s5072
      %s5074 = sshll.u32 %s13, 4
      %s5075 = int_to_ptr.hbm [resolvable:$true] %s5074
      %5077 = dma.vmem_to_hbm [thread:$0]  %s5073, 128, %s5075, [#allocation4]
    $region101: #{encoder_forward.1} parent=1 // pred_fallthru
      _
    // Predicated region
    $region102: #{encoder_forward.1} parent=1 // pred_check
      _
    $region103: #{encoder_forward.1} parent=1 // pred_check_branch
      %5079 = sbr.rel (0) target = $region105
    $region104: #{encoder_forward.1} parent=1 // pred_region
      %5081 = dma.done [#allocation4], 128
    $region105: #{encoder_forward.1} parent=1 // pred_fallthru
      _
    %5082 = vsyncpa [#allocation3], 1
    %5083 = vsyncpa [#allocation6], 1
    %5084 = vsyncpa [#allocation9], 1
    %5085 = vsyncpa [#allocation12], 1
    %5086 = vsyncpa [#allocation15], 1
    %5087 = vsyncpa [#allocation18], 1
    %5088 = vsyncpa [#allocation4], 1

</llo_original>
